<compile_context>
chip_gen: v7x
topology: tpu7x:2x2x1
jax: 0.10.0
libtpu: 0.0.40
codegen_flags: <defaults>
</compile_context>

<pallas_src>
import functools
import math

import numpy as np
import jax
import jax.numpy as jnp
from jax.experimental import pallas as pl
from jax.experimental.pallas import tpu as pltpu


SUBGRAPH_16 = (5, 3, 3, 3, 3, 3, 5, 5, 5, 11, 3, 3, 3, 3, 3, 12)   # 16 subgraphs, 73 rows
SUBGRAPH_7 = (5, 9, 9, 25, 9, 9, 12)                                #  7 subgraphs, 78 rows

_N_FREQ = 5
_N_CHAN = 62


def _round_up(v, m):
    return (v + m - 1) // m * m


def _leaky(v, slope):
    return jnp.where(v >= 0.0, v, slope * v)


# ---------------------------------------------------------------------------
# Fused forward kernel (one grid step = one batch tile)
# ---------------------------------------------------------------------------

def _vagmsda_kernel(
    x_ref,                                     # (5, Bt, 62) VMEM, blocked over batch
    gcn_w_ref, gcn_b_ref, a1_ref, a2_ref,      # SMEM: (5,5), (5,), (5,5), (5,5)
    adj_t_ref,                                 # (62,62) bf16  = adj.T
    fm_w1_ref, fm_w2_ref,                      # frequency_mix MLP (5,32),(32,5) f32
    cm_w1_ref, cm_w2_ref,                      # channel_mix   MLP (62,32),(32,62) f32
    sel1_t_ref, mem1_ref, mem1_t_ref,          # meso-16: (62,73) bf16, (73,16), (16,73)
    sel2_t_ref, mem2_ref, mem2_t_ref,          # meso-7 : (62,78) bf16, (78,7),  (7,78)
    fc1_w_ref, fc1_b_ref,                      # (735,256) bf16, (1,256)
    fc2_w_ref, fc2_b_ref,                      # (256,128) bf16, (1,128)
    fc3_w_ref, fc3_b_ref,                      # (128,64)  bf16, (1,64)
    dsfe_w_ref, dsfe_b_ref,                    # all DSFE heads (64,32*S) bf16, (1,32*S)
    dsc_w_ref, dsc_b_ref,                      # block-diag DSC (32*S, out_pad) bf16, (1,out_pad)
    o_ref,                                     # (Bt, out_pad) f32
    *, graph16, graph7,
):
    f32 = jnp.float32
    bt = x_ref.shape[1]

    def mxu(a, w_ref):                         # bf16 MXU matmul, f32 accumulation
        w = w_ref[...]
        return jnp.dot(a.astype(w.dtype), w, preferred_element_type=f32)

    def fdot(a, b):                            # small f32 matmul
        return jnp.dot(a, b, preferred_element_type=f32)

    def split5(t2):                            # (5*Bt, N) -> 5 x (Bt, N), sublane-aligned slices
        return [t2[e * bt:(e + 1) * bt, :] for e in range(_N_FREQ)]

    # ---- LocalLayer (GCN): adjacency as one lane-dense (5*Bt,62)x(62,62) MXU matmul,
    #      then the 5x5 frequency mix + bias on the VPU from SMEM scalars.
    x2 = jnp.concatenate([x_ref[e] for e in range(_N_FREQ)], axis=0)   # (5*Bt, 62)
    y2 = mxu(x2, adj_t_ref)                                            # (5*Bt, 62)
    y = split5(y2)
    res = []
    for d in range(_N_FREQ):
        acc = y[0] * gcn_w_ref[0, d]
        for e in range(1, _N_FREQ):
            acc = acc + y[e] * gcn_w_ref[e, d]
        res.append(acc + gcn_b_ref[d])                                 # 5 x (Bt, 62)

    # ---- ChannelAttentionMPL: sigmoid(mlp(avg)+mlp(max)); out = x + att*x
    def cam(avg, mx, w1_ref, w2_ref):
        w1 = w1_ref[...]
        w2 = w2_ref[...]

        def mlp(v):
            return fdot(jnp.maximum(fdot(v, w1), 0.0), w2)

        return jax.nn.sigmoid(mlp(avg) + mlp(mx))

    avg_f = jnp.concatenate([jnp.mean(r, axis=-1, keepdims=True) for r in res], axis=-1)
    max_f = jnp.concatenate([jnp.max(r, axis=-1, keepdims=True) for r in res], axis=-1)
    att1 = cam(avg_f, max_f, fm_w1_ref, fm_w2_ref)                     # (Bt, 5)  frequency_mix
    out1 = [res[e] * (1.0 + att1[:, e:e + 1]) for e in range(_N_FREQ)]

    sum_c = out1[0]
    max_c = out1[0]
    for e in range(1, _N_FREQ):
        sum_c = sum_c + out1[e]
        max_c = jnp.maximum(max_c, out1[e])
    att2 = cam(sum_c * (1.0 / _N_FREQ), max_c, cm_w1_ref, cm_w2_ref)   # (Bt, 62) channel_mix
    out2 = [out1[e] * (1.0 + att2) for e in range(_N_FREQ)]

    # ---- MesoLayer on the GCN output `res` (pre channel-attention, as in the torch code).
    res2 = jnp.concatenate(res, axis=0)                                # (5*Bt, 62)

    def meso(sel_t_ref, mem_ref, mem_t_ref, a_ref, graph_list):
        mem = mem_ref[...]                                             # (L, G) 0/1 f32
        mem_t = mem_t_ref[...]                                         # (G, L)
        sub2 = mxu(res2, sel_t_ref)                                    # (5*Bt, L) expanded feats
        sub = split5(sub2)
        ssum2 = fdot(sub2, mem)                                        # (5*Bt, G) per-subgraph sums
        sexp2 = fdot(ssum2, mem_t)                                     # (5*Bt, L) expanded back
        sexp = split5(sexp2)
        # score[b,j] = sum_{e,f} sub[e][b,j] * A[e,f] * sexp[f][b,j]   (VPU, SMEM scalars)
        score = None
        for e in range(_N_FREQ):
            qe = sexp[0] * a_ref[e, 0]
            for f in range(1, _N_FREQ):
                qe = qe + sexp[f] * a_ref[e, f]
            term = sub[e] * qe
            score = term if score is None else score + term            # (Bt, L)
        # true per-subgraph softmax: per-segment max over static contiguous segments
        seg_max = []
        off = 0
        for ln in graph_list:
            seg_max.append(jnp.max(score[:, off:off + ln], axis=-1, keepdims=True))
            off += ln
        seg_max = jnp.concatenate(seg_max, axis=-1)                    # (Bt, G)
        p = jnp.exp(score - fdot(seg_max, mem_t))                      # (Bt, L)
        inv = pl.reciprocal(fdot(p, mem), approx=True)                 # (Bt, G) compact recip
        att = p * fdot(inv, mem_t)                                     # (Bt, L)
        watt2 = jnp.concatenate([sub[e] * att for e in range(_N_FREQ)], axis=0)
        c2 = fdot(watt2, mem)                                          # (5*Bt, G) coarsened
        return split5(c2)

    c1 = meso(sel1_t_ref, mem1_ref, mem1_t_ref, a1_ref, graph16)       # 5 x (Bt, 16)
    c3 = meso(sel2_t_ref, mem2_ref, mem2_t_ref, a2_ref, graph7)        # 5 x (Bt, 7)

    # ---- classifier trunk: single lane-dense 735-wide slab == torch.cat((x, out, x1, x3), 1),
    #      then one K=735 matmul (fc1+BN folded) and the rest of the MLP.
    feat = jnp.concatenate(res + out2 + c1 + c3, axis=-1)              # (Bt, 735)
    h = _leaky(mxu(feat, fc1_w_ref) + fc1_b_ref[...], 0.01)
    h = _leaky(mxu(h, fc2_w_ref) + fc2_b_ref[...], 0.01)
    h = _leaky(mxu(h, fc3_w_ref) + fc3_b_ref[...], 0.01)
    # Dropout(0.1) layers are identity in eval mode.

    # ---- all per-source heads batched: DSFE heads concatenated, DSC block-diagonal,
    #      output padded to a 128-lane multiple (unmasked vst).
    dsfe = jnp.maximum(mxu(h, dsfe_w_ref) + dsfe_b_ref[...], 0.0)      # (Bt, 32*S)
    o_ref[...] = (mxu(dsfe, dsc_w_ref) + dsc_b_ref[...]).astype(o_ref.dtype)


# ---------------------------------------------------------------------------
# Wrapper (jitted)
# ---------------------------------------------------------------------------

_SMEM_WEIGHT_ORDER = ('gcn_w', 'gcn_b', 'a1', 'a2')
_VMEM_WEIGHT_ORDER = (
    'adj_t', 'fm_w1', 'fm_w2', 'cm_w1', 'cm_w2',
    'sel1_t', 'mem1', 'mem1_t', 'sel2_t', 'mem2', 'mem2_t',
    'fc1_w', 'fc1_b', 'fc2_w', 'fc2_b', 'fc3_w', 'fc3_b',
    'dsfe_w', 'dsfe_b', 'dsc_w', 'dsc_b',
)


@functools.partial(jax.jit,
                   static_argnames=('number_of_source', 'number_of_category', 'batch_tile'))
def vagmsda_forward(params, data_src, *, number_of_source, number_of_category, batch_tile=128):
    """VAGMSDANet eval forward: list of per-source predictions (B, num_category)."""
    # TODO(synk): training branch (mmd_linear, nll/EMA/domain_discrepancy losses) depends on
    # undefined `utils` / labels; only the eval forward pass is implemented.
    B = data_src.shape[0]
    bt = max(8, min(_round_up(batch_tile, 8), _round_up(B, 8)))
    b_pad = _round_up(B, bt)

    x = data_src.reshape(B, _N_FREQ, _N_CHAN).astype(jnp.float32)      # x.view(B, 5, 62)
    if b_pad != B:
        x = jnp.concatenate(
            [x, jnp.zeros((b_pad - B, _N_FREQ, _N_CHAN), jnp.float32)], axis=0)
    x = jnp.transpose(x, (1, 0, 2))                                    # (5, b_pad, 62)

    smem_args = tuple(params[k] for k in _SMEM_WEIGHT_ORDER)
    vmem_args = tuple(params[k] for k in _VMEM_WEIGHT_ORDER)
    out_pad = params['dsc_b'].shape[-1]

    smem_spec = pl.BlockSpec(memory_space=pltpu.MemorySpace.SMEM)

    def w_spec(a):
        return pl.BlockSpec(a.shape, lambda i, _nd=a.ndim: (0,) * _nd)

    kernel = functools.partial(_vagmsda_kernel, graph16=SUBGRAPH_16, graph7=SUBGRAPH_7)

    pred_all = pl.pallas_call(
        kernel,
        out_shape=jax.ShapeDtypeStruct((b_pad, out_pad), jnp.float32),
        grid=(b_pad // bt,),
        in_specs=[pl.BlockSpec((_N_FREQ, bt, _N_CHAN), lambda i: (0, i, 0))]
                 + [smem_spec] * len(smem_args)
                 + [w_spec(a) for a in vmem_args],
        out_specs=pl.BlockSpec((bt, out_pad), lambda i: (i, 0)),
        compiler_params=pltpu.CompilerParams(
            dimension_semantics=("parallel",),
            vmem_limit_bytes=32 * 1024 * 1024),
    )(x, *smem_args, *vmem_args)

    pred_all = pred_all[:B]
    C = number_of_category
    return [pred_all[:, i * C:(i + 1) * C] for i in range(number_of_source)]


# ---------------------------------------------------------------------------
# Parameter construction (BN folded, heads batched, bf16 matmul weights)
# ---------------------------------------------------------------------------

def fold_bn(w, b, gamma, beta, mean, var, eps=1e-5):
    scale = gamma / jnp.sqrt(var + eps)
    return w * scale[None, :], (b - mean) * scale + beta


def build_subgraph_matrices(graph_list, n_channels=_N_CHAN):
    total = sum(graph_list)
    g_num = len(graph_list)
    # TODO(synk): graphpool.feature_trans / location_trans are not provided in the reference;
    # use a deterministic modulo mapping of the 62 electrodes into the expanded index space.
    chan_idx = np.arange(total, dtype=np.int64) % n_channels
    sel = np.zeros((total, n_channels), np.float32)
    sel[np.arange(total), chan_idx] = 1.0
    mem = np.zeros((total, g_num), np.float32)
    head = 0
    for g, length in enumerate(graph_list):
        mem[head:head + length, g] = 1.0
        head += length
    return (jnp.asarray(sel.T, jnp.bfloat16),      # (62, total) 0/1 (exact in bf16)
            jnp.asarray(mem),                      # (total, g_num) f32
            jnp.asarray(mem.T))                    # (g_num, total) f32


def init_params(key, number_of_source=3, number_of_category=4):
    keys = iter(jax.random.split(key, 64))

    def u(shape, a, b):
        return jax.random.uniform(next(keys), shape, jnp.float32, a, b)

    p = {}
    # TODO(synk): convert_dis_m(get_ini_dis_m(), 9) / return_coordinates() are not provided;
    # use a deterministic symmetric row-normalised surrogate adjacency.
    adj = u((62, 62), 0.0, 1.0)
    adj = 0.5 * (adj + adj.T)
    adj = adj / jnp.sum(adj, axis=1, keepdims=True)
    p['adj_t'] = adj.T.astype(jnp.bfloat16)

    stdv = 1.0 / math.sqrt(5.0)
    p['gcn_w'] = u((5, 5), -stdv, stdv)            # W[e, d] (original orientation)
    p['gcn_b'] = u((5,), -stdv, stdv)

    # ChannelAttentionMPL 1x1 convs, stored (in, out), no bias
    p['fm_w1'] = u((5, 32), -1 / math.sqrt(5), 1 / math.sqrt(5))
    p['fm_w2'] = u((32, 5), -1 / math.sqrt(32), 1 / math.sqrt(32))
    p['cm_w1'] = u((62, 32), -1 / math.sqrt(62), 1 / math.sqrt(62))
    p['cm_w2'] = u((32, 62), -1 / math.sqrt(32), 1 / math.sqrt(32))

    # MesoLayer attention only needs A = W W^T (5,5)
    sm = 1.0 / math.sqrt(78.0)
    w_m1 = u((5, 10), -sm, sm)
    w_m2 = u((5, 10), -sm, sm)
    p['a1'] = w_m1 @ w_m1.T
    p['a2'] = w_m2 @ w_m2.T
    p['sel1_t'], p['mem1'], p['mem1_t'] = build_subgraph_matrices(SUBGRAPH_16)
    p['sel2_t'], p['mem2'], p['mem2_t'] = build_subgraph_matrices(SUBGRAPH_7)

    def lin_bn(din, dout):
        k = 1.0 / math.sqrt(din)
        w = u((din, dout), -k, k)
        b = u((dout,), -k, k)
        gamma = u((dout,), 0.5, 1.5)
        beta = u((dout,), -0.1, 0.1)
        mean = u((dout,), -0.1, 0.1)
        var = u((dout,), 0.5, 1.5)
        return fold_bn(w, b, gamma, beta, mean, var)

    # fc1 rows follow torch.cat((x, out, x1, x3), 1): 310 | 310 | 80 | 35
    w, b = lin_bn(735, 256)
    p['fc1_w'], p['fc1_b'] = w.astype(jnp.bfloat16), b.reshape(1, 256)
    w, b = lin_bn(256, 128)
    p['fc2_w'], p['fc2_b'] = w.astype(jnp.bfloat16), b.reshape(1, 128)
    w, b = lin_bn(128, 64)
    p['fc3_w'], p['fc3_b'] = w.astype(jnp.bfloat16), b.reshape(1, 64)

    # Per-source heads, batched into single matrices.
    # TODO(synk): DSFE class body is not in the reference; use the standard MS-MDA
    # DSFE = Linear(64,32)+BatchNorm1d(32)+ReLU (matches the Linear(32,4) classifier).
    S, C = number_of_source, number_of_category
    dsfe_w, dsfe_b, dsc_w, dsc_b = [], [], [], []
    for _ in range(S):
        w, b = lin_bn(64, 32)
        dsfe_w.append(w)
        dsfe_b.append(b)
        k = 1.0 / math.sqrt(32.0)
        dsc_w.append(u((32, C), -k, k))
        dsc_b.append(u((C,), -k, k))
    p['dsfe_w'] = jnp.concatenate(dsfe_w, axis=1).astype(jnp.bfloat16)      # (64, 32*S)
    p['dsfe_b'] = jnp.concatenate(dsfe_b, axis=0).reshape(1, 32 * S)
    rows = []
    for i in range(S):                                                      # block-diag DSC
        row = [jnp.zeros((32, C), jnp.float32) for _ in range(S)]
        row[i] = dsc_w[i]
        rows.append(jnp.concatenate(row, axis=1))
    dsc_w_full = jnp.concatenate(rows, axis=0)                              # (32*S, C*S)
    dsc_b_full = jnp.concatenate(dsc_b, axis=0)
    out_pad = max(128, _round_up(S * C, 128))                               # lane-dense output
    p['dsc_w'] = jnp.pad(dsc_w_full, ((0, 0), (0, out_pad - S * C))).astype(jnp.bfloat16)
    p['dsc_b'] = jnp.pad(dsc_b_full, (0, out_pad - S * C)).reshape(1, out_pad)
    return p


if __name__ == "__main__":
    key = jax.random.PRNGKey(0)
    pkey, xkey = jax.random.split(key)
    number_of_source = 3
    number_of_category = 4
    params = init_params(pkey, number_of_source, number_of_category)

    # EmotionAttention expects x.view(B, 5, 62) -> input is (B, 310)
    batch = 16
    x = jax.random.normal(xkey, (batch, 310), jnp.float32)

    preds = vagmsda_forward(params, x,
                            number_of_source=number_of_source,
                            number_of_category=number_of_category,
                            batch_tile=8)                    # grid=(2,) exercises the batch grid
    preds = jax.block_until_ready(preds)

    assert len(preds) == number_of_source
    assert all(pr.shape == (batch, number_of_category) for pr in preds)
    assert all(bool(jnp.isfinite(pr).all()) for pr in preds)
    print("KERNEL_OK")
</pallas_src>

<mosaic_0001>
module attributes {stable_mosaic.version = 11 : i64} {
  func.func @_vagmsda_kernel(%arg0: i32, %arg1: memref<5x8x62xf32, #tpu.memory_space<vmem>>, %arg2: memref<5x5xf32, #tpu.memory_space<smem>>, %arg3: memref<5xf32, #tpu.memory_space<smem>>, %arg4: memref<5x5xf32, #tpu.memory_space<smem>>, %arg5: memref<5x5xf32, #tpu.memory_space<smem>>, %arg6: memref<62x62xbf16, #tpu.memory_space<vmem>>, %arg7: memref<5x32xf32, #tpu.memory_space<vmem>>, %arg8: memref<32x5xf32, #tpu.memory_space<vmem>>, %arg9: memref<62x32xf32, #tpu.memory_space<vmem>>, %arg10: memref<32x62xf32, #tpu.memory_space<vmem>>, %arg11: memref<62x73xbf16, #tpu.memory_space<vmem>>, %arg12: memref<73x16xf32, #tpu.memory_space<vmem>>, %arg13: memref<16x73xf32, #tpu.memory_space<vmem>>, %arg14: memref<62x78xbf16, #tpu.memory_space<vmem>>, %arg15: memref<78x7xf32, #tpu.memory_space<vmem>>, %arg16: memref<7x78xf32, #tpu.memory_space<vmem>>, %arg17: memref<735x256xbf16, #tpu.memory_space<vmem>>, %arg18: memref<1x256xf32, #tpu.memory_space<vmem>>, %arg19: memref<256x128xbf16, #tpu.memory_space<vmem>>, %arg20: memref<1x128xf32, #tpu.memory_space<vmem>>, %arg21: memref<128x64xbf16, #tpu.memory_space<vmem>>, %arg22: memref<1x64xf32, #tpu.memory_space<vmem>>, %arg23: memref<64x96xbf16, #tpu.memory_space<vmem>>, %arg24: memref<1x96xf32, #tpu.memory_space<vmem>>, %arg25: memref<96x128xbf16, #tpu.memory_space<vmem>>, %arg26: memref<1x128xf32, #tpu.memory_space<vmem>>, %arg27: memref<8x128xf32, #tpu.memory_space<vmem>>) attributes {dimension_semantics = [#tpu.dimension_semantics<parallel>], iteration_bounds = array<i64: 2>, scalar_prefetch = 0 : i64, scratch_operands = 0 : i64, tpu.core_type = #tpu.core_type<tc>, window_params = [{transform_indices = @transform_0, window_bounds = array<i64: 5, 8, 62>}, {transform_indices = @transform_1, window_bounds = array<i64: 5, 5>}, {transform_indices = @transform_2, window_bounds = array<i64: 5>}, {transform_indices = @transform_3, window_bounds = array<i64: 5, 5>}, {transform_indices = @transform_4, window_bounds = array<i64: 5, 5>}, {pipeline_mode = #tpu.pipeline_mode<synchronous>, transform_indices = @transform_5, window_bounds = array<i64: 62, 62>}, {pipeline_mode = #tpu.pipeline_mode<synchronous>, transform_indices = @transform_6, window_bounds = array<i64: 5, 32>}, {pipeline_mode = #tpu.pipeline_mode<synchronous>, transform_indices = @transform_7, window_bounds = array<i64: 32, 5>}, {pipeline_mode = #tpu.pipeline_mode<synchronous>, transform_indices = @transform_8, window_bounds = array<i64: 62, 32>}, {pipeline_mode = #tpu.pipeline_mode<synchronous>, transform_indices = @transform_9, window_bounds = array<i64: 32, 62>}, {pipeline_mode = #tpu.pipeline_mode<synchronous>, transform_indices = @transform_10, window_bounds = array<i64: 62, 73>}, {pipeline_mode = #tpu.pipeline_mode<synchronous>, transform_indices = @transform_11, window_bounds = array<i64: 73, 16>}, {pipeline_mode = #tpu.pipeline_mode<synchronous>, transform_indices = @transform_12, window_bounds = array<i64: 16, 73>}, {pipeline_mode = #tpu.pipeline_mode<synchronous>, transform_indices = @transform_13, window_bounds = array<i64: 62, 78>}, {pipeline_mode = #tpu.pipeline_mode<synchronous>, transform_indices = @transform_14, window_bounds = array<i64: 78, 7>}, {pipeline_mode = #tpu.pipeline_mode<synchronous>, transform_indices = @transform_15, window_bounds = array<i64: 7, 78>}, {pipeline_mode = #tpu.pipeline_mode<synchronous>, transform_indices = @transform_16, window_bounds = array<i64: 735, 256>}, {pipeline_mode = #tpu.pipeline_mode<synchronous>, transform_indices = @transform_17, window_bounds = array<i64: 1, 256>}, {pipeline_mode = #tpu.pipeline_mode<synchronous>, transform_indices = @transform_18, window_bounds = array<i64: 256, 128>}, {pipeline_mode = #tpu.pipeline_mode<synchronous>, transform_indices = @transform_19, window_bounds = array<i64: 1, 128>}, {pipeline_mode = #tpu.pipeline_mode<synchronous>, transform_indices = @transform_20, window_bounds = array<i64: 128, 64>}, {pipeline_mode = #tpu.pipeline_mode<synchronous>, transform_indices = @transform_21, window_bounds = array<i64: 1, 64>}, {pipeline_mode = #tpu.pipeline_mode<synchronous>, transform_indices = @transform_22, window_bounds = array<i64: 64, 96>}, {pipeline_mode = #tpu.pipeline_mode<synchronous>, transform_indices = @transform_23, window_bounds = array<i64: 1, 96>}, {pipeline_mode = #tpu.pipeline_mode<synchronous>, transform_indices = @transform_24, window_bounds = array<i64: 96, 128>}, {pipeline_mode = #tpu.pipeline_mode<synchronous>, transform_indices = @transform_25, window_bounds = array<i64: 1, 128>}, {transform_indices = @transform_26, window_bounds = array<i64: 8, 128>}]} {
    %c0 = arith.constant 0 : index
    %c0_0 = arith.constant 0 : index
    %c0_1 = arith.constant 0 : index
    %0 = vector.load %arg1[%c0, %c0_0, %c0_1] : memref<5x8x62xf32, #tpu.memory_space<vmem>>, vector<1x8x62xf32>
    %1 = vector.shape_cast %0 : vector<1x8x62xf32> to vector<8x62xf32>
    %c1 = arith.constant 1 : index
    %c0_2 = arith.constant 0 : index
    %c0_3 = arith.constant 0 : index
    %2 = vector.load %arg1[%c1, %c0_2, %c0_3] : memref<5x8x62xf32, #tpu.memory_space<vmem>>, vector<1x8x62xf32>
    %3 = vector.shape_cast %2 : vector<1x8x62xf32> to vector<8x62xf32>
    %c2 = arith.constant 2 : index
    %c0_4 = arith.constant 0 : index
    %c0_5 = arith.constant 0 : index
    %4 = vector.load %arg1[%c2, %c0_4, %c0_5] : memref<5x8x62xf32, #tpu.memory_space<vmem>>, vector<1x8x62xf32>
    %5 = vector.shape_cast %4 : vector<1x8x62xf32> to vector<8x62xf32>
    %c3 = arith.constant 3 : index
    %c0_6 = arith.constant 0 : index
    %c0_7 = arith.constant 0 : index
    %6 = vector.load %arg1[%c3, %c0_6, %c0_7] : memref<5x8x62xf32, #tpu.memory_space<vmem>>, vector<1x8x62xf32>
    %7 = vector.shape_cast %6 : vector<1x8x62xf32> to vector<8x62xf32>
    %c4 = arith.constant 4 : index
    %c0_8 = arith.constant 0 : index
    %c0_9 = arith.constant 0 : index
    %8 = vector.load %arg1[%c4, %c0_8, %c0_9] : memref<5x8x62xf32, #tpu.memory_space<vmem>>, vector<1x8x62xf32>
    %9 = vector.shape_cast %8 : vector<1x8x62xf32> to vector<8x62xf32>
    %10 = tpu.concatenate %1, %3, %5, %7, %9 in 0 : vector<8x62xf32>, vector<8x62xf32>, vector<8x62xf32>, vector<8x62xf32>, vector<8x62xf32> -> vector<40x62xf32>
    %c0_10 = arith.constant 0 : index
    %c0_11 = arith.constant 0 : index
    %11 = vector.load %arg6[%c0_10, %c0_11] : memref<62x62xbf16, #tpu.memory_space<vmem>>, vector<62x62xbf16>
    %12 = arith.truncf %10 : vector<40x62xf32> to vector<40x62xbf16>
    %cst = arith.constant dense<0.000000e+00> : vector<40x62xf32>
    %13 = tpu.matmul %12, %11, %cst {dimension_numbers = #tpu.dot_dimension_numbers<[1], [0], [0], [1], [0, 0, 1, 1], [], []>} : vector<40x62xbf16>, vector<62x62xbf16>, vector<40x62xf32> -> vector<40x62xf32>
    %14 = vector.extract_strided_slice %13 {offsets = [0, 0], sizes = [8, 62], strides = [1, 1]} : vector<40x62xf32> to vector<8x62xf32>
    %15 = vector.extract_strided_slice %13 {offsets = [8, 0], sizes = [8, 62], strides = [1, 1]} : vector<40x62xf32> to vector<8x62xf32>
    %16 = vector.extract_strided_slice %13 {offsets = [16, 0], sizes = [8, 62], strides = [1, 1]} : vector<40x62xf32> to vector<8x62xf32>
    %17 = vector.extract_strided_slice %13 {offsets = [24, 0], sizes = [8, 62], strides = [1, 1]} : vector<40x62xf32> to vector<8x62xf32>
    %18 = vector.extract_strided_slice %13 {offsets = [32, 0], sizes = [8, 62], strides = [1, 1]} : vector<40x62xf32> to vector<8x62xf32>
    %c0_12 = arith.constant 0 : index
    %c0_13 = arith.constant 0 : index
    %19 = memref.load %arg2[%c0_12, %c0_13] : memref<5x5xf32, #tpu.memory_space<smem>>
    %20 = vector.broadcast %19 : f32 to vector<8x62xf32>
    %21 = arith.mulf %14, %20 : vector<8x62xf32>
    %c1_14 = arith.constant 1 : index
    %c0_15 = arith.constant 0 : index
    %22 = memref.load %arg2[%c1_14, %c0_15] : memref<5x5xf32, #tpu.memory_space<smem>>
    %23 = vector.broadcast %22 : f32 to vector<8x62xf32>
    %24 = arith.mulf %15, %23 : vector<8x62xf32>
    %25 = arith.addf %21, %24 : vector<8x62xf32>
    %c2_16 = arith.constant 2 : index
    %c0_17 = arith.constant 0 : index
    %26 = memref.load %arg2[%c2_16, %c0_17] : memref<5x5xf32, #tpu.memory_space<smem>>
    %27 = vector.broadcast %26 : f32 to vector<8x62xf32>
    %28 = arith.mulf %16, %27 : vector<8x62xf32>
    %29 = arith.addf %25, %28 : vector<8x62xf32>
    %c3_18 = arith.constant 3 : index
    %c0_19 = arith.constant 0 : index
    %30 = memref.load %arg2[%c3_18, %c0_19] : memref<5x5xf32, #tpu.memory_space<smem>>
    %31 = vector.broadcast %30 : f32 to vector<8x62xf32>
    %32 = arith.mulf %17, %31 : vector<8x62xf32>
    %33 = arith.addf %29, %32 : vector<8x62xf32>
    %c4_20 = arith.constant 4 : index
    %c0_21 = arith.constant 0 : index
    %34 = memref.load %arg2[%c4_20, %c0_21] : memref<5x5xf32, #tpu.memory_space<smem>>
    %35 = vector.broadcast %34 : f32 to vector<8x62xf32>
    %36 = arith.mulf %18, %35 : vector<8x62xf32>
    %37 = arith.addf %33, %36 : vector<8x62xf32>
    %c0_22 = arith.constant 0 : index
    %38 = memref.load %arg3[%c0_22] : memref<5xf32, #tpu.memory_space<smem>>
    %39 = vector.broadcast %38 : f32 to vector<8x62xf32>
    %40 = arith.addf %37, %39 : vector<8x62xf32>
    %c0_23 = arith.constant 0 : index
    %c1_24 = arith.constant 1 : index
    %41 = memref.load %arg2[%c0_23, %c1_24] : memref<5x5xf32, #tpu.memory_space<smem>>
    %42 = vector.broadcast %41 : f32 to vector<8x62xf32>
    %43 = arith.mulf %14, %42 : vector<8x62xf32>
    %c1_25 = arith.constant 1 : index
    %c1_26 = arith.constant 1 : index
    %44 = memref.load %arg2[%c1_25, %c1_26] : memref<5x5xf32, #tpu.memory_space<smem>>
    %45 = vector.broadcast %44 : f32 to vector<8x62xf32>
    %46 = arith.mulf %15, %45 : vector<8x62xf32>
    %47 = arith.addf %43, %46 : vector<8x62xf32>
    %c2_27 = arith.constant 2 : index
    %c1_28 = arith.constant 1 : index
    %48 = memref.load %arg2[%c2_27, %c1_28] : memref<5x5xf32, #tpu.memory_space<smem>>
    %49 = vector.broadcast %48 : f32 to vector<8x62xf32>
    %50 = arith.mulf %16, %49 : vector<8x62xf32>
    %51 = arith.addf %47, %50 : vector<8x62xf32>
    %c3_29 = arith.constant 3 : index
    %c1_30 = arith.constant 1 : index
    %52 = memref.load %arg2[%c3_29, %c1_30] : memref<5x5xf32, #tpu.memory_space<smem>>
    %53 = vector.broadcast %52 : f32 to vector<8x62xf32>
    %54 = arith.mulf %17, %53 : vector<8x62xf32>
    %55 = arith.addf %51, %54 : vector<8x62xf32>
    %c4_31 = arith.constant 4 : index
    %c1_32 = arith.constant 1 : index
    %56 = memref.load %arg2[%c4_31, %c1_32] : memref<5x5xf32, #tpu.memory_space<smem>>
    %57 = vector.broadcast %56 : f32 to vector<8x62xf32>
    %58 = arith.mulf %18, %57 : vector<8x62xf32>
    %59 = arith.addf %55, %58 : vector<8x62xf32>
    %c1_33 = arith.constant 1 : index
    %60 = memref.load %arg3[%c1_33] : memref<5xf32, #tpu.memory_space<smem>>
    %61 = vector.broadcast %60 : f32 to vector<8x62xf32>
    %62 = arith.addf %59, %61 : vector<8x62xf32>
    %c0_34 = arith.constant 0 : index
    %c2_35 = arith.constant 2 : index
    %63 = memref.load %arg2[%c0_34, %c2_35] : memref<5x5xf32, #tpu.memory_space<smem>>
    %64 = vector.broadcast %63 : f32 to vector<8x62xf32>
    %65 = arith.mulf %14, %64 : vector<8x62xf32>
    %c1_36 = arith.constant 1 : index
    %c2_37 = arith.constant 2 : index
    %66 = memref.load %arg2[%c1_36, %c2_37] : memref<5x5xf32, #tpu.memory_space<smem>>
    %67 = vector.broadcast %66 : f32 to vector<8x62xf32>
    %68 = arith.mulf %15, %67 : vector<8x62xf32>
    %69 = arith.addf %65, %68 : vector<8x62xf32>
    %c2_38 = arith.constant 2 : index
    %c2_39 = arith.constant 2 : index
    %70 = memref.load %arg2[%c2_38, %c2_39] : memref<5x5xf32, #tpu.memory_space<smem>>
    %71 = vector.broadcast %70 : f32 to vector<8x62xf32>
    %72 = arith.mulf %16, %71 : vector<8x62xf32>
    %73 = arith.addf %69, %72 : vector<8x62xf32>
    %c3_40 = arith.constant 3 : index
    %c2_41 = arith.constant 2 : index
    %74 = memref.load %arg2[%c3_40, %c2_41] : memref<5x5xf32, #tpu.memory_space<smem>>
    %75 = vector.broadcast %74 : f32 to vector<8x62xf32>
    %76 = arith.mulf %17, %75 : vector<8x62xf32>
    %77 = arith.addf %73, %76 : vector<8x62xf32>
    %c4_42 = arith.constant 4 : index
    %c2_43 = arith.constant 2 : index
    %78 = memref.load %arg2[%c4_42, %c2_43] : memref<5x5xf32, #tpu.memory_space<smem>>
    %79 = vector.broadcast %78 : f32 to vector<8x62xf32>
    %80 = arith.mulf %18, %79 : vector<8x62xf32>
    %81 = arith.addf %77, %80 : vector<8x62xf32>
    %c2_44 = arith.constant 2 : index
    %82 = memref.load %arg3[%c2_44] : memref<5xf32, #tpu.memory_space<smem>>
    %83 = vector.broadcast %82 : f32 to vector<8x62xf32>
    %84 = arith.addf %81, %83 : vector<8x62xf32>
    %c0_45 = arith.constant 0 : index
    %c3_46 = arith.constant 3 : index
    %85 = memref.load %arg2[%c0_45, %c3_46] : memref<5x5xf32, #tpu.memory_space<smem>>
    %86 = vector.broadcast %85 : f32 to vector<8x62xf32>
    %87 = arith.mulf %14, %86 : vector<8x62xf32>
    %c1_47 = arith.constant 1 : index
    %c3_48 = arith.constant 3 : index
    %88 = memref.load %arg2[%c1_47, %c3_48] : memref<5x5xf32, #tpu.memory_space<smem>>
    %89 = vector.broadcast %88 : f32 to vector<8x62xf32>
    %90 = arith.mulf %15, %89 : vector<8x62xf32>
    %91 = arith.addf %87, %90 : vector<8x62xf32>
    %c2_49 = arith.constant 2 : index
    %c3_50 = arith.constant 3 : index
    %92 = memref.load %arg2[%c2_49, %c3_50] : memref<5x5xf32, #tpu.memory_space<smem>>
    %93 = vector.broadcast %92 : f32 to vector<8x62xf32>
    %94 = arith.mulf %16, %93 : vector<8x62xf32>
    %95 = arith.addf %91, %94 : vector<8x62xf32>
    %c3_51 = arith.constant 3 : index
    %c3_52 = arith.constant 3 : index
    %96 = memref.load %arg2[%c3_51, %c3_52] : memref<5x5xf32, #tpu.memory_space<smem>>
    %97 = vector.broadcast %96 : f32 to vector<8x62xf32>
    %98 = arith.mulf %17, %97 : vector<8x62xf32>
    %99 = arith.addf %95, %98 : vector<8x62xf32>
    %c4_53 = arith.constant 4 : index
    %c3_54 = arith.constant 3 : index
    %100 = memref.load %arg2[%c4_53, %c3_54] : memref<5x5xf32, #tpu.memory_space<smem>>
    %101 = vector.broadcast %100 : f32 to vector<8x62xf32>
    %102 = arith.mulf %18, %101 : vector<8x62xf32>
    %103 = arith.addf %99, %102 : vector<8x62xf32>
    %c3_55 = arith.constant 3 : index
    %104 = memref.load %arg3[%c3_55] : memref<5xf32, #tpu.memory_space<smem>>
    %105 = vector.broadcast %104 : f32 to vector<8x62xf32>
    %106 = arith.addf %103, %105 : vector<8x62xf32>
    %c0_56 = arith.constant 0 : index
    %c4_57 = arith.constant 4 : index
    %107 = memref.load %arg2[%c0_56, %c4_57] : memref<5x5xf32, #tpu.memory_space<smem>>
    %108 = vector.broadcast %107 : f32 to vector<8x62xf32>
    %109 = arith.mulf %14, %108 : vector<8x62xf32>
    %c1_58 = arith.constant 1 : index
    %c4_59 = arith.constant 4 : index
    %110 = memref.load %arg2[%c1_58, %c4_59] : memref<5x5xf32, #tpu.memory_space<smem>>
    %111 = vector.broadcast %110 : f32 to vector<8x62xf32>
    %112 = arith.mulf %15, %111 : vector<8x62xf32>
    %113 = arith.addf %109, %112 : vector<8x62xf32>
    %c2_60 = arith.constant 2 : index
    %c4_61 = arith.constant 4 : index
    %114 = memref.load %arg2[%c2_60, %c4_61] : memref<5x5xf32, #tpu.memory_space<smem>>
    %115 = vector.broadcast %114 : f32 to vector<8x62xf32>
    %116 = arith.mulf %16, %115 : vector<8x62xf32>
    %117 = arith.addf %113, %116 : vector<8x62xf32>
    %c3_62 = arith.constant 3 : index
    %c4_63 = arith.constant 4 : index
    %118 = memref.load %arg2[%c3_62, %c4_63] : memref<5x5xf32, #tpu.memory_space<smem>>
    %119 = vector.broadcast %118 : f32 to vector<8x62xf32>
    %120 = arith.mulf %17, %119 : vector<8x62xf32>
    %121 = arith.addf %117, %120 : vector<8x62xf32>
    %c4_64 = arith.constant 4 : index
    %c4_65 = arith.constant 4 : index
    %122 = memref.load %arg2[%c4_64, %c4_65] : memref<5x5xf32, #tpu.memory_space<smem>>
    %123 = vector.broadcast %122 : f32 to vector<8x62xf32>
    %124 = arith.mulf %18, %123 : vector<8x62xf32>
    %125 = arith.addf %121, %124 : vector<8x62xf32>
    %c4_66 = arith.constant 4 : index
    %126 = memref.load %arg3[%c4_66] : memref<5xf32, #tpu.memory_space<smem>>
    %127 = vector.broadcast %126 : f32 to vector<8x62xf32>
    %128 = arith.addf %125, %127 : vector<8x62xf32>
    %cst_67 = arith.constant dense<0.000000e+00> : vector<8xf32>
    %129 = vector.multi_reduction <add>, %40, %cst_67 [1] : vector<8x62xf32> to vector<8xf32>
    %130 = vector.shape_cast %129 : vector<8xf32> to vector<8x1xf32>
    %cst_68 = arith.constant 6.200000e+01 : f32
    %131 = vector.broadcast %cst_68 : f32 to vector<8x1xf32>
    %132 = arith.divf %130, %131 : vector<8x1xf32>
    %cst_69 = arith.constant dense<0.000000e+00> : vector<8xf32>
    %133 = vector.multi_reduction <add>, %62, %cst_69 [1] : vector<8x62xf32> to vector<8xf32>
    %134 = vector.shape_cast %133 : vector<8xf32> to vector<8x1xf32>
    %cst_70 = arith.constant 6.200000e+01 : f32
    %135 = vector.broadcast %cst_70 : f32 to vector<8x1xf32>
    %136 = arith.divf %134, %135 : vector<8x1xf32>
    %cst_71 = arith.constant dense<0.000000e+00> : vector<8xf32>
    %137 = vector.multi_reduction <add>, %84, %cst_71 [1] : vector<8x62xf32> to vector<8xf32>
    %138 = vector.shape_cast %137 : vector<8xf32> to vector<8x1xf32>
    %cst_72 = arith.constant 6.200000e+01 : f32
    %139 = vector.broadcast %cst_72 : f32 to vector<8x1xf32>
    %140 = arith.divf %138, %139 : vector<8x1xf32>
    %cst_73 = arith.constant dense<0.000000e+00> : vector<8xf32>
    %141 = vector.multi_reduction <add>, %106, %cst_73 [1] : vector<8x62xf32> to vector<8xf32>
    %142 = vector.shape_cast %141 : vector<8xf32> to vector<8x1xf32>
    %cst_74 = arith.constant 6.200000e+01 : f32
    %143 = vector.broadcast %cst_74 : f32 to vector<8x1xf32>
    %144 = arith.divf %142, %143 : vector<8x1xf32>
    %cst_75 = arith.constant dense<0.000000e+00> : vector<8xf32>
    %145 = vector.multi_reduction <add>, %128, %cst_75 [1] : vector<8x62xf32> to vector<8xf32>
    %146 = vector.shape_cast %145 : vector<8xf32> to vector<8x1xf32>
    %cst_76 = arith.constant 6.200000e+01 : f32
    %147 = vector.broadcast %cst_76 : f32 to vector<8x1xf32>
    %148 = arith.divf %146, %147 : vector<8x1xf32>
    %149 = tpu.concatenate %132, %136, %140, %144, %148 in 1 : vector<8x1xf32>, vector<8x1xf32>, vector<8x1xf32>, vector<8x1xf32>, vector<8x1xf32> -> vector<8x5xf32>
    %cst_77 = arith.constant dense<0xFF800000> : vector<8xf32>
    %150 = vector.multi_reduction <maximumf>, %40, %cst_77 [1] : vector<8x62xf32> to vector<8xf32>
    %151 = vector.shape_cast %150 : vector<8xf32> to vector<8x1xf32>
    %cst_78 = arith.constant dense<0xFF800000> : vector<8xf32>
    %152 = vector.multi_reduction <maximumf>, %62, %cst_78 [1] : vector<8x62xf32> to vector<8xf32>
    %153 = vector.shape_cast %152 : vector<8xf32> to vector<8x1xf32>
    %cst_79 = arith.constant dense<0xFF800000> : vector<8xf32>
    %154 = vector.multi_reduction <maximumf>, %84, %cst_79 [1] : vector<8x62xf32> to vector<8xf32>
    %155 = vector.shape_cast %154 : vector<8xf32> to vector<8x1xf32>
    %cst_80 = arith.constant dense<0xFF800000> : vector<8xf32>
    %156 = vector.multi_reduction <maximumf>, %106, %cst_80 [1] : vector<8x62xf32> to vector<8xf32>
    %157 = vector.shape_cast %156 : vector<8xf32> to vector<8x1xf32>
    %cst_81 = arith.constant dense<0xFF800000> : vector<8xf32>
    %158 = vector.multi_reduction <maximumf>, %128, %cst_81 [1] : vector<8x62xf32> to vector<8xf32>
    %159 = vector.shape_cast %158 : vector<8xf32> to vector<8x1xf32>
    %160 = tpu.concatenate %151, %153, %155, %157, %159 in 1 : vector<8x1xf32>, vector<8x1xf32>, vector<8x1xf32>, vector<8x1xf32>, vector<8x1xf32> -> vector<8x5xf32>
    %c0_82 = arith.constant 0 : index
    %c0_83 = arith.constant 0 : index
    %161 = vector.load %arg7[%c0_82, %c0_83] : memref<5x32xf32, #tpu.memory_space<vmem>>, vector<5x32xf32>
    %c0_84 = arith.constant 0 : index
    %c0_85 = arith.constant 0 : index
    %162 = vector.load %arg8[%c0_84, %c0_85] : memref<32x5xf32, #tpu.memory_space<vmem>>, vector<32x5xf32>
    %cst_86 = arith.constant dense<0.000000e+00> : vector<8x32xf32>
    %163 = tpu.matmul %149, %161, %cst_86 {dimension_numbers = #tpu.dot_dimension_numbers<[1], [0], [0], [1], [0, 0, 1, 1], [], []>} : vector<8x5xf32>, vector<5x32xf32>, vector<8x32xf32> -> vector<8x32xf32>
    %cst_87 = arith.constant 0.000000e+00 : f32
    %164 = vector.broadcast %cst_87 : f32 to vector<8x32xf32>
    %165 = arith.maximumf %163, %164 : vector<8x32xf32>
    %cst_88 = arith.constant dense<0.000000e+00> : vector<8x5xf32>
    %166 = tpu.matmul %165, %162, %cst_88 {dimension_numbers = #tpu.dot_dimension_numbers<[1], [0], [0], [1], [0, 0, 1, 1], [], []>} : vector<8x32xf32>, vector<32x5xf32>, vector<8x5xf32> -> vector<8x5xf32>
    %cst_89 = arith.constant dense<0.000000e+00> : vector<8x32xf32>
    %167 = tpu.matmul %160, %161, %cst_89 {dimension_numbers = #tpu.dot_dimension_numbers<[1], [0], [0], [1], [0, 0, 1, 1], [], []>} : vector<8x5xf32>, vector<5x32xf32>, vector<8x32xf32> -> vector<8x32xf32>
    %cst_90 = arith.constant 0.000000e+00 : f32
    %168 = vector.broadcast %cst_90 : f32 to vector<8x32xf32>
    %169 = arith.maximumf %167, %168 : vector<8x32xf32>
    %cst_91 = arith.constant dense<0.000000e+00> : vector<8x5xf32>
    %170 = tpu.matmul %169, %162, %cst_91 {dimension_numbers = #tpu.dot_dimension_numbers<[1], [0], [0], [1], [0, 0, 1, 1], [], []>} : vector<8x32xf32>, vector<32x5xf32>, vector<8x5xf32> -> vector<8x5xf32>
    %171 = arith.addf %166, %170 : vector<8x5xf32>
    %172 = arith.negf %171 : vector<8x5xf32>
    %173 = math.exp %172 : vector<8x5xf32>
    %cst_92 = arith.constant 1.000000e+00 : f32
    %174 = vector.broadcast %cst_92 : f32 to vector<8x5xf32>
    %175 = arith.addf %174, %173 : vector<8x5xf32>
    %176 = arith.divf %174, %175 : vector<8x5xf32>
    %177 = vector.extract_strided_slice %176 {offsets = [0, 0], sizes = [8, 1], strides = [1, 1]} : vector<8x5xf32> to vector<8x1xf32>
    %cst_93 = arith.constant 1.000000e+00 : f32
    %178 = vector.broadcast %cst_93 : f32 to vector<8x1xf32>
    %179 = arith.addf %178, %177 : vector<8x1xf32>
    %180 = vector.broadcast %179 : vector<8x1xf32> to vector<8x62xf32>
    %181 = arith.mulf %40, %180 : vector<8x62xf32>
    %182 = vector.extract_strided_slice %176 {offsets = [0, 1], sizes = [8, 1], strides = [1, 1]} : vector<8x5xf32> to vector<8x1xf32>
    %cst_94 = arith.constant 1.000000e+00 : f32
    %183 = vector.broadcast %cst_94 : f32 to vector<8x1xf32>
    %184 = arith.addf %183, %182 : vector<8x1xf32>
    %185 = vector.broadcast %184 : vector<8x1xf32> to vector<8x62xf32>
    %186 = arith.mulf %62, %185 : vector<8x62xf32>
    %187 = vector.extract_strided_slice %176 {offsets = [0, 2], sizes = [8, 1], strides = [1, 1]} : vector<8x5xf32> to vector<8x1xf32>
    %cst_95 = arith.constant 1.000000e+00 : f32
    %188 = vector.broadcast %cst_95 : f32 to vector<8x1xf32>
    %189 = arith.addf %188, %187 : vector<8x1xf32>
    %190 = vector.broadcast %189 : vector<8x1xf32> to vector<8x62xf32>
    %191 = arith.mulf %84, %190 : vector<8x62xf32>
    %192 = vector.extract_strided_slice %176 {offsets = [0, 3], sizes = [8, 1], strides = [1, 1]} : vector<8x5xf32> to vector<8x1xf32>
    %cst_96 = arith.constant 1.000000e+00 : f32
    %193 = vector.broadcast %cst_96 : f32 to vector<8x1xf32>
    %194 = arith.addf %193, %192 : vector<8x1xf32>
    %195 = vector.broadcast %194 : vector<8x1xf32> to vector<8x62xf32>
    %196 = arith.mulf %106, %195 : vector<8x62xf32>
    %197 = vector.extract_strided_slice %176 {offsets = [0, 4], sizes = [8, 1], strides = [1, 1]} : vector<8x5xf32> to vector<8x1xf32>
    %cst_97 = arith.constant 1.000000e+00 : f32
    %198 = vector.broadcast %cst_97 : f32 to vector<8x1xf32>
    %199 = arith.addf %198, %197 : vector<8x1xf32>
    %200 = vector.broadcast %199 : vector<8x1xf32> to vector<8x62xf32>
    %201 = arith.mulf %128, %200 : vector<8x62xf32>
    %202 = arith.addf %181, %186 : vector<8x62xf32>
    %203 = arith.maximumf %181, %186 : vector<8x62xf32>
    %204 = arith.addf %202, %191 : vector<8x62xf32>
    %205 = arith.maximumf %203, %191 : vector<8x62xf32>
    %206 = arith.addf %204, %196 : vector<8x62xf32>
    %207 = arith.maximumf %205, %196 : vector<8x62xf32>
    %208 = arith.addf %206, %201 : vector<8x62xf32>
    %209 = arith.maximumf %207, %201 : vector<8x62xf32>
    %cst_98 = arith.constant 2.000000e-01 : f32
    %210 = vector.broadcast %cst_98 : f32 to vector<8x62xf32>
    %211 = arith.mulf %208, %210 : vector<8x62xf32>
    %c0_99 = arith.constant 0 : index
    %c0_100 = arith.constant 0 : index
    %212 = vector.load %arg9[%c0_99, %c0_100] : memref<62x32xf32, #tpu.memory_space<vmem>>, vector<62x32xf32>
    %c0_101 = arith.constant 0 : index
    %c0_102 = arith.constant 0 : index
    %213 = vector.load %arg10[%c0_101, %c0_102] : memref<32x62xf32, #tpu.memory_space<vmem>>, vector<32x62xf32>
    %cst_103 = arith.constant dense<0.000000e+00> : vector<8x32xf32>
    %214 = tpu.matmul %211, %212, %cst_103 {dimension_numbers = #tpu.dot_dimension_numbers<[1], [0], [0], [1], [0, 0, 1, 1], [], []>} : vector<8x62xf32>, vector<62x32xf32>, vector<8x32xf32> -> vector<8x32xf32>
    %cst_104 = arith.constant 0.000000e+00 : f32
    %215 = vector.broadcast %cst_104 : f32 to vector<8x32xf32>
    %216 = arith.maximumf %214, %215 : vector<8x32xf32>
    %cst_105 = arith.constant dense<0.000000e+00> : vector<8x62xf32>
    %217 = tpu.matmul %216, %213, %cst_105 {dimension_numbers = #tpu.dot_dimension_numbers<[1], [0], [0], [1], [0, 0, 1, 1], [], []>} : vector<8x32xf32>, vector<32x62xf32>, vector<8x62xf32> -> vector<8x62xf32>
    %cst_106 = arith.constant dense<0.000000e+00> : vector<8x32xf32>
    %218 = tpu.matmul %209, %212, %cst_106 {dimension_numbers = #tpu.dot_dimension_numbers<[1], [0], [0], [1], [0, 0, 1, 1], [], []>} : vector<8x62xf32>, vector<62x32xf32>, vector<8x32xf32> -> vector<8x32xf32>
    %cst_107 = arith.constant 0.000000e+00 : f32
    %219 = vector.broadcast %cst_107 : f32 to vector<8x32xf32>
    %220 = arith.maximumf %218, %219 : vector<8x32xf32>
    %cst_108 = arith.constant dense<0.000000e+00> : vector<8x62xf32>
    %221 = tpu.matmul %220, %213, %cst_108 {dimension_numbers = #tpu.dot_dimension_numbers<[1], [0], [0], [1], [0, 0, 1, 1], [], []>} : vector<8x32xf32>, vector<32x62xf32>, vector<8x62xf32> -> vector<8x62xf32>
    %222 = arith.addf %217, %221 : vector<8x62xf32>
    %223 = arith.negf %222 : vector<8x62xf32>
    %224 = math.exp %223 : vector<8x62xf32>
    %cst_109 = arith.constant 1.000000e+00 : f32
    %225 = vector.broadcast %cst_109 : f32 to vector<8x62xf32>
    %226 = arith.addf %225, %224 : vector<8x62xf32>
    %227 = arith.divf %225, %226 : vector<8x62xf32>
    %cst_110 = arith.constant 1.000000e+00 : f32
    %228 = vector.broadcast %cst_110 : f32 to vector<8x62xf32>
    %229 = arith.addf %228, %227 : vector<8x62xf32>
    %230 = arith.mulf %181, %229 : vector<8x62xf32>
    %cst_111 = arith.constant 1.000000e+00 : f32
    %231 = vector.broadcast %cst_111 : f32 to vector<8x62xf32>
    %232 = arith.addf %231, %227 : vector<8x62xf32>
    %233 = arith.mulf %186, %232 : vector<8x62xf32>
    %cst_112 = arith.constant 1.000000e+00 : f32
    %234 = vector.broadcast %cst_112 : f32 to vector<8x62xf32>
    %235 = arith.addf %234, %227 : vector<8x62xf32>
    %236 = arith.mulf %191, %235 : vector<8x62xf32>
    %cst_113 = arith.constant 1.000000e+00 : f32
    %237 = vector.broadcast %cst_113 : f32 to vector<8x62xf32>
    %238 = arith.addf %237, %227 : vector<8x62xf32>
    %239 = arith.mulf %196, %238 : vector<8x62xf32>
    %cst_114 = arith.constant 1.000000e+00 : f32
    %240 = vector.broadcast %cst_114 : f32 to vector<8x62xf32>
    %241 = arith.addf %240, %227 : vector<8x62xf32>
    %242 = arith.mulf %201, %241 : vector<8x62xf32>
    %243 = tpu.concatenate %40, %62, %84, %106, %128 in 0 : vector<8x62xf32>, vector<8x62xf32>, vector<8x62xf32>, vector<8x62xf32>, vector<8x62xf32> -> vector<40x62xf32>
    %c0_115 = arith.constant 0 : index
    %c0_116 = arith.constant 0 : index
    %244 = vector.load %arg12[%c0_115, %c0_116] : memref<73x16xf32, #tpu.memory_space<vmem>>, vector<73x16xf32>
    %c0_117 = arith.constant 0 : index
    %c0_118 = arith.constant 0 : index
    %245 = vector.load %arg13[%c0_117, %c0_118] : memref<16x73xf32, #tpu.memory_space<vmem>>, vector<16x73xf32>
    %c0_119 = arith.constant 0 : index
    %c0_120 = arith.constant 0 : index
    %246 = vector.load %arg11[%c0_119, %c0_120] : memref<62x73xbf16, #tpu.memory_space<vmem>>, vector<62x73xbf16>
    %247 = arith.truncf %243 : vector<40x62xf32> to vector<40x62xbf16>
    %cst_121 = arith.constant dense<0.000000e+00> : vector<40x73xf32>
    %248 = tpu.matmul %247, %246, %cst_121 {dimension_numbers = #tpu.dot_dimension_numbers<[1], [0], [0], [1], [0, 0, 1, 1], [], []>} : vector<40x62xbf16>, vector<62x73xbf16>, vector<40x73xf32> -> vector<40x73xf32>
    %249 = vector.extract_strided_slice %248 {offsets = [0, 0], sizes = [8, 73], strides = [1, 1]} : vector<40x73xf32> to vector<8x73xf32>
    %250 = vector.extract_strided_slice %248 {offsets = [8, 0], sizes = [8, 73], strides = [1, 1]} : vector<40x73xf32> to vector<8x73xf32>
    %251 = vector.extract_strided_slice %248 {offsets = [16, 0], sizes = [8, 73], strides = [1, 1]} : vector<40x73xf32> to vector<8x73xf32>
    %252 = vector.extract_strided_slice %248 {offsets = [24, 0], sizes = [8, 73], strides = [1, 1]} : vector<40x73xf32> to vector<8x73xf32>
    %253 = vector.extract_strided_slice %248 {offsets = [32, 0], sizes = [8, 73], strides = [1, 1]} : vector<40x73xf32> to vector<8x73xf32>
    %cst_122 = arith.constant dense<0.000000e+00> : vector<40x16xf32>
    %254 = tpu.matmul %248, %244, %cst_122 {dimension_numbers = #tpu.dot_dimension_numbers<[1], [0], [0], [1], [0, 0, 1, 1], [], []>} : vector<40x73xf32>, vector<73x16xf32>, vector<40x16xf32> -> vector<40x16xf32>
    %cst_123 = arith.constant dense<0.000000e+00> : vector<40x73xf32>
    %255 = tpu.matmul %254, %245, %cst_123 {dimension_numbers = #tpu.dot_dimension_numbers<[1], [0], [0], [1], [0, 0, 1, 1], [], []>} : vector<40x16xf32>, vector<16x73xf32>, vector<40x73xf32> -> vector<40x73xf32>
    %256 = vector.extract_strided_slice %255 {offsets = [0, 0], sizes = [8, 73], strides = [1, 1]} : vector<40x73xf32> to vector<8x73xf32>
    %257 = vector.extract_strided_slice %255 {offsets = [8, 0], sizes = [8, 73], strides = [1, 1]} : vector<40x73xf32> to vector<8x73xf32>
    %258 = vector.extract_strided_slice %255 {offsets = [16, 0], sizes = [8, 73], strides = [1, 1]} : vector<40x73xf32> to vector<8x73xf32>
    %259 = vector.extract_strided_slice %255 {offsets = [24, 0], sizes = [8, 73], strides = [1, 1]} : vector<40x73xf32> to vector<8x73xf32>
    %260 = vector.extract_strided_slice %255 {offsets = [32, 0], sizes = [8, 73], strides = [1, 1]} : vector<40x73xf32> to vector<8x73xf32>
    %c0_124 = arith.constant 0 : index
    %c0_125 = arith.constant 0 : index
    %261 = memref.load %arg4[%c0_124, %c0_125] : memref<5x5xf32, #tpu.memory_space<smem>>
    %262 = vector.broadcast %261 : f32 to vector<8x73xf32>
    %263 = arith.mulf %256, %262 : vector<8x73xf32>
    %c0_126 = arith.constant 0 : index
    %c1_127 = arith.constant 1 : index
    %264 = memref.load %arg4[%c0_126, %c1_127] : memref<5x5xf32, #tpu.memory_space<smem>>
    %265 = vector.broadcast %264 : f32 to vector<8x73xf32>
    %266 = arith.mulf %257, %265 : vector<8x73xf32>
    %267 = arith.addf %263, %266 : vector<8x73xf32>
    %c0_128 = arith.constant 0 : index
    %c2_129 = arith.constant 2 : index
    %268 = memref.load %arg4[%c0_128, %c2_129] : memref<5x5xf32, #tpu.memory_space<smem>>
    %269 = vector.broadcast %268 : f32 to vector<8x73xf32>
    %270 = arith.mulf %258, %269 : vector<8x73xf32>
    %271 = arith.addf %267, %270 : vector<8x73xf32>
    %c0_130 = arith.constant 0 : index
    %c3_131 = arith.constant 3 : index
    %272 = memref.load %arg4[%c0_130, %c3_131] : memref<5x5xf32, #tpu.memory_space<smem>>
    %273 = vector.broadcast %272 : f32 to vector<8x73xf32>
    %274 = arith.mulf %259, %273 : vector<8x73xf32>
    %275 = arith.addf %271, %274 : vector<8x73xf32>
    %c0_132 = arith.constant 0 : index
    %c4_133 = arith.constant 4 : index
    %276 = memref.load %arg4[%c0_132, %c4_133] : memref<5x5xf32, #tpu.memory_space<smem>>
    %277 = vector.broadcast %276 : f32 to vector<8x73xf32>
    %278 = arith.mulf %260, %277 : vector<8x73xf32>
    %279 = arith.addf %275, %278 : vector<8x73xf32>
    %280 = arith.mulf %249, %279 : vector<8x73xf32>
    %c1_134 = arith.constant 1 : index
    %c0_135 = arith.constant 0 : index
    %281 = memref.load %arg4[%c1_134, %c0_135] : memref<5x5xf32, #tpu.memory_space<smem>>
    %282 = vector.broadcast %281 : f32 to vector<8x73xf32>
    %283 = arith.mulf %256, %282 : vector<8x73xf32>
    %c1_136 = arith.constant 1 : index
    %c1_137 = arith.constant 1 : index
    %284 = memref.load %arg4[%c1_136, %c1_137] : memref<5x5xf32, #tpu.memory_space<smem>>
    %285 = vector.broadcast %284 : f32 to vector<8x73xf32>
    %286 = arith.mulf %257, %285 : vector<8x73xf32>
    %287 = arith.addf %283, %286 : vector<8x73xf32>
    %c1_138 = arith.constant 1 : index
    %c2_139 = arith.constant 2 : index
    %288 = memref.load %arg4[%c1_138, %c2_139] : memref<5x5xf32, #tpu.memory_space<smem>>
    %289 = vector.broadcast %288 : f32 to vector<8x73xf32>
    %290 = arith.mulf %258, %289 : vector<8x73xf32>
    %291 = arith.addf %287, %290 : vector<8x73xf32>
    %c1_140 = arith.constant 1 : index
    %c3_141 = arith.constant 3 : index
    %292 = memref.load %arg4[%c1_140, %c3_141] : memref<5x5xf32, #tpu.memory_space<smem>>
    %293 = vector.broadcast %292 : f32 to vector<8x73xf32>
    %294 = arith.mulf %259, %293 : vector<8x73xf32>
    %295 = arith.addf %291, %294 : vector<8x73xf32>
    %c1_142 = arith.constant 1 : index
    %c4_143 = arith.constant 4 : index
    %296 = memref.load %arg4[%c1_142, %c4_143] : memref<5x5xf32, #tpu.memory_space<smem>>
    %297 = vector.broadcast %296 : f32 to vector<8x73xf32>
    %298 = arith.mulf %260, %297 : vector<8x73xf32>
    %299 = arith.addf %295, %298 : vector<8x73xf32>
    %300 = arith.mulf %250, %299 : vector<8x73xf32>
    %301 = arith.addf %280, %300 : vector<8x73xf32>
    %c2_144 = arith.constant 2 : index
    %c0_145 = arith.constant 0 : index
    %302 = memref.load %arg4[%c2_144, %c0_145] : memref<5x5xf32, #tpu.memory_space<smem>>
    %303 = vector.broadcast %302 : f32 to vector<8x73xf32>
    %304 = arith.mulf %256, %303 : vector<8x73xf32>
    %c2_146 = arith.constant 2 : index
    %c1_147 = arith.constant 1 : index
    %305 = memref.load %arg4[%c2_146, %c1_147] : memref<5x5xf32, #tpu.memory_space<smem>>
    %306 = vector.broadcast %305 : f32 to vector<8x73xf32>
    %307 = arith.mulf %257, %306 : vector<8x73xf32>
    %308 = arith.addf %304, %307 : vector<8x73xf32>
    %c2_148 = arith.constant 2 : index
    %c2_149 = arith.constant 2 : index
    %309 = memref.load %arg4[%c2_148, %c2_149] : memref<5x5xf32, #tpu.memory_space<smem>>
    %310 = vector.broadcast %309 : f32 to vector<8x73xf32>
    %311 = arith.mulf %258, %310 : vector<8x73xf32>
    %312 = arith.addf %308, %311 : vector<8x73xf32>
    %c2_150 = arith.constant 2 : index
    %c3_151 = arith.constant 3 : index
    %313 = memref.load %arg4[%c2_150, %c3_151] : memref<5x5xf32, #tpu.memory_space<smem>>
    %314 = vector.broadcast %313 : f32 to vector<8x73xf32>
    %315 = arith.mulf %259, %314 : vector<8x73xf32>
    %316 = arith.addf %312, %315 : vector<8x73xf32>
    %c2_152 = arith.constant 2 : index
    %c4_153 = arith.constant 4 : index
    %317 = memref.load %arg4[%c2_152, %c4_153] : memref<5x5xf32, #tpu.memory_space<smem>>
    %318 = vector.broadcast %317 : f32 to vector<8x73xf32>
    %319 = arith.mulf %260, %318 : vector<8x73xf32>
    %320 = arith.addf %316, %319 : vector<8x73xf32>
    %321 = arith.mulf %251, %320 : vector<8x73xf32>
    %322 = arith.addf %301, %321 : vector<8x73xf32>
    %c3_154 = arith.constant 3 : index
    %c0_155 = arith.constant 0 : index
    %323 = memref.load %arg4[%c3_154, %c0_155] : memref<5x5xf32, #tpu.memory_space<smem>>
    %324 = vector.broadcast %323 : f32 to vector<8x73xf32>
    %325 = arith.mulf %256, %324 : vector<8x73xf32>
    %c3_156 = arith.constant 3 : index
    %c1_157 = arith.constant 1 : index
    %326 = memref.load %arg4[%c3_156, %c1_157] : memref<5x5xf32, #tpu.memory_space<smem>>
    %327 = vector.broadcast %326 : f32 to vector<8x73xf32>
    %328 = arith.mulf %257, %327 : vector<8x73xf32>
    %329 = arith.addf %325, %328 : vector<8x73xf32>
    %c3_158 = arith.constant 3 : index
    %c2_159 = arith.constant 2 : index
    %330 = memref.load %arg4[%c3_158, %c2_159] : memref<5x5xf32, #tpu.memory_space<smem>>
    %331 = vector.broadcast %330 : f32 to vector<8x73xf32>
    %332 = arith.mulf %258, %331 : vector<8x73xf32>
    %333 = arith.addf %329, %332 : vector<8x73xf32>
    %c3_160 = arith.constant 3 : index
    %c3_161 = arith.constant 3 : index
    %334 = memref.load %arg4[%c3_160, %c3_161] : memref<5x5xf32, #tpu.memory_space<smem>>
    %335 = vector.broadcast %334 : f32 to vector<8x73xf32>
    %336 = arith.mulf %259, %335 : vector<8x73xf32>
    %337 = arith.addf %333, %336 : vector<8x73xf32>
    %c3_162 = arith.constant 3 : index
    %c4_163 = arith.constant 4 : index
    %338 = memref.load %arg4[%c3_162, %c4_163] : memref<5x5xf32, #tpu.memory_space<smem>>
    %339 = vector.broadcast %338 : f32 to vector<8x73xf32>
    %340 = arith.mulf %260, %339 : vector<8x73xf32>
    %341 = arith.addf %337, %340 : vector<8x73xf32>
    %342 = arith.mulf %252, %341 : vector<8x73xf32>
    %343 = arith.addf %322, %342 : vector<8x73xf32>
    %c4_164 = arith.constant 4 : index
    %c0_165 = arith.constant 0 : index
    %344 = memref.load %arg4[%c4_164, %c0_165] : memref<5x5xf32, #tpu.memory_space<smem>>
    %345 = vector.broadcast %344 : f32 to vector<8x73xf32>
    %346 = arith.mulf %256, %345 : vector<8x73xf32>
    %c4_166 = arith.constant 4 : index
    %c1_167 = arith.constant 1 : index
    %347 = memref.load %arg4[%c4_166, %c1_167] : memref<5x5xf32, #tpu.memory_space<smem>>
    %348 = vector.broadcast %347 : f32 to vector<8x73xf32>
    %349 = arith.mulf %257, %348 : vector<8x73xf32>
    %350 = arith.addf %346, %349 : vector<8x73xf32>
    %c4_168 = arith.constant 4 : index
    %c2_169 = arith.constant 2 : index
    %351 = memref.load %arg4[%c4_168, %c2_169] : memref<5x5xf32, #tpu.memory_space<smem>>
    %352 = vector.broadcast %351 : f32 to vector<8x73xf32>
    %353 = arith.mulf %258, %352 : vector<8x73xf32>
    %354 = arith.addf %350, %353 : vector<8x73xf32>
    %c4_170 = arith.constant 4 : index
    %c3_171 = arith.constant 3 : index
    %355 = memref.load %arg4[%c4_170, %c3_171] : memref<5x5xf32, #tpu.memory_space<smem>>
    %356 = vector.broadcast %355 : f32 to vector<8x73xf32>
    %357 = arith.mulf %259, %356 : vector<8x73xf32>
    %358 = arith.addf %354, %357 : vector<8x73xf32>
    %c4_172 = arith.constant 4 : index
    %c4_173 = arith.constant 4 : index
    %359 = memref.load %arg4[%c4_172, %c4_173] : memref<5x5xf32, #tpu.memory_space<smem>>
    %360 = vector.broadcast %359 : f32 to vector<8x73xf32>
    %361 = arith.mulf %260, %360 : vector<8x73xf32>
    %362 = arith.addf %358, %361 : vector<8x73xf32>
    %363 = arith.mulf %253, %362 : vector<8x73xf32>
    %364 = arith.addf %343, %363 : vector<8x73xf32>
    %365 = vector.extract_strided_slice %364 {offsets = [0, 0], sizes = [8, 5], strides = [1, 1]} : vector<8x73xf32> to vector<8x5xf32>
    %cst_174 = arith.constant dense<0xFF800000> : vector<8xf32>
    %366 = vector.multi_reduction <maximumf>, %365, %cst_174 [1] : vector<8x5xf32> to vector<8xf32>
    %367 = vector.shape_cast %366 : vector<8xf32> to vector<8x1xf32>
    %368 = vector.extract_strided_slice %364 {offsets = [0, 5], sizes = [8, 3], strides = [1, 1]} : vector<8x73xf32> to vector<8x3xf32>
    %cst_175 = arith.constant dense<0xFF800000> : vector<8xf32>
    %369 = vector.multi_reduction <maximumf>, %368, %cst_175 [1] : vector<8x3xf32> to vector<8xf32>
    %370 = vector.shape_cast %369 : vector<8xf32> to vector<8x1xf32>
    %371 = vector.extract_strided_slice %364 {offsets = [0, 8], sizes = [8, 3], strides = [1, 1]} : vector<8x73xf32> to vector<8x3xf32>
    %cst_176 = arith.constant dense<0xFF800000> : vector<8xf32>
    %372 = vector.multi_reduction <maximumf>, %371, %cst_176 [1] : vector<8x3xf32> to vector<8xf32>
    %373 = vector.shape_cast %372 : vector<8xf32> to vector<8x1xf32>
    %374 = vector.extract_strided_slice %364 {offsets = [0, 11], sizes = [8, 3], strides = [1, 1]} : vector<8x73xf32> to vector<8x3xf32>
    %cst_177 = arith.constant dense<0xFF800000> : vector<8xf32>
    %375 = vector.multi_reduction <maximumf>, %374, %cst_177 [1] : vector<8x3xf32> to vector<8xf32>
    %376 = vector.shape_cast %375 : vector<8xf32> to vector<8x1xf32>
    %377 = vector.extract_strided_slice %364 {offsets = [0, 14], sizes = [8, 3], strides = [1, 1]} : vector<8x73xf32> to vector<8x3xf32>
    %cst_178 = arith.constant dense<0xFF800000> : vector<8xf32>
    %378 = vector.multi_reduction <maximumf>, %377, %cst_178 [1] : vector<8x3xf32> to vector<8xf32>
    %379 = vector.shape_cast %378 : vector<8xf32> to vector<8x1xf32>
    %380 = vector.extract_strided_slice %364 {offsets = [0, 17], sizes = [8, 3], strides = [1, 1]} : vector<8x73xf32> to vector<8x3xf32>
    %cst_179 = arith.constant dense<0xFF800000> : vector<8xf32>
    %381 = vector.multi_reduction <maximumf>, %380, %cst_179 [1] : vector<8x3xf32> to vector<8xf32>
    %382 = vector.shape_cast %381 : vector<8xf32> to vector<8x1xf32>
    %383 = vector.extract_strided_slice %364 {offsets = [0, 20], sizes = [8, 5], strides = [1, 1]} : vector<8x73xf32> to vector<8x5xf32>
    %cst_180 = arith.constant dense<0xFF800000> : vector<8xf32>
    %384 = vector.multi_reduction <maximumf>, %383, %cst_180 [1] : vector<8x5xf32> to vector<8xf32>
    %385 = vector.shape_cast %384 : vector<8xf32> to vector<8x1xf32>
    %386 = vector.extract_strided_slice %364 {offsets = [0, 25], sizes = [8, 5], strides = [1, 1]} : vector<8x73xf32> to vector<8x5xf32>
    %cst_181 = arith.constant dense<0xFF800000> : vector<8xf32>
    %387 = vector.multi_reduction <maximumf>, %386, %cst_181 [1] : vector<8x5xf32> to vector<8xf32>
    %388 = vector.shape_cast %387 : vector<8xf32> to vector<8x1xf32>
    %389 = vector.extract_strided_slice %364 {offsets = [0, 30], sizes = [8, 5], strides = [1, 1]} : vector<8x73xf32> to vector<8x5xf32>
    %cst_182 = arith.constant dense<0xFF800000> : vector<8xf32>
    %390 = vector.multi_reduction <maximumf>, %389, %cst_182 [1] : vector<8x5xf32> to vector<8xf32>
    %391 = vector.shape_cast %390 : vector<8xf32> to vector<8x1xf32>
    %392 = vector.extract_strided_slice %364 {offsets = [0, 35], sizes = [8, 11], strides = [1, 1]} : vector<8x73xf32> to vector<8x11xf32>
    %cst_183 = arith.constant dense<0xFF800000> : vector<8xf32>
    %393 = vector.multi_reduction <maximumf>, %392, %cst_183 [1] : vector<8x11xf32> to vector<8xf32>
    %394 = vector.shape_cast %393 : vector<8xf32> to vector<8x1xf32>
    %395 = vector.extract_strided_slice %364 {offsets = [0, 46], sizes = [8, 3], strides = [1, 1]} : vector<8x73xf32> to vector<8x3xf32>
    %cst_184 = arith.constant dense<0xFF800000> : vector<8xf32>
    %396 = vector.multi_reduction <maximumf>, %395, %cst_184 [1] : vector<8x3xf32> to vector<8xf32>
    %397 = vector.shape_cast %396 : vector<8xf32> to vector<8x1xf32>
    %398 = vector.extract_strided_slice %364 {offsets = [0, 49], sizes = [8, 3], strides = [1, 1]} : vector<8x73xf32> to vector<8x3xf32>
    %cst_185 = arith.constant dense<0xFF800000> : vector<8xf32>
    %399 = vector.multi_reduction <maximumf>, %398, %cst_185 [1] : vector<8x3xf32> to vector<8xf32>
    %400 = vector.shape_cast %399 : vector<8xf32> to vector<8x1xf32>
    %401 = vector.extract_strided_slice %364 {offsets = [0, 52], sizes = [8, 3], strides = [1, 1]} : vector<8x73xf32> to vector<8x3xf32>
    %cst_186 = arith.constant dense<0xFF800000> : vector<8xf32>
    %402 = vector.multi_reduction <maximumf>, %401, %cst_186 [1] : vector<8x3xf32> to vector<8xf32>
    %403 = vector.shape_cast %402 : vector<8xf32> to vector<8x1xf32>
    %404 = vector.extract_strided_slice %364 {offsets = [0, 55], sizes = [8, 3], strides = [1, 1]} : vector<8x73xf32> to vector<8x3xf32>
    %cst_187 = arith.constant dense<0xFF800000> : vector<8xf32>
    %405 = vector.multi_reduction <maximumf>, %404, %cst_187 [1] : vector<8x3xf32> to vector<8xf32>
    %406 = vector.shape_cast %405 : vector<8xf32> to vector<8x1xf32>
    %407 = vector.extract_strided_slice %364 {offsets = [0, 58], sizes = [8, 3], strides = [1, 1]} : vector<8x73xf32> to vector<8x3xf32>
    %cst_188 = arith.constant dense<0xFF800000> : vector<8xf32>
    %408 = vector.multi_reduction <maximumf>, %407, %cst_188 [1] : vector<8x3xf32> to vector<8xf32>
    %409 = vector.shape_cast %408 : vector<8xf32> to vector<8x1xf32>
    %410 = vector.extract_strided_slice %364 {offsets = [0, 61], sizes = [8, 12], strides = [1, 1]} : vector<8x73xf32> to vector<8x12xf32>
    %cst_189 = arith.constant dense<0xFF800000> : vector<8xf32>
    %411 = vector.multi_reduction <maximumf>, %410, %cst_189 [1] : vector<8x12xf32> to vector<8xf32>
    %412 = vector.shape_cast %411 : vector<8xf32> to vector<8x1xf32>
    %413 = tpu.concatenate %367, %370, %373, %376, %379, %382, %385, %388, %391, %394, %397, %400, %403, %406, %409, %412 in 1 : vector<8x1xf32>, vector<8x1xf32>, vector<8x1xf32>, vector<8x1xf32>, vector<8x1xf32>, vector<8x1xf32>, vector<8x1xf32>, vector<8x1xf32>, vector<8x1xf32>, vector<8x1xf32>, vector<8x1xf32>, vector<8x1xf32>, vector<8x1xf32>, vector<8x1xf32>, vector<8x1xf32>, vector<8x1xf32> -> vector<8x16xf32>
    %cst_190 = arith.constant dense<0.000000e+00> : vector<8x73xf32>
    %414 = tpu.matmul %413, %245, %cst_190 {dimension_numbers = #tpu.dot_dimension_numbers<[1], [0], [0], [1], [0, 0, 1, 1], [], []>} : vector<8x16xf32>, vector<16x73xf32>, vector<8x73xf32> -> vector<8x73xf32>
    %415 = arith.subf %364, %414 : vector<8x73xf32>
    %416 = math.exp %415 : vector<8x73xf32>
    %cst_191 = arith.constant dense<0.000000e+00> : vector<8x16xf32>
    %417 = tpu.matmul %416, %244, %cst_191 {dimension_numbers = #tpu.dot_dimension_numbers<[1], [0], [0], [1], [0, 0, 1, 1], [], []>} : vector<8x73xf32>, vector<73x16xf32>, vector<8x16xf32> -> vector<8x16xf32>
    %418 = tpu.reciprocal %417 {approx = true} : vector<8x16xf32> -> vector<8x16xf32>
    %cst_192 = arith.constant dense<0.000000e+00> : vector<8x73xf32>
    %419 = tpu.matmul %418, %245, %cst_192 {dimension_numbers = #tpu.dot_dimension_numbers<[1], [0], [0], [1], [0, 0, 1, 1], [], []>} : vector<8x16xf32>, vector<16x73xf32>, vector<8x73xf32> -> vector<8x73xf32>
    %420 = arith.mulf %416, %419 : vector<8x73xf32>
    %421 = arith.mulf %249, %420 : vector<8x73xf32>
    %422 = arith.mulf %250, %420 : vector<8x73xf32>
    %423 = arith.mulf %251, %420 : vector<8x73xf32>
    %424 = arith.mulf %252, %420 : vector<8x73xf32>
    %425 = arith.mulf %253, %420 : vector<8x73xf32>
    %426 = tpu.concatenate %421, %422, %423, %424, %425 in 0 : vector<8x73xf32>, vector<8x73xf32>, vector<8x73xf32>, vector<8x73xf32>, vector<8x73xf32> -> vector<40x73xf32>
    %cst_193 = arith.constant dense<0.000000e+00> : vector<40x16xf32>
    %427 = tpu.matmul %426, %244, %cst_193 {dimension_numbers = #tpu.dot_dimension_numbers<[1], [0], [0], [1], [0, 0, 1, 1], [], []>} : vector<40x73xf32>, vector<73x16xf32>, vector<40x16xf32> -> vector<40x16xf32>
    %428 = vector.extract_strided_slice %427 {offsets = [0, 0], sizes = [8, 16], strides = [1, 1]} : vector<40x16xf32> to vector<8x16xf32>
    %429 = vector.extract_strided_slice %427 {offsets = [8, 0], sizes = [8, 16], strides = [1, 1]} : vector<40x16xf32> to vector<8x16xf32>
    %430 = vector.extract_strided_slice %427 {offsets = [16, 0], sizes = [8, 16], strides = [1, 1]} : vector<40x16xf32> to vector<8x16xf32>
    %431 = vector.extract_strided_slice %427 {offsets = [24, 0], sizes = [8, 16], strides = [1, 1]} : vector<40x16xf32> to vector<8x16xf32>
    %432 = vector.extract_strided_slice %427 {offsets = [32, 0], sizes = [8, 16], strides = [1, 1]} : vector<40x16xf32> to vector<8x16xf32>
    %c0_194 = arith.constant 0 : index
    %c0_195 = arith.constant 0 : index
    %433 = vector.load %arg15[%c0_194, %c0_195] : memref<78x7xf32, #tpu.memory_space<vmem>>, vector<78x7xf32>
    %c0_196 = arith.constant 0 : index
    %c0_197 = arith.constant 0 : index
    %434 = vector.load %arg16[%c0_196, %c0_197] : memref<7x78xf32, #tpu.memory_space<vmem>>, vector<7x78xf32>
    %c0_198 = arith.constant 0 : index
    %c0_199 = arith.constant 0 : index
    %435 = vector.load %arg14[%c0_198, %c0_199] : memref<62x78xbf16, #tpu.memory_space<vmem>>, vector<62x78xbf16>
    %436 = arith.truncf %243 : vector<40x62xf32> to vector<40x62xbf16>
    %cst_200 = arith.constant dense<0.000000e+00> : vector<40x78xf32>
    %437 = tpu.matmul %436, %435, %cst_200 {dimension_numbers = #tpu.dot_dimension_numbers<[1], [0], [0], [1], [0, 0, 1, 1], [], []>} : vector<40x62xbf16>, vector<62x78xbf16>, vector<40x78xf32> -> vector<40x78xf32>
    %438 = vector.extract_strided_slice %437 {offsets = [0, 0], sizes = [8, 78], strides = [1, 1]} : vector<40x78xf32> to vector<8x78xf32>
    %439 = vector.extract_strided_slice %437 {offsets = [8, 0], sizes = [8, 78], strides = [1, 1]} : vector<40x78xf32> to vector<8x78xf32>
    %440 = vector.extract_strided_slice %437 {offsets = [16, 0], sizes = [8, 78], strides = [1, 1]} : vector<40x78xf32> to vector<8x78xf32>
    %441 = vector.extract_strided_slice %437 {offsets = [24, 0], sizes = [8, 78], strides = [1, 1]} : vector<40x78xf32> to vector<8x78xf32>
    %442 = vector.extract_strided_slice %437 {offsets = [32, 0], sizes = [8, 78], strides = [1, 1]} : vector<40x78xf32> to vector<8x78xf32>
    %cst_201 = arith.constant dense<0.000000e+00> : vector<40x7xf32>
    %443 = tpu.matmul %437, %433, %cst_201 {dimension_numbers = #tpu.dot_dimension_numbers<[1], [0], [0], [1], [0, 0, 1, 1], [], []>} : vector<40x78xf32>, vector<78x7xf32>, vector<40x7xf32> -> vector<40x7xf32>
    %cst_202 = arith.constant dense<0.000000e+00> : vector<40x78xf32>
    %444 = tpu.matmul %443, %434, %cst_202 {dimension_numbers = #tpu.dot_dimension_numbers<[1], [0], [0], [1], [0, 0, 1, 1], [], []>} : vector<40x7xf32>, vector<7x78xf32>, vector<40x78xf32> -> vector<40x78xf32>
    %445 = vector.extract_strided_slice %444 {offsets = [0, 0], sizes = [8, 78], strides = [1, 1]} : vector<40x78xf32> to vector<8x78xf32>
    %446 = vector.extract_strided_slice %444 {offsets = [8, 0], sizes = [8, 78], strides = [1, 1]} : vector<40x78xf32> to vector<8x78xf32>
    %447 = vector.extract_strided_slice %444 {offsets = [16, 0], sizes = [8, 78], strides = [1, 1]} : vector<40x78xf32> to vector<8x78xf32>
    %448 = vector.extract_strided_slice %444 {offsets = [24, 0], sizes = [8, 78], strides = [1, 1]} : vector<40x78xf32> to vector<8x78xf32>
    %449 = vector.extract_strided_slice %444 {offsets = [32, 0], sizes = [8, 78], strides = [1, 1]} : vector<40x78xf32> to vector<8x78xf32>
    %c0_203 = arith.constant 0 : index
    %c0_204 = arith.constant 0 : index
    %450 = memref.load %arg5[%c0_203, %c0_204] : memref<5x5xf32, #tpu.memory_space<smem>>
    %451 = vector.broadcast %450 : f32 to vector<8x78xf32>
    %452 = arith.mulf %445, %451 : vector<8x78xf32>
    %c0_205 = arith.constant 0 : index
    %c1_206 = arith.constant 1 : index
    %453 = memref.load %arg5[%c0_205, %c1_206] : memref<5x5xf32, #tpu.memory_space<smem>>
    %454 = vector.broadcast %453 : f32 to vector<8x78xf32>
    %455 = arith.mulf %446, %454 : vector<8x78xf32>
    %456 = arith.addf %452, %455 : vector<8x78xf32>
    %c0_207 = arith.constant 0 : index
    %c2_208 = arith.constant 2 : index
    %457 = memref.load %arg5[%c0_207, %c2_208] : memref<5x5xf32, #tpu.memory_space<smem>>
    %458 = vector.broadcast %457 : f32 to vector<8x78xf32>
    %459 = arith.mulf %447, %458 : vector<8x78xf32>
    %460 = arith.addf %456, %459 : vector<8x78xf32>
    %c0_209 = arith.constant 0 : index
    %c3_210 = arith.constant 3 : index
    %461 = memref.load %arg5[%c0_209, %c3_210] : memref<5x5xf32, #tpu.memory_space<smem>>
    %462 = vector.broadcast %461 : f32 to vector<8x78xf32>
    %463 = arith.mulf %448, %462 : vector<8x78xf32>
    %464 = arith.addf %460, %463 : vector<8x78xf32>
    %c0_211 = arith.constant 0 : index
    %c4_212 = arith.constant 4 : index
    %465 = memref.load %arg5[%c0_211, %c4_212] : memref<5x5xf32, #tpu.memory_space<smem>>
    %466 = vector.broadcast %465 : f32 to vector<8x78xf32>
    %467 = arith.mulf %449, %466 : vector<8x78xf32>
    %468 = arith.addf %464, %467 : vector<8x78xf32>
    %469 = arith.mulf %438, %468 : vector<8x78xf32>
    %c1_213 = arith.constant 1 : index
    %c0_214 = arith.constant 0 : index
    %470 = memref.load %arg5[%c1_213, %c0_214] : memref<5x5xf32, #tpu.memory_space<smem>>
    %471 = vector.broadcast %470 : f32 to vector<8x78xf32>
    %472 = arith.mulf %445, %471 : vector<8x78xf32>
    %c1_215 = arith.constant 1 : index
    %c1_216 = arith.constant 1 : index
    %473 = memref.load %arg5[%c1_215, %c1_216] : memref<5x5xf32, #tpu.memory_space<smem>>
    %474 = vector.broadcast %473 : f32 to vector<8x78xf32>
    %475 = arith.mulf %446, %474 : vector<8x78xf32>
    %476 = arith.addf %472, %475 : vector<8x78xf32>
    %c1_217 = arith.constant 1 : index
    %c2_218 = arith.constant 2 : index
    %477 = memref.load %arg5[%c1_217, %c2_218] : memref<5x5xf32, #tpu.memory_space<smem>>
    %478 = vector.broadcast %477 : f32 to vector<8x78xf32>
    %479 = arith.mulf %447, %478 : vector<8x78xf32>
    %480 = arith.addf %476, %479 : vector<8x78xf32>
    %c1_219 = arith.constant 1 : index
    %c3_220 = arith.constant 3 : index
    %481 = memref.load %arg5[%c1_219, %c3_220] : memref<5x5xf32, #tpu.memory_space<smem>>
    %482 = vector.broadcast %481 : f32 to vector<8x78xf32>
    %483 = arith.mulf %448, %482 : vector<8x78xf32>
    %484 = arith.addf %480, %483 : vector<8x78xf32>
    %c1_221 = arith.constant 1 : index
    %c4_222 = arith.constant 4 : index
    %485 = memref.load %arg5[%c1_221, %c4_222] : memref<5x5xf32, #tpu.memory_space<smem>>
    %486 = vector.broadcast %485 : f32 to vector<8x78xf32>
    %487 = arith.mulf %449, %486 : vector<8x78xf32>
    %488 = arith.addf %484, %487 : vector<8x78xf32>
    %489 = arith.mulf %439, %488 : vector<8x78xf32>
    %490 = arith.addf %469, %489 : vector<8x78xf32>
    %c2_223 = arith.constant 2 : index
    %c0_224 = arith.constant 0 : index
    %491 = memref.load %arg5[%c2_223, %c0_224] : memref<5x5xf32, #tpu.memory_space<smem>>
    %492 = vector.broadcast %491 : f32 to vector<8x78xf32>
    %493 = arith.mulf %445, %492 : vector<8x78xf32>
    %c2_225 = arith.constant 2 : index
    %c1_226 = arith.constant 1 : index
    %494 = memref.load %arg5[%c2_225, %c1_226] : memref<5x5xf32, #tpu.memory_space<smem>>
    %495 = vector.broadcast %494 : f32 to vector<8x78xf32>
    %496 = arith.mulf %446, %495 : vector<8x78xf32>
    %497 = arith.addf %493, %496 : vector<8x78xf32>
    %c2_227 = arith.constant 2 : index
    %c2_228 = arith.constant 2 : index
    %498 = memref.load %arg5[%c2_227, %c2_228] : memref<5x5xf32, #tpu.memory_space<smem>>
    %499 = vector.broadcast %498 : f32 to vector<8x78xf32>
    %500 = arith.mulf %447, %499 : vector<8x78xf32>
    %501 = arith.addf %497, %500 : vector<8x78xf32>
    %c2_229 = arith.constant 2 : index
    %c3_230 = arith.constant 3 : index
    %502 = memref.load %arg5[%c2_229, %c3_230] : memref<5x5xf32, #tpu.memory_space<smem>>
    %503 = vector.broadcast %502 : f32 to vector<8x78xf32>
    %504 = arith.mulf %448, %503 : vector<8x78xf32>
    %505 = arith.addf %501, %504 : vector<8x78xf32>
    %c2_231 = arith.constant 2 : index
    %c4_232 = arith.constant 4 : index
    %506 = memref.load %arg5[%c2_231, %c4_232] : memref<5x5xf32, #tpu.memory_space<smem>>
    %507 = vector.broadcast %506 : f32 to vector<8x78xf32>
    %508 = arith.mulf %449, %507 : vector<8x78xf32>
    %509 = arith.addf %505, %508 : vector<8x78xf32>
    %510 = arith.mulf %440, %509 : vector<8x78xf32>
    %511 = arith.addf %490, %510 : vector<8x78xf32>
    %c3_233 = arith.constant 3 : index
    %c0_234 = arith.constant 0 : index
    %512 = memref.load %arg5[%c3_233, %c0_234] : memref<5x5xf32, #tpu.memory_space<smem>>
    %513 = vector.broadcast %512 : f32 to vector<8x78xf32>
    %514 = arith.mulf %445, %513 : vector<8x78xf32>
    %c3_235 = arith.constant 3 : index
    %c1_236 = arith.constant 1 : index
    %515 = memref.load %arg5[%c3_235, %c1_236] : memref<5x5xf32, #tpu.memory_space<smem>>
    %516 = vector.broadcast %515 : f32 to vector<8x78xf32>
    %517 = arith.mulf %446, %516 : vector<8x78xf32>
    %518 = arith.addf %514, %517 : vector<8x78xf32>
    %c3_237 = arith.constant 3 : index
    %c2_238 = arith.constant 2 : index
    %519 = memref.load %arg5[%c3_237, %c2_238] : memref<5x5xf32, #tpu.memory_space<smem>>
    %520 = vector.broadcast %519 : f32 to vector<8x78xf32>
    %521 = arith.mulf %447, %520 : vector<8x78xf32>
    %522 = arith.addf %518, %521 : vector<8x78xf32>
    %c3_239 = arith.constant 3 : index
    %c3_240 = arith.constant 3 : index
    %523 = memref.load %arg5[%c3_239, %c3_240] : memref<5x5xf32, #tpu.memory_space<smem>>
    %524 = vector.broadcast %523 : f32 to vector<8x78xf32>
    %525 = arith.mulf %448, %524 : vector<8x78xf32>
    %526 = arith.addf %522, %525 : vector<8x78xf32>
    %c3_241 = arith.constant 3 : index
    %c4_242 = arith.constant 4 : index
    %527 = memref.load %arg5[%c3_241, %c4_242] : memref<5x5xf32, #tpu.memory_space<smem>>
    %528 = vector.broadcast %527 : f32 to vector<8x78xf32>
    %529 = arith.mulf %449, %528 : vector<8x78xf32>
    %530 = arith.addf %526, %529 : vector<8x78xf32>
    %531 = arith.mulf %441, %530 : vector<8x78xf32>
    %532 = arith.addf %511, %531 : vector<8x78xf32>
    %c4_243 = arith.constant 4 : index
    %c0_244 = arith.constant 0 : index
    %533 = memref.load %arg5[%c4_243, %c0_244] : memref<5x5xf32, #tpu.memory_space<smem>>
    %534 = vector.broadcast %533 : f32 to vector<8x78xf32>
    %535 = arith.mulf %445, %534 : vector<8x78xf32>
    %c4_245 = arith.constant 4 : index
    %c1_246 = arith.constant 1 : index
    %536 = memref.load %arg5[%c4_245, %c1_246] : memref<5x5xf32, #tpu.memory_space<smem>>
    %537 = vector.broadcast %536 : f32 to vector<8x78xf32>
    %538 = arith.mulf %446, %537 : vector<8x78xf32>
    %539 = arith.addf %535, %538 : vector<8x78xf32>
    %c4_247 = arith.constant 4 : index
    %c2_248 = arith.constant 2 : index
    %540 = memref.load %arg5[%c4_247, %c2_248] : memref<5x5xf32, #tpu.memory_space<smem>>
    %541 = vector.broadcast %540 : f32 to vector<8x78xf32>
    %542 = arith.mulf %447, %541 : vector<8x78xf32>
    %543 = arith.addf %539, %542 : vector<8x78xf32>
    %c4_249 = arith.constant 4 : index
    %c3_250 = arith.constant 3 : index
    %544 = memref.load %arg5[%c4_249, %c3_250] : memref<5x5xf32, #tpu.memory_space<smem>>
    %545 = vector.broadcast %544 : f32 to vector<8x78xf32>
    %546 = arith.mulf %448, %545 : vector<8x78xf32>
    %547 = arith.addf %543, %546 : vector<8x78xf32>
    %c4_251 = arith.constant 4 : index
    %c4_252 = arith.constant 4 : index
    %548 = memref.load %arg5[%c4_251, %c4_252] : memref<5x5xf32, #tpu.memory_space<smem>>
    %549 = vector.broadcast %548 : f32 to vector<8x78xf32>
    %550 = arith.mulf %449, %549 : vector<8x78xf32>
    %551 = arith.addf %547, %550 : vector<8x78xf32>
    %552 = arith.mulf %442, %551 : vector<8x78xf32>
    %553 = arith.addf %532, %552 : vector<8x78xf32>
    %554 = vector.extract_strided_slice %553 {offsets = [0, 0], sizes = [8, 5], strides = [1, 1]} : vector<8x78xf32> to vector<8x5xf32>
    %cst_253 = arith.constant dense<0xFF800000> : vector<8xf32>
    %555 = vector.multi_reduction <maximumf>, %554, %cst_253 [1] : vector<8x5xf32> to vector<8xf32>
    %556 = vector.shape_cast %555 : vector<8xf32> to vector<8x1xf32>
    %557 = vector.extract_strided_slice %553 {offsets = [0, 5], sizes = [8, 9], strides = [1, 1]} : vector<8x78xf32> to vector<8x9xf32>
    %cst_254 = arith.constant dense<0xFF800000> : vector<8xf32>
    %558 = vector.multi_reduction <maximumf>, %557, %cst_254 [1] : vector<8x9xf32> to vector<8xf32>
    %559 = vector.shape_cast %558 : vector<8xf32> to vector<8x1xf32>
    %560 = vector.extract_strided_slice %553 {offsets = [0, 14], sizes = [8, 9], strides = [1, 1]} : vector<8x78xf32> to vector<8x9xf32>
    %cst_255 = arith.constant dense<0xFF800000> : vector<8xf32>
    %561 = vector.multi_reduction <maximumf>, %560, %cst_255 [1] : vector<8x9xf32> to vector<8xf32>
    %562 = vector.shape_cast %561 : vector<8xf32> to vector<8x1xf32>
    %563 = vector.extract_strided_slice %553 {offsets = [0, 23], sizes = [8, 25], strides = [1, 1]} : vector<8x78xf32> to vector<8x25xf32>
    %cst_256 = arith.constant dense<0xFF800000> : vector<8xf32>
    %564 = vector.multi_reduction <maximumf>, %563, %cst_256 [1] : vector<8x25xf32> to vector<8xf32>
    %565 = vector.shape_cast %564 : vector<8xf32> to vector<8x1xf32>
    %566 = vector.extract_strided_slice %553 {offsets = [0, 48], sizes = [8, 9], strides = [1, 1]} : vector<8x78xf32> to vector<8x9xf32>
    %cst_257 = arith.constant dense<0xFF800000> : vector<8xf32>
    %567 = vector.multi_reduction <maximumf>, %566, %cst_257 [1] : vector<8x9xf32> to vector<8xf32>
    %568 = vector.shape_cast %567 : vector<8xf32> to vector<8x1xf32>
    %569 = vector.extract_strided_slice %553 {offsets = [0, 57], sizes = [8, 9], strides = [1, 1]} : vector<8x78xf32> to vector<8x9xf32>
    %cst_258 = arith.constant dense<0xFF800000> : vector<8xf32>
    %570 = vector.multi_reduction <maximumf>, %569, %cst_258 [1] : vector<8x9xf32> to vector<8xf32>
    %571 = vector.shape_cast %570 : vector<8xf32> to vector<8x1xf32>
    %572 = vector.extract_strided_slice %553 {offsets = [0, 66], sizes = [8, 12], strides = [1, 1]} : vector<8x78xf32> to vector<8x12xf32>
    %cst_259 = arith.constant dense<0xFF800000> : vector<8xf32>
    %573 = vector.multi_reduction <maximumf>, %572, %cst_259 [1] : vector<8x12xf32> to vector<8xf32>
    %574 = vector.shape_cast %573 : vector<8xf32> to vector<8x1xf32>
    %575 = tpu.concatenate %556, %559, %562, %565, %568, %571, %574 in 1 : vector<8x1xf32>, vector<8x1xf32>, vector<8x1xf32>, vector<8x1xf32>, vector<8x1xf32>, vector<8x1xf32>, vector<8x1xf32> -> vector<8x7xf32>
    %cst_260 = arith.constant dense<0.000000e+00> : vector<8x78xf32>
    %576 = tpu.matmul %575, %434, %cst_260 {dimension_numbers = #tpu.dot_dimension_numbers<[1], [0], [0], [1], [0, 0, 1, 1], [], []>} : vector<8x7xf32>, vector<7x78xf32>, vector<8x78xf32> -> vector<8x78xf32>
    %577 = arith.subf %553, %576 : vector<8x78xf32>
    %578 = math.exp %577 : vector<8x78xf32>
    %cst_261 = arith.constant dense<0.000000e+00> : vector<8x7xf32>
    %579 = tpu.matmul %578, %433, %cst_261 {dimension_numbers = #tpu.dot_dimension_numbers<[1], [0], [0], [1], [0, 0, 1, 1], [], []>} : vector<8x78xf32>, vector<78x7xf32>, vector<8x7xf32> -> vector<8x7xf32>
    %580 = tpu.reciprocal %579 {approx = true} : vector<8x7xf32> -> vector<8x7xf32>
    %cst_262 = arith.constant dense<0.000000e+00> : vector<8x78xf32>
    %581 = tpu.matmul %580, %434, %cst_262 {dimension_numbers = #tpu.dot_dimension_numbers<[1], [0], [0], [1], [0, 0, 1, 1], [], []>} : vector<8x7xf32>, vector<7x78xf32>, vector<8x78xf32> -> vector<8x78xf32>
    %582 = arith.mulf %578, %581 : vector<8x78xf32>
    %583 = arith.mulf %438, %582 : vector<8x78xf32>
    %584 = arith.mulf %439, %582 : vector<8x78xf32>
    %585 = arith.mulf %440, %582 : vector<8x78xf32>
    %586 = arith.mulf %441, %582 : vector<8x78xf32>
    %587 = arith.mulf %442, %582 : vector<8x78xf32>
    %588 = tpu.concatenate %583, %584, %585, %586, %587 in 0 : vector<8x78xf32>, vector<8x78xf32>, vector<8x78xf32>, vector<8x78xf32>, vector<8x78xf32> -> vector<40x78xf32>
    %cst_263 = arith.constant dense<0.000000e+00> : vector<40x7xf32>
    %589 = tpu.matmul %588, %433, %cst_263 {dimension_numbers = #tpu.dot_dimension_numbers<[1], [0], [0], [1], [0, 0, 1, 1], [], []>} : vector<40x78xf32>, vector<78x7xf32>, vector<40x7xf32> -> vector<40x7xf32>
    %590 = vector.extract_strided_slice %589 {offsets = [0, 0], sizes = [8, 7], strides = [1, 1]} : vector<40x7xf32> to vector<8x7xf32>
    %591 = vector.extract_strided_slice %589 {offsets = [8, 0], sizes = [8, 7], strides = [1, 1]} : vector<40x7xf32> to vector<8x7xf32>
    %592 = vector.extract_strided_slice %589 {offsets = [16, 0], sizes = [8, 7], strides = [1, 1]} : vector<40x7xf32> to vector<8x7xf32>
    %593 = vector.extract_strided_slice %589 {offsets = [24, 0], sizes = [8, 7], strides = [1, 1]} : vector<40x7xf32> to vector<8x7xf32>
    %594 = vector.extract_strided_slice %589 {offsets = [32, 0], sizes = [8, 7], strides = [1, 1]} : vector<40x7xf32> to vector<8x7xf32>
    %595 = tpu.concatenate %40, %62, %84, %106, %128, %230, %233, %236, %239, %242, %428, %429, %430, %431, %432, %590 in 1 : vector<8x62xf32>, vector<8x62xf32>, vector<8x62xf32>, vector<8x62xf32>, vector<8x62xf32>, vector<8x62xf32>, vector<8x62xf32>, vector<8x62xf32>, vector<8x62xf32>, vector<8x62xf32>, vector<8x16xf32>, vector<8x16xf32>, vector<8x16xf32>, vector<8x16xf32>, vector<8x16xf32>, vector<8x7xf32> -> vector<8x707xf32>
    %596 = tpu.concatenate %591, %592, %593, %594 in 1 : vector<8x7xf32>, vector<8x7xf32>, vector<8x7xf32>, vector<8x7xf32> -> vector<8x28xf32>
    %597 = tpu.concatenate %595, %596 in 1 : vector<8x707xf32>, vector<8x28xf32> -> vector<8x735xf32>
    %c0_264 = arith.constant 0 : index
    %c0_265 = arith.constant 0 : index
    %598 = vector.load %arg17[%c0_264, %c0_265] : memref<735x256xbf16, #tpu.memory_space<vmem>>, vector<735x256xbf16>
    %599 = arith.truncf %597 : vector<8x735xf32> to vector<8x735xbf16>
    %cst_266 = arith.constant dense<0.000000e+00> : vector<8x256xf32>
    %600 = tpu.matmul %599, %598, %cst_266 {dimension_numbers = #tpu.dot_dimension_numbers<[1], [0], [0], [1], [0, 0, 1, 1], [], []>} : vector<8x735xbf16>, vector<735x256xbf16>, vector<8x256xf32> -> vector<8x256xf32>
    %c0_267 = arith.constant 0 : index
    %c0_268 = arith.constant 0 : index
    %601 = vector.load %arg18[%c0_267, %c0_268] : memref<1x256xf32, #tpu.memory_space<vmem>>, vector<1x256xf32>
    %602 = vector.broadcast %601 : vector<1x256xf32> to vector<8x256xf32>
    %603 = arith.addf %600, %602 : vector<8x256xf32>
    %cst_269 = arith.constant 0.000000e+00 : f32
    %604 = vector.broadcast %cst_269 : f32 to vector<8x256xf32>
    %605 = arith.cmpf oge, %603, %604 : vector<8x256xf32>
    %cst_270 = arith.constant 0.00999999977 : f32
    %606 = vector.broadcast %cst_270 : f32 to vector<8x256xf32>
    %607 = arith.mulf %606, %603 : vector<8x256xf32>
    %608 = arith.select %605, %603, %607 : vector<8x256xi1>, vector<8x256xf32>
    %c0_271 = arith.constant 0 : index
    %c0_272 = arith.constant 0 : index
    %609 = vector.load %arg19[%c0_271, %c0_272] : memref<256x128xbf16, #tpu.memory_space<vmem>>, vector<256x128xbf16>
    %610 = arith.truncf %608 : vector<8x256xf32> to vector<8x256xbf16>
    %cst_273 = arith.constant dense<0.000000e+00> : vector<8x128xf32>
    %611 = tpu.matmul %610, %609, %cst_273 {dimension_numbers = #tpu.dot_dimension_numbers<[1], [0], [0], [1], [0, 0, 1, 1], [], []>} : vector<8x256xbf16>, vector<256x128xbf16>, vector<8x128xf32> -> vector<8x128xf32>
    %c0_274 = arith.constant 0 : index
    %c0_275 = arith.constant 0 : index
    %612 = vector.load %arg20[%c0_274, %c0_275] : memref<1x128xf32, #tpu.memory_space<vmem>>, vector<1x128xf32>
    %613 = vector.broadcast %612 : vector<1x128xf32> to vector<8x128xf32>
    %614 = arith.addf %611, %613 : vector<8x128xf32>
    %cst_276 = arith.constant 0.000000e+00 : f32
    %615 = vector.broadcast %cst_276 : f32 to vector<8x128xf32>
    %616 = arith.cmpf oge, %614, %615 : vector<8x128xf32>
    %cst_277 = arith.constant 0.00999999977 : f32
    %617 = vector.broadcast %cst_277 : f32 to vector<8x128xf32>
    %618 = arith.mulf %617, %614 : vector<8x128xf32>
    %619 = arith.select %616, %614, %618 : vector<8x128xi1>, vector<8x128xf32>
    %c0_278 = arith.constant 0 : index
    %c0_279 = arith.constant 0 : index
    %620 = vector.load %arg21[%c0_278, %c0_279] : memref<128x64xbf16, #tpu.memory_space<vmem>>, vector<128x64xbf16>
    %621 = arith.truncf %619 : vector<8x128xf32> to vector<8x128xbf16>
    %cst_280 = arith.constant dense<0.000000e+00> : vector<8x64xf32>
    %622 = tpu.matmul %621, %620, %cst_280 {dimension_numbers = #tpu.dot_dimension_numbers<[1], [0], [0], [1], [0, 0, 1, 1], [], []>} : vector<8x128xbf16>, vector<128x64xbf16>, vector<8x64xf32> -> vector<8x64xf32>
    %c0_281 = arith.constant 0 : index
    %c0_282 = arith.constant 0 : index
    %623 = vector.load %arg22[%c0_281, %c0_282] : memref<1x64xf32, #tpu.memory_space<vmem>>, vector<1x64xf32>
    %624 = vector.broadcast %623 : vector<1x64xf32> to vector<8x64xf32>
    %625 = arith.addf %622, %624 : vector<8x64xf32>
    %cst_283 = arith.constant 0.000000e+00 : f32
    %626 = vector.broadcast %cst_283 : f32 to vector<8x64xf32>
    %627 = arith.cmpf oge, %625, %626 : vector<8x64xf32>
    %cst_284 = arith.constant 0.00999999977 : f32
    %628 = vector.broadcast %cst_284 : f32 to vector<8x64xf32>
    %629 = arith.mulf %628, %625 : vector<8x64xf32>
    %630 = arith.select %627, %625, %629 : vector<8x64xi1>, vector<8x64xf32>
    %c0_285 = arith.constant 0 : index
    %c0_286 = arith.constant 0 : index
    %631 = vector.load %arg23[%c0_285, %c0_286] : memref<64x96xbf16, #tpu.memory_space<vmem>>, vector<64x96xbf16>
    %632 = arith.truncf %630 : vector<8x64xf32> to vector<8x64xbf16>
    %cst_287 = arith.constant dense<0.000000e+00> : vector<8x96xf32>
    %633 = tpu.matmul %632, %631, %cst_287 {dimension_numbers = #tpu.dot_dimension_numbers<[1], [0], [0], [1], [0, 0, 1, 1], [], []>} : vector<8x64xbf16>, vector<64x96xbf16>, vector<8x96xf32> -> vector<8x96xf32>
    %c0_288 = arith.constant 0 : index
    %c0_289 = arith.constant 0 : index
    %634 = vector.load %arg24[%c0_288, %c0_289] : memref<1x96xf32, #tpu.memory_space<vmem>>, vector<1x96xf32>
    %635 = vector.broadcast %634 : vector<1x96xf32> to vector<8x96xf32>
    %636 = arith.addf %633, %635 : vector<8x96xf32>
    %cst_290 = arith.constant 0.000000e+00 : f32
    %637 = vector.broadcast %cst_290 : f32 to vector<8x96xf32>
    %638 = arith.maximumf %636, %637 : vector<8x96xf32>
    %c0_291 = arith.constant 0 : index
    %c0_292 = arith.constant 0 : index
    %639 = vector.load %arg25[%c0_291, %c0_292] : memref<96x128xbf16, #tpu.memory_space<vmem>>, vector<96x128xbf16>
    %640 = arith.truncf %638 : vector<8x96xf32> to vector<8x96xbf16>
    %cst_293 = arith.constant dense<0.000000e+00> : vector<8x128xf32>
    %641 = tpu.matmul %640, %639, %cst_293 {dimension_numbers = #tpu.dot_dimension_numbers<[1], [0], [0], [1], [0, 0, 1, 1], [], []>} : vector<8x96xbf16>, vector<96x128xbf16>, vector<8x128xf32> -> vector<8x128xf32>
    %c0_294 = arith.constant 0 : index
    %c0_295 = arith.constant 0 : index
    %642 = vector.load %arg26[%c0_294, %c0_295] : memref<1x128xf32, #tpu.memory_space<vmem>>, vector<1x128xf32>
    %643 = vector.broadcast %642 : vector<1x128xf32> to vector<8x128xf32>
    %644 = arith.addf %641, %643 : vector<8x128xf32>
    %c0_296 = arith.constant 0 : index
    %c0_297 = arith.constant 0 : index
    %645 = vector.load %arg27[%c0_296, %c0_297] : memref<8x128xf32, #tpu.memory_space<vmem>>, vector<8x128xf32>
    tpu.vector_store %arg27[%c0_296, %c0_297], %644 {strides = array<i32>} : memref<8x128xf32, #tpu.memory_space<vmem>>, vector<8x128xf32>,
    return
  }
  func.func @transform_0(%arg0: i32) -> (i32, i32, i32) {
    %c0_i32 = arith.constant 0 : i32
    %c0_i32_0 = arith.constant 0 : i32
    %c0_i32_1 = arith.constant 0 : i32
    return %c0_i32, %arg0, %c0_i32_0 : i32, i32, i32
  }
  func.func @transform_1(%arg0: i32) -> (i32, i32) {
    %c0_i32 = arith.constant 0 : i32
    %c0_i32_0 = arith.constant 0 : i32
    %c0_i32_1 = arith.constant 0 : i32
    return %c0_i32, %c0_i32_0 : i32, i32
  }
  func.func @transform_2(%arg0: i32) -> i32 {
    %c0_i32 = arith.constant 0 : i32
    %c0_i32_0 = arith.constant 0 : i32
    return %c0_i32 : i32
  }
  func.func @transform_3(%arg0: i32) -> (i32, i32) {
    %c0_i32 = arith.constant 0 : i32
    %c0_i32_0 = arith.constant 0 : i32
    %c0_i32_1 = arith.constant 0 : i32
    return %c0_i32, %c0_i32_0 : i32, i32
  }
  func.func @transform_4(%arg0: i32) -> (i32, i32) {
    %c0_i32 = arith.constant 0 : i32
    %c0_i32_0 = arith.constant 0 : i32
    %c0_i32_1 = arith.constant 0 : i32
    return %c0_i32, %c0_i32_0 : i32, i32
  }
  func.func @transform_5(%arg0: i32) -> (i32, i32) {
    %c0_i32 = arith.constant 0 : i32
    %c0_i32_0 = arith.constant 0 : i32
    %c0_i32_1 = arith.constant 0 : i32
    return %c0_i32, %c0_i32_0 : i32, i32
  }
  func.func @transform_6(%arg0: i32) -> (i32, i32) {
    %c0_i32 = arith.constant 0 : i32
    %c0_i32_0 = arith.constant 0 : i32
    %c0_i32_1 = arith.constant 0 : i32
    return %c0_i32, %c0_i32_0 : i32, i32
  }
  func.func @transform_7(%arg0: i32) -> (i32, i32) {
    %c0_i32 = arith.constant 0 : i32
    %c0_i32_0 = arith.constant 0 : i32
    %c0_i32_1 = arith.constant 0 : i32
    return %c0_i32, %c0_i32_0 : i32, i32
  }
  func.func @transform_8(%arg0: i32) -> (i32, i32) {
    %c0_i32 = arith.constant 0 : i32
    %c0_i32_0 = arith.constant 0 : i32
    %c0_i32_1 = arith.constant 0 : i32
    return %c0_i32, %c0_i32_0 : i32, i32
  }
  func.func @transform_9(%arg0: i32) -> (i32, i32) {
    %c0_i32 = arith.constant 0 : i32
    %c0_i32_0 = arith.constant 0 : i32
    %c0_i32_1 = arith.constant 0 : i32
    return %c0_i32, %c0_i32_0 : i32, i32
  }
  func.func @transform_10(%arg0: i32) -> (i32, i32) {
    %c0_i32 = arith.constant 0 : i32
    %c0_i32_0 = arith.constant 0 : i32
    %c0_i32_1 = arith.constant 0 : i32
    return %c0_i32, %c0_i32_0 : i32, i32
  }
  func.func @transform_11(%arg0: i32) -> (i32, i32) {
    %c0_i32 = arith.constant 0 : i32
    %c0_i32_0 = arith.constant 0 : i32
    %c0_i32_1 = arith.constant 0 : i32
    return %c0_i32, %c0_i32_0 : i32, i32
  }
  func.func @transform_12(%arg0: i32) -> (i32, i32) {
    %c0_i32 = arith.constant 0 : i32
    %c0_i32_0 = arith.constant 0 : i32
    %c0_i32_1 = arith.constant 0 : i32
    return %c0_i32, %c0_i32_0 : i32, i32
  }
  func.func @transform_13(%arg0: i32) -> (i32, i32) {
    %c0_i32 = arith.constant 0 : i32
    %c0_i32_0 = arith.constant 0 : i32
    %c0_i32_1 = arith.constant 0 : i32
    return %c0_i32, %c0_i32_0 : i32, i32
  }
  func.func @transform_14(%arg0: i32) -> (i32, i32) {
    %c0_i32 = arith.constant 0 : i32
    %c0_i32_0 = arith.constant 0 : i32
    %c0_i32_1 = arith.constant 0 : i32
    return %c0_i32, %c0_i32_0 : i32, i32
  }
  func.func @transform_15(%arg0: i32) -> (i32, i32) {
    %c0_i32 = arith.constant 0 : i32
    %c0_i32_0 = arith.constant 0 : i32
    %c0_i32_1 = arith.constant 0 : i32
    return %c0_i32, %c0_i32_0 : i32, i32
  }
  func.func @transform_16(%arg0: i32) -> (i32, i32) {
    %c0_i32 = arith.constant 0 : i32
    %c0_i32_0 = arith.constant 0 : i32
    %c0_i32_1 = arith.constant 0 : i32
    return %c0_i32, %c0_i32_0 : i32, i32
  }
  func.func @transform_17(%arg0: i32) -> (i32, i32) {
    %c0_i32 = arith.constant 0 : i32
    %c0_i32_0 = arith.constant 0 : i32
    %c0_i32_1 = arith.constant 0 : i32
    return %c0_i32, %c0_i32_0 : i32, i32
  }
  func.func @transform_18(%arg0: i32) -> (i32, i32) {
    %c0_i32 = arith.constant 0 : i32
    %c0_i32_0 = arith.constant 0 : i32
    %c0_i32_1 = arith.constant 0 : i32
    return %c0_i32, %c0_i32_0 : i32, i32
  }
  func.func @transform_19(%arg0: i32) -> (i32, i32) {
    %c0_i32 = arith.constant 0 : i32
    %c0_i32_0 = arith.constant 0 : i32
    %c0_i32_1 = arith.constant 0 : i32
    return %c0_i32, %c0_i32_0 : i32, i32
  }
  func.func @transform_20(%arg0: i32) -> (i32, i32) {
    %c0_i32 = arith.constant 0 : i32
    %c0_i32_0 = arith.constant 0 : i32
    %c0_i32_1 = arith.constant 0 : i32
    return %c0_i32, %c0_i32_0 : i32, i32
  }
  func.func @transform_21(%arg0: i32) -> (i32, i32) {
    %c0_i32 = arith.constant 0 : i32
    %c0_i32_0 = arith.constant 0 : i32
    %c0_i32_1 = arith.constant 0 : i32
    return %c0_i32, %c0_i32_0 : i32, i32
  }
  func.func @transform_22(%arg0: i32) -> (i32, i32) {
    %c0_i32 = arith.constant 0 : i32
    %c0_i32_0 = arith.constant 0 : i32
    %c0_i32_1 = arith.constant 0 : i32
    return %c0_i32, %c0_i32_0 : i32, i32
  }
  func.func @transform_23(%arg0: i32) -> (i32, i32) {
    %c0_i32 = arith.constant 0 : i32
    %c0_i32_0 = arith.constant 0 : i32
    %c0_i32_1 = arith.constant 0 : i32
    return %c0_i32, %c0_i32_0 : i32, i32
  }
  func.func @transform_24(%arg0: i32) -> (i32, i32) {
    %c0_i32 = arith.constant 0 : i32
    %c0_i32_0 = arith.constant 0 : i32
    %c0_i32_1 = arith.constant 0 : i32
    return %c0_i32, %c0_i32_0 : i32, i32
  }
  func.func @transform_25(%arg0: i32) -> (i32, i32) {
    %c0_i32 = arith.constant 0 : i32
    %c0_i32_0 = arith.constant 0 : i32
    %c0_i32_1 = arith.constant 0 : i32
    return %c0_i32, %c0_i32_0 : i32, i32
  }
  func.func @transform_26(%arg0: i32) -> (i32, i32) {
    %c0_i32 = arith.constant 0 : i32
    %c0_i32_0 = arith.constant 0 : i32
    return %arg0, %c0_i32 : i32, i32
  }
}

</mosaic_0001>

<llo_original>
// kernel: vagmsda_forward.1
$region0: #{vagmsda_forward.1}
  #allocation0 [shape = 'u32[]', space=smem, size = 0x4, offset = 0x4, fixed_abs, tag = 'smem constant byte address 0x4 - core index']
  #allocation1 [shape = 'u32[144,128]{1,0:T(1,128)}', space=vmem, size = 0x12000, scoped, tag = 'internal scratch']
  %s0 = inlined_call_operand.vmem [shape: f32[5,16,62], index: 0, kind: input, shape index: {}]
  %s1 = inlined_call_operand.vmem [shape: f32[5,5], index: 1, kind: input, shape index: {}]
  %s2 = inlined_call_operand.vmem [shape: f32[5], index: 2, kind: input, shape index: {}]
  %s3 = inlined_call_operand.hbm [shape: f32[5,5], index: 3, kind: input, shape index: {}]
  %s4 = inlined_call_operand.hbm [shape: f32[5,5], index: 4, kind: input, shape index: {}]
  %s5 = inlined_call_operand.hbm [shape: bf16[62,62], index: 5, kind: input, shape index: {}]
  %s6 = inlined_call_operand.hbm [shape: f32[5,32], index: 6, kind: input, shape index: {}]
  %s7 = inlined_call_operand.vmem [shape: f32[32,5], index: 7, kind: input, shape index: {}]
  %s8 = inlined_call_operand.vmem [shape: f32[62,32], index: 8, kind: input, shape index: {}]
  %s9 = inlined_call_operand.hbm [shape: f32[32,62], index: 9, kind: input, shape index: {}]
  %s10 = inlined_call_operand.hbm [shape: bf16[62,73], index: 10, kind: input, shape index: {}]
  %s11 = inlined_call_operand.vmem [shape: f32[73,16], index: 11, kind: input, shape index: {}]
  %s12 = inlined_call_operand.vmem [shape: f32[16,73], index: 12, kind: input, shape index: {}]
  %s13 = inlined_call_operand.hbm [shape: bf16[62,78], index: 13, kind: input, shape index: {}]
  %s14 = inlined_call_operand.vmem [shape: f32[78,7], index: 14, kind: input, shape index: {}]
  %s15 = inlined_call_operand.hbm [shape: f32[7,78], index: 15, kind: input, shape index: {}]
  %s16 = inlined_call_operand.vmem [shape: bf16[735,256], index: 16, kind: input, shape index: {}]
  %s17 = inlined_call_operand.vmem [shape: f32[1,256], index: 17, kind: input, shape index: {}]
  %s18 = inlined_call_operand.hbm [shape: bf16[256,128], index: 18, kind: input, shape index: {}]
  %s19 = inlined_call_operand.vmem [shape: f32[1,128], index: 19, kind: input, shape index: {}]
  %s20 = inlined_call_operand.vmem [shape: bf16[128,64], index: 20, kind: input, shape index: {}]
  %s21 = inlined_call_operand.vmem [shape: f32[1,64], index: 21, kind: input, shape index: {}]
  %s22 = inlined_call_operand.hbm [shape: bf16[64,96], index: 22, kind: input, shape index: {}]
  %s23 = inlined_call_operand.hbm [shape: f32[1,96], index: 23, kind: input, shape index: {}]
  %s24 = inlined_call_operand.vmem [shape: bf16[96,128], index: 24, kind: input, shape index: {}]
  %s25 = inlined_call_operand.vmem [shape: f32[1,128], index: 25, kind: input, shape index: {}]
  %s26 = inlined_call_operand.vmem [shape: f32[16,128], index: 26, kind: output, shape index: {}]
  %s27 = sld [smem:[#allocation0]]
  $region227: #{vagmsda_forward.1} parent=0
    _
  %s29 = ssub.s32 1, %s27
  %s30 = scalar_select 0, %s29, %s27
  $region1: #{vagmsda_forward.1} parent=0
    #allocation2 [shape = 'u8[40960]{0}', space=vmem, size = 0xa000, scoped, tag = 'input window, operand 0']
    #allocation3 [shape = 'u8[4096]{0}', space=smem, size = 0x1000, scoped, tag = 'input window, operand 1, single buffered']
    #allocation4 [shape = 's32[2]{0}', space=sflag, size = 0x8, scoped, tag = 'scoped memory for vagmsda_forward.1']
    #allocation5 [shape = 's32[2]{0}', space=sflag, size = 0x8, scoped, tag = 'scoped memory for vagmsda_forward.1']
    #allocation6 [shape = 's32[2]{0}', space=sflag, size = 0x8, scoped, tag = 'scoped memory for vagmsda_forward.1']
    #allocation7 [shape = 'u8[512]{0}', space=smem, size = 0x200, scoped, tag = 'input window, operand 2, single buffered']
    #allocation8 [shape = 's32[1]{0}', space=sflag, size = 0x4, scoped, tag = 'scoped memory for vagmsda_forward.1']
    #allocation9 [shape = 'u8[4096]{0}', space=smem, size = 0x1000, scoped, tag = 'input window, operand 3, single buffered']
    #allocation10 [shape = 'u8[4096]{0}', space=smem, size = 0x1000, scoped, tag = 'input window, operand 4, single buffered']
    #allocation11 [shape = 's32[1]{0}', space=sflag, size = 0x4, scoped, tag = 'scoped memory for vagmsda_forward.1']
    #allocation12 [shape = 'u8[16384]{0}', space=vmem, size = 0x4000, scoped, tag = 'input window, operand 5, single buffered']
    #allocation13 [shape = 'u8[4096]{0}', space=vmem, size = 0x1000, scoped, tag = 'input window, operand 6, single buffered']
    #allocation14 [shape = 's32[1]{0}', space=sflag, size = 0x4, scoped, tag = 'scoped memory for vagmsda_forward.1']
    #allocation15 [shape = 'u8[16384]{0}', space=vmem, size = 0x4000, scoped, tag = 'input window, operand 9, single buffered']
    #allocation16 [shape = 'u8[16384]{0}', space=vmem, size = 0x4000, scoped, tag = 'input window, operand 10, single buffered']
    #allocation17 [shape = 's32[1]{0}', space=sflag, size = 0x4, scoped, tag = 'scoped memory for vagmsda_forward.1']
    #allocation18 [shape = 'u8[16384]{0}', space=vmem, size = 0x4000, scoped, tag = 'input window, operand 13, single buffered']
    #allocation19 [shape = 'u8[4096]{0}', space=vmem, size = 0x1000, scoped, tag = 'input window, operand 15, single buffered']
    #allocation20 [shape = 's32[1]{0}', space=sflag, size = 0x4, scoped, tag = 'scoped memory for vagmsda_forward.1']
    #allocation21 [shape = 'u8[65536]{0}', space=vmem, size = 0x10000, scoped, tag = 'input window, operand 18, single buffered']
    #allocation22 [shape = 'u8[16384]{0}', space=vmem, size = 0x4000, scoped, tag = 'input window, operand 22, single buffered']
    #allocation23 [shape = 's32[1]{0}', space=sflag, size = 0x4, scoped, tag = 'scoped memory for vagmsda_forward.1']
    #allocation24 [shape = 'u8[512]{0}', space=vmem, size = 0x400, scoped, tag = 'input window, operand 23, single buffered']
    %31 = vsyncpa [#allocation6], 0
    %32 = vsyncpa [#allocation8], 0
    %33 = vsyncpa [#allocation5], 0
    %34 = vsyncpa [#allocation11], 0
    %35 = vsyncpa [#allocation4], 0
    %36 = vsyncpa [#allocation14], 0
    %37 = vsyncpa [#allocation17], 0
    %38 = vsyncpa [#allocation20], 0
    %39 = vsyncpa [#allocation23], 0
    loop: start=0, step=1, limit=4
    $region2: #{vagmsda_forward.1} parent=1 // loop_pre_header
      _
    $region3: #{vagmsda_forward.1} parent=1 // loop_header
      %s41 = sphi 0, %s45
      %p42 = scmp.ge.s32.totalorder %s41, 4
      %s51 = sphi 0, %s53
      %s54 = sphi 0, %s51
      %s55 = sphi 0, %s54
      %s71 = sphi 0, %s55
      %s75 = sphi 0, %s75
      %s77 = sphi 0, %s75
      %s78 = sphi 0, %s77
      %s92 = sphi 0, %s78
      %s96 = sphi 0, %s96
      %s98 = sphi 0, %s96
      %s99 = sphi 0, %s98
      %s113 = sphi 0, %s99
      %s117 = sphi 0, %s117
      %s119 = sphi 0, %s117
      %s120 = sphi 0, %s119
      %s134 = sphi 0, %s120
      %s138 = sphi 0, %s138
      %s140 = sphi 0, %s138
      %s141 = sphi 0, %s140
      %s155 = sphi 0, %s141
      %s159 = sphi 0, %s159
      %s161 = sphi 0, %s159
      %s162 = sphi 0, %s161
      %s176 = sphi 0, %s162
      %s180 = sphi 0, %s180
      %s182 = sphi 0, %s180
      %s183 = sphi 0, %s182
      %s197 = sphi 0, %s183
      %s201 = sphi 0, %s201
      %s203 = sphi 0, %s201
      %s204 = sphi 0, %s203
      %s218 = sphi 0, %s204
      %s222 = sphi 0, %s222
      %s224 = sphi 0, %s222
      %s225 = sphi 0, %s224
      %s239 = sphi 0, %s225
      %s243 = sphi 0, %s243
      %s245 = sphi 0, %s243
      %s246 = sphi 0, %s245
      %s260 = sphi 0, %s246
      %s264 = sphi 0, %s264
      %s266 = sphi 0, %s264
      %s267 = sphi 0, %s266
      %s281 = sphi 0, %s267
      %s285 = sphi 0, %s285
      %s287 = sphi 0, %s285
      %s288 = sphi 0, %s287
      %s302 = sphi 0, %s288
      %s306 = sphi 0, %s306
      %s308 = sphi 0, %s306
      %s309 = sphi 0, %s308
      %s323 = sphi 0, %s309
      %s327 = sphi 0, %s327
      %s329 = sphi 0, %s327
      %s330 = sphi 0, %s329
      %s344 = sphi 0, %s330
      %s348 = sphi 0, %s348
      %s350 = sphi 0, %s348
      %s351 = sphi 0, %s350
      %s365 = sphi 0, %s351
      %s369 = sphi 0, %s369
      %s371 = sphi 0, %s369
      %s372 = sphi 0, %s371
      %s386 = sphi 0, %s372
      %s390 = sphi 0, %s390
      %s392 = sphi 0, %s390
      %s393 = sphi 0, %s392
      %s407 = sphi 0, %s393
      %s411 = sphi 0, %s411
      %s413 = sphi 0, %s411
      %s414 = sphi 0, %s413
      %s428 = sphi 0, %s414
      %s432 = sphi 0, %s432
      %s434 = sphi 0, %s432
      %s435 = sphi 0, %s434
      %s449 = sphi 0, %s435
      %s453 = sphi 0, %s453
      %s455 = sphi 0, %s453
      %s456 = sphi 0, %s455
      %s470 = sphi 0, %s456
      %s474 = sphi 0, %s474
      %s476 = sphi 0, %s474
      %s477 = sphi 0, %s476
      %s491 = sphi 0, %s477
      %s495 = sphi 0, %s495
      %s497 = sphi 0, %s495
      %s498 = sphi 0, %s497
      %s512 = sphi 0, %s498
      %s516 = sphi 0, %s516
      %s518 = sphi 0, %s516
      %s519 = sphi 0, %s518
      %s533 = sphi 0, %s519
      %s537 = sphi 0, %s537
      %s539 = sphi 0, %s537
      %s540 = sphi 0, %s539
      %s554 = sphi 0, %s540
      %s558 = sphi 0, %s558
      %s560 = sphi 0, %s558
      %s561 = sphi 0, %s560
      %s575 = sphi 0, %s561
      %s579 = sphi 0, %s579
      %s581 = sphi 0, %s579
      %s582 = sphi 0, %s581
      %s596 = sphi 0, %s582
      %s602 = sphi 0, %s604
      %s605 = sphi 0, %s602
      %s606 = sphi 0, %s605
      %s622 = sphi 0, %s606
    $region4: #{vagmsda_forward.1} parent=1 // loop_header_branch
      %44 = sbr.rel (%p42) target = $region8
    $region5: #{vagmsda_forward.1} parent=1 // loop_body
      %s46 = ssub.s32 %s41, 1
      %s47 = ssub.s32 %s41, 2
      %s48 = sadd.s32 %s41, 1
      %s49 = ssub.s32 %s41, %s48
      %p50 = scmp.eq.s32.totalorder %s49, 0
      %s52 = sadd.s32 %s51, 1
      %s53 = scalar_select %p50, %s51, %s52
      %p56 = pneg %p50
      %p57 = scmp.eq.s32.totalorder %s41, 1
      %p58 = por %p56, %p57
      %p59 = scmp.ne.s32.totalorder %s51, %s54
      %p60 = scmp.eq.s32.totalorder %s41, 0
      %p61 = por %p59, %p60
      %p62 = scmp.ne.s32.totalorder %s51, %s54
      %p63 = scmp.eq.s32.totalorder %s46, 1
      %p64 = por %p62, %p63
      %p65 = scmp.ne.s32.totalorder %s54, %s55
      %p66 = scmp.eq.s32.totalorder %s46, 0
      %p67 = por %p65, %p66
      %p68 = scmp.ne.s32.totalorder %s54, %s55
      %p69 = scmp.eq.s32.totalorder %s47, 1
      %p70 = por %p68, %p69
      %p72 = scmp.ne.s32.totalorder %s55, %s71
      %p73 = scmp.eq.s32.totalorder %s47, 0
      %p74 = por %p72, %p73
      %s76 = sadd.s32 %s75, 1
      %p79 = scmp.eq.s32.totalorder %s41, 1
      %p80 = scmp.ne.s32.totalorder %s75, %s77
      %p81 = scmp.eq.s32.totalorder %s41, 0
      %p82 = por %p80, %p81
      %p83 = scmp.ne.s32.totalorder %s75, %s77
      %p84 = scmp.eq.s32.totalorder %s46, 1
      %p85 = por %p83, %p84
      %p86 = scmp.ne.s32.totalorder %s77, %s78
      %p87 = scmp.eq.s32.totalorder %s46, 0
      %p88 = por %p86, %p87
      %p89 = scmp.ne.s32.totalorder %s77, %s78
      %p90 = scmp.eq.s32.totalorder %s47, 1
      %p91 = por %p89, %p90
      %p93 = scmp.ne.s32.totalorder %s78, %s92
      %p94 = scmp.eq.s32.totalorder %s47, 0
      %p95 = por %p93, %p94
      %s97 = sadd.s32 %s96, 1
      %p100 = scmp.eq.s32.totalorder %s41, 1
      %p101 = scmp.ne.s32.totalorder %s96, %s98
      %p102 = scmp.eq.s32.totalorder %s41, 0
      %p103 = por %p101, %p102
      %p104 = scmp.ne.s32.totalorder %s96, %s98
      %p105 = scmp.eq.s32.totalorder %s46, 1
      %p106 = por %p104, %p105
      %p107 = scmp.ne.s32.totalorder %s98, %s99
      %p108 = scmp.eq.s32.totalorder %s46, 0
      %p109 = por %p107, %p108
      %p110 = scmp.ne.s32.totalorder %s98, %s99
      %p111 = scmp.eq.s32.totalorder %s47, 1
      %p112 = por %p110, %p111
      %p114 = scmp.ne.s32.totalorder %s99, %s113
      %p115 = scmp.eq.s32.totalorder %s47, 0
      %p116 = por %p114, %p115
      %s118 = sadd.s32 %s117, 1
      %p121 = scmp.eq.s32.totalorder %s41, 1
      %p122 = scmp.ne.s32.totalorder %s117, %s119
      %p123 = scmp.eq.s32.totalorder %s41, 0
      %p124 = por %p122, %p123
      %p125 = scmp.ne.s32.totalorder %s117, %s119
      %p126 = scmp.eq.s32.totalorder %s46, 1
      %p127 = por %p125, %p126
      %p128 = scmp.ne.s32.totalorder %s119, %s120
      %p129 = scmp.eq.s32.totalorder %s46, 0
      %p130 = por %p128, %p129
      %p131 = scmp.ne.s32.totalorder %s119, %s120
      %p132 = scmp.eq.s32.totalorder %s47, 1
      %p133 = por %p131, %p132
      %p135 = scmp.ne.s32.totalorder %s120, %s134
      %p136 = scmp.eq.s32.totalorder %s47, 0
      %p137 = por %p135, %p136
      %s139 = sadd.s32 %s138, 1
      %p142 = scmp.eq.s32.totalorder %s41, 1
      %p143 = scmp.ne.s32.totalorder %s138, %s140
      %p144 = scmp.eq.s32.totalorder %s41, 0
      %p145 = por %p143, %p144
      %p146 = scmp.ne.s32.totalorder %s138, %s140
      %p147 = scmp.eq.s32.totalorder %s46, 1
      %p148 = por %p146, %p147
      %p149 = scmp.ne.s32.totalorder %s140, %s141
      %p150 = scmp.eq.s32.totalorder %s46, 0
      %p151 = por %p149, %p150
      %p152 = scmp.ne.s32.totalorder %s140, %s141
      %p153 = scmp.eq.s32.totalorder %s47, 1
      %p154 = por %p152, %p153
      %p156 = scmp.ne.s32.totalorder %s141, %s155
      %p157 = scmp.eq.s32.totalorder %s47, 0
      %p158 = por %p156, %p157
      %s160 = sadd.s32 %s159, 1
      %p163 = scmp.eq.s32.totalorder %s41, 1
      %p164 = scmp.ne.s32.totalorder %s159, %s161
      %p165 = scmp.eq.s32.totalorder %s41, 0
      %p166 = por %p164, %p165
      %p167 = scmp.ne.s32.totalorder %s159, %s161
      %p168 = scmp.eq.s32.totalorder %s46, 1
      %p169 = por %p167, %p168
      %p170 = scmp.ne.s32.totalorder %s161, %s162
      %p171 = scmp.eq.s32.totalorder %s46, 0
      %p172 = por %p170, %p171
      %p173 = scmp.ne.s32.totalorder %s161, %s162
      %p174 = scmp.eq.s32.totalorder %s47, 1
      %p175 = por %p173, %p174
      %p177 = scmp.ne.s32.totalorder %s162, %s176
      %p178 = scmp.eq.s32.totalorder %s47, 0
      %p179 = por %p177, %p178
      %s181 = sadd.s32 %s180, 1
      %p184 = scmp.eq.s32.totalorder %s41, 1
      %p185 = scmp.ne.s32.totalorder %s180, %s182
      %p186 = scmp.eq.s32.totalorder %s41, 0
      %p187 = por %p185, %p186
      %p188 = scmp.ne.s32.totalorder %s180, %s182
      %p189 = scmp.eq.s32.totalorder %s46, 1
      %p190 = por %p188, %p189
      %p191 = scmp.ne.s32.totalorder %s182, %s183
      %p192 = scmp.eq.s32.totalorder %s46, 0
      %p193 = por %p191, %p192
      %p194 = scmp.ne.s32.totalorder %s182, %s183
      %p195 = scmp.eq.s32.totalorder %s47, 1
      %p196 = por %p194, %p195
      %p198 = scmp.ne.s32.totalorder %s183, %s197
      %p199 = scmp.eq.s32.totalorder %s47, 0
      %p200 = por %p198, %p199
      %s202 = sadd.s32 %s201, 1
      %p205 = scmp.eq.s32.totalorder %s41, 1
      %p206 = scmp.ne.s32.totalorder %s201, %s203
      %p207 = scmp.eq.s32.totalorder %s41, 0
      %p208 = por %p206, %p207
      %p209 = scmp.ne.s32.totalorder %s201, %s203
      %p210 = scmp.eq.s32.totalorder %s46, 1
      %p211 = por %p209, %p210
      %p212 = scmp.ne.s32.totalorder %s203, %s204
      %p213 = scmp.eq.s32.totalorder %s46, 0
      %p214 = por %p212, %p213
      %p215 = scmp.ne.s32.totalorder %s203, %s204
      %p216 = scmp.eq.s32.totalorder %s47, 1
      %p217 = por %p215, %p216
      %p219 = scmp.ne.s32.totalorder %s204, %s218
      %p220 = scmp.eq.s32.totalorder %s47, 0
      %p221 = por %p219, %p220
      %s223 = sadd.s32 %s222, 1
      %p226 = scmp.eq.s32.totalorder %s41, 1
      %p227 = scmp.ne.s32.totalorder %s222, %s224
      %p228 = scmp.eq.s32.totalorder %s41, 0
      %p229 = por %p227, %p228
      %p230 = scmp.ne.s32.totalorder %s222, %s224
      %p231 = scmp.eq.s32.totalorder %s46, 1
      %p232 = por %p230, %p231
      %p233 = scmp.ne.s32.totalorder %s224, %s225
      %p234 = scmp.eq.s32.totalorder %s46, 0
      %p235 = por %p233, %p234
      %p236 = scmp.ne.s32.totalorder %s224, %s225
      %p237 = scmp.eq.s32.totalorder %s47, 1
      %p238 = por %p236, %p237
      %p240 = scmp.ne.s32.totalorder %s225, %s239
      %p241 = scmp.eq.s32.totalorder %s47, 0
      %p242 = por %p240, %p241
      %s244 = sadd.s32 %s243, 1
      %p247 = scmp.eq.s32.totalorder %s41, 1
      %p248 = scmp.ne.s32.totalorder %s243, %s245
      %p249 = scmp.eq.s32.totalorder %s41, 0
      %p250 = por %p248, %p249
      %p251 = scmp.ne.s32.totalorder %s243, %s245
      %p252 = scmp.eq.s32.totalorder %s46, 1
      %p253 = por %p251, %p252
      %p254 = scmp.ne.s32.totalorder %s245, %s246
      %p255 = scmp.eq.s32.totalorder %s46, 0
      %p256 = por %p254, %p255
      %p257 = scmp.ne.s32.totalorder %s245, %s246
      %p258 = scmp.eq.s32.totalorder %s47, 1
      %p259 = por %p257, %p258
      %p261 = scmp.ne.s32.totalorder %s246, %s260
      %p262 = scmp.eq.s32.totalorder %s47, 0
      %p263 = por %p261, %p262
      %s265 = sadd.s32 %s264, 1
      %p268 = scmp.eq.s32.totalorder %s41, 1
      %p269 = scmp.ne.s32.totalorder %s264, %s266
      %p270 = scmp.eq.s32.totalorder %s41, 0
      %p271 = por %p269, %p270
      %p272 = scmp.ne.s32.totalorder %s264, %s266
      %p273 = scmp.eq.s32.totalorder %s46, 1
      %p274 = por %p272, %p273
      %p275 = scmp.ne.s32.totalorder %s266, %s267
      %p276 = scmp.eq.s32.totalorder %s46, 0
      %p277 = por %p275, %p276
      %p278 = scmp.ne.s32.totalorder %s266, %s267
      %p279 = scmp.eq.s32.totalorder %s47, 1
      %p280 = por %p278, %p279
      %p282 = scmp.ne.s32.totalorder %s267, %s281
      %p283 = scmp.eq.s32.totalorder %s47, 0
      %p284 = por %p282, %p283
      %s286 = sadd.s32 %s285, 1
      %p289 = scmp.eq.s32.totalorder %s41, 1
      %p290 = scmp.ne.s32.totalorder %s285, %s287
      %p291 = scmp.eq.s32.totalorder %s41, 0
      %p292 = por %p290, %p291
      %p293 = scmp.ne.s32.totalorder %s285, %s287
      %p294 = scmp.eq.s32.totalorder %s46, 1
      %p295 = por %p293, %p294
      %p296 = scmp.ne.s32.totalorder %s287, %s288
      %p297 = scmp.eq.s32.totalorder %s46, 0
      %p298 = por %p296, %p297
      %p299 = scmp.ne.s32.totalorder %s287, %s288
      %p300 = scmp.eq.s32.totalorder %s47, 1
      %p301 = por %p299, %p300
      %p303 = scmp.ne.s32.totalorder %s288, %s302
      %p304 = scmp.eq.s32.totalorder %s47, 0
      %p305 = por %p303, %p304
      %s307 = sadd.s32 %s306, 1
      %p310 = scmp.eq.s32.totalorder %s41, 1
      %p311 = scmp.ne.s32.totalorder %s306, %s308
      %p312 = scmp.eq.s32.totalorder %s41, 0
      %p313 = por %p311, %p312
      %p314 = scmp.ne.s32.totalorder %s306, %s308
      %p315 = scmp.eq.s32.totalorder %s46, 1
      %p316 = por %p314, %p315
      %p317 = scmp.ne.s32.totalorder %s308, %s309
      %p318 = scmp.eq.s32.totalorder %s46, 0
      %p319 = por %p317, %p318
      %p320 = scmp.ne.s32.totalorder %s308, %s309
      %p321 = scmp.eq.s32.totalorder %s47, 1
      %p322 = por %p320, %p321
      %p324 = scmp.ne.s32.totalorder %s309, %s323
      %p325 = scmp.eq.s32.totalorder %s47, 0
      %p326 = por %p324, %p325
      %s328 = sadd.s32 %s327, 1
      %p331 = scmp.eq.s32.totalorder %s41, 1
      %p332 = scmp.ne.s32.totalorder %s327, %s329
      %p333 = scmp.eq.s32.totalorder %s41, 0
      %p334 = por %p332, %p333
      %p335 = scmp.ne.s32.totalorder %s327, %s329
      %p336 = scmp.eq.s32.totalorder %s46, 1
      %p337 = por %p335, %p336
      %p338 = scmp.ne.s32.totalorder %s329, %s330
      %p339 = scmp.eq.s32.totalorder %s46, 0
      %p340 = por %p338, %p339
      %p341 = scmp.ne.s32.totalorder %s329, %s330
      %p342 = scmp.eq.s32.totalorder %s47, 1
      %p343 = por %p341, %p342
      %p345 = scmp.ne.s32.totalorder %s330, %s344
      %p346 = scmp.eq.s32.totalorder %s47, 0
      %p347 = por %p345, %p346
      %s349 = sadd.s32 %s348, 1
      %p352 = scmp.eq.s32.totalorder %s41, 1
      %p353 = scmp.ne.s32.totalorder %s348, %s350
      %p354 = scmp.eq.s32.totalorder %s41, 0
      %p355 = por %p353, %p354
      %p356 = scmp.ne.s32.totalorder %s348, %s350
      %p357 = scmp.eq.s32.totalorder %s46, 1
      %p358 = por %p356, %p357
      %p359 = scmp.ne.s32.totalorder %s350, %s351
      %p360 = scmp.eq.s32.totalorder %s46, 0
      %p361 = por %p359, %p360
      %p362 = scmp.ne.s32.totalorder %s350, %s351
      %p363 = scmp.eq.s32.totalorder %s47, 1
      %p364 = por %p362, %p363
      %p366 = scmp.ne.s32.totalorder %s351, %s365
      %p367 = scmp.eq.s32.totalorder %s47, 0
      %p368 = por %p366, %p367
      %s370 = sadd.s32 %s369, 1
      %p373 = scmp.eq.s32.totalorder %s41, 1
      %p374 = scmp.ne.s32.totalorder %s369, %s371
      %p375 = scmp.eq.s32.totalorder %s41, 0
      %p376 = por %p374, %p375
      %p377 = scmp.ne.s32.totalorder %s369, %s371
      %p378 = scmp.eq.s32.totalorder %s46, 1
      %p379 = por %p377, %p378
      %p380 = scmp.ne.s32.totalorder %s371, %s372
      %p381 = scmp.eq.s32.totalorder %s46, 0
      %p382 = por %p380, %p381
      %p383 = scmp.ne.s32.totalorder %s371, %s372
      %p384 = scmp.eq.s32.totalorder %s47, 1
      %p385 = por %p383, %p384
      %p387 = scmp.ne.s32.totalorder %s372, %s386
      %p388 = scmp.eq.s32.totalorder %s47, 0
      %p389 = por %p387, %p388
      %s391 = sadd.s32 %s390, 1
      %p394 = scmp.eq.s32.totalorder %s41, 1
      %p395 = scmp.ne.s32.totalorder %s390, %s392
      %p396 = scmp.eq.s32.totalorder %s41, 0
      %p397 = por %p395, %p396
      %p398 = scmp.ne.s32.totalorder %s390, %s392
      %p399 = scmp.eq.s32.totalorder %s46, 1
      %p400 = por %p398, %p399
      %p401 = scmp.ne.s32.totalorder %s392, %s393
      %p402 = scmp.eq.s32.totalorder %s46, 0
      %p403 = por %p401, %p402
      %p404 = scmp.ne.s32.totalorder %s392, %s393
      %p405 = scmp.eq.s32.totalorder %s47, 1
      %p406 = por %p404, %p405
      %p408 = scmp.ne.s32.totalorder %s393, %s407
      %p409 = scmp.eq.s32.totalorder %s47, 0
      %p410 = por %p408, %p409
      %s412 = sadd.s32 %s411, 1
      %p415 = scmp.eq.s32.totalorder %s41, 1
      %p416 = scmp.ne.s32.totalorder %s411, %s413
      %p417 = scmp.eq.s32.totalorder %s41, 0
      %p418 = por %p416, %p417
      %p419 = scmp.ne.s32.totalorder %s411, %s413
      %p420 = scmp.eq.s32.totalorder %s46, 1
      %p421 = por %p419, %p420
      %p422 = scmp.ne.s32.totalorder %s413, %s414
      %p423 = scmp.eq.s32.totalorder %s46, 0
      %p424 = por %p422, %p423
      %p425 = scmp.ne.s32.totalorder %s413, %s414
      %p426 = scmp.eq.s32.totalorder %s47, 1
      %p427 = por %p425, %p426
      %p429 = scmp.ne.s32.totalorder %s414, %s428
      %p430 = scmp.eq.s32.totalorder %s47, 0
      %p431 = por %p429, %p430
      %s433 = sadd.s32 %s432, 1
      %p436 = scmp.eq.s32.totalorder %s41, 1
      %p437 = scmp.ne.s32.totalorder %s432, %s434
      %p438 = scmp.eq.s32.totalorder %s41, 0
      %p439 = por %p437, %p438
      %p440 = scmp.ne.s32.totalorder %s432, %s434
      %p441 = scmp.eq.s32.totalorder %s46, 1
      %p442 = por %p440, %p441
      %p443 = scmp.ne.s32.totalorder %s434, %s435
      %p444 = scmp.eq.s32.totalorder %s46, 0
      %p445 = por %p443, %p444
      %p446 = scmp.ne.s32.totalorder %s434, %s435
      %p447 = scmp.eq.s32.totalorder %s47, 1
      %p448 = por %p446, %p447
      %p450 = scmp.ne.s32.totalorder %s435, %s449
      %p451 = scmp.eq.s32.totalorder %s47, 0
      %p452 = por %p450, %p451
      %s454 = sadd.s32 %s453, 1
      %p457 = scmp.eq.s32.totalorder %s41, 1
      %p458 = scmp.ne.s32.totalorder %s453, %s455
      %p459 = scmp.eq.s32.totalorder %s41, 0
      %p460 = por %p458, %p459
      %p461 = scmp.ne.s32.totalorder %s453, %s455
      %p462 = scmp.eq.s32.totalorder %s46, 1
      %p463 = por %p461, %p462
      %p464 = scmp.ne.s32.totalorder %s455, %s456
      %p465 = scmp.eq.s32.totalorder %s46, 0
      %p466 = por %p464, %p465
      %p467 = scmp.ne.s32.totalorder %s455, %s456
      %p468 = scmp.eq.s32.totalorder %s47, 1
      %p469 = por %p467, %p468
      %p471 = scmp.ne.s32.totalorder %s456, %s470
      %p472 = scmp.eq.s32.totalorder %s47, 0
      %p473 = por %p471, %p472
      %s475 = sadd.s32 %s474, 1
      %p478 = scmp.eq.s32.totalorder %s41, 1
      %p479 = scmp.ne.s32.totalorder %s474, %s476
      %p480 = scmp.eq.s32.totalorder %s41, 0
      %p481 = por %p479, %p480
      %p482 = scmp.ne.s32.totalorder %s474, %s476
      %p483 = scmp.eq.s32.totalorder %s46, 1
      %p484 = por %p482, %p483
      %p485 = scmp.ne.s32.totalorder %s476, %s477
      %p486 = scmp.eq.s32.totalorder %s46, 0
      %p487 = por %p485, %p486
      %p488 = scmp.ne.s32.totalorder %s476, %s477
      %p489 = scmp.eq.s32.totalorder %s47, 1
      %p490 = por %p488, %p489
      %p492 = scmp.ne.s32.totalorder %s477, %s491
      %p493 = scmp.eq.s32.totalorder %s47, 0
      %p494 = por %p492, %p493
      %s496 = sadd.s32 %s495, 1
      %p499 = scmp.eq.s32.totalorder %s41, 1
      %p500 = scmp.ne.s32.totalorder %s495, %s497
      %p501 = scmp.eq.s32.totalorder %s41, 0
      %p502 = por %p500, %p501
      %p503 = scmp.ne.s32.totalorder %s495, %s497
      %p504 = scmp.eq.s32.totalorder %s46, 1
      %p505 = por %p503, %p504
      %p506 = scmp.ne.s32.totalorder %s497, %s498
      %p507 = scmp.eq.s32.totalorder %s46, 0
      %p508 = por %p506, %p507
      %p509 = scmp.ne.s32.totalorder %s497, %s498
      %p510 = scmp.eq.s32.totalorder %s47, 1
      %p511 = por %p509, %p510
      %p513 = scmp.ne.s32.totalorder %s498, %s512
      %p514 = scmp.eq.s32.totalorder %s47, 0
      %p515 = por %p513, %p514
      %s517 = sadd.s32 %s516, 1
      %p520 = scmp.eq.s32.totalorder %s41, 1
      %p521 = scmp.ne.s32.totalorder %s516, %s518
      %p522 = scmp.eq.s32.totalorder %s41, 0
      %p523 = por %p521, %p522
      %p524 = scmp.ne.s32.totalorder %s516, %s518
      %p525 = scmp.eq.s32.totalorder %s46, 1
      %p526 = por %p524, %p525
      %p527 = scmp.ne.s32.totalorder %s518, %s519
      %p528 = scmp.eq.s32.totalorder %s46, 0
      %p529 = por %p527, %p528
      %p530 = scmp.ne.s32.totalorder %s518, %s519
      %p531 = scmp.eq.s32.totalorder %s47, 1
      %p532 = por %p530, %p531
      %p534 = scmp.ne.s32.totalorder %s519, %s533
      %p535 = scmp.eq.s32.totalorder %s47, 0
      %p536 = por %p534, %p535
      %s538 = sadd.s32 %s537, 1
      %p541 = scmp.eq.s32.totalorder %s41, 1
      %p542 = scmp.ne.s32.totalorder %s537, %s539
      %p543 = scmp.eq.s32.totalorder %s41, 0
      %p544 = por %p542, %p543
      %p545 = scmp.ne.s32.totalorder %s537, %s539
      %p546 = scmp.eq.s32.totalorder %s46, 1
      %p547 = por %p545, %p546
      %p548 = scmp.ne.s32.totalorder %s539, %s540
      %p549 = scmp.eq.s32.totalorder %s46, 0
      %p550 = por %p548, %p549
      %p551 = scmp.ne.s32.totalorder %s539, %s540
      %p552 = scmp.eq.s32.totalorder %s47, 1
      %p553 = por %p551, %p552
      %p555 = scmp.ne.s32.totalorder %s540, %s554
      %p556 = scmp.eq.s32.totalorder %s47, 0
      %p557 = por %p555, %p556
      %s559 = sadd.s32 %s558, 1
      %p562 = scmp.eq.s32.totalorder %s41, 1
      %p563 = scmp.ne.s32.totalorder %s558, %s560
      %p564 = scmp.eq.s32.totalorder %s41, 0
      %p565 = por %p563, %p564
      %p566 = scmp.ne.s32.totalorder %s558, %s560
      %p567 = scmp.eq.s32.totalorder %s46, 1
      %p568 = por %p566, %p567
      %p569 = scmp.ne.s32.totalorder %s560, %s561
      %p570 = scmp.eq.s32.totalorder %s46, 0
      %p571 = por %p569, %p570
      %p572 = scmp.ne.s32.totalorder %s560, %s561
      %p573 = scmp.eq.s32.totalorder %s47, 1
      %p574 = por %p572, %p573
      %p576 = scmp.ne.s32.totalorder %s561, %s575
      %p577 = scmp.eq.s32.totalorder %s47, 0
      %p578 = por %p576, %p577
      %s580 = sadd.s32 %s579, 1
      %p583 = scmp.eq.s32.totalorder %s41, 1
      %p584 = scmp.ne.s32.totalorder %s579, %s581
      %p585 = scmp.eq.s32.totalorder %s41, 0
      %p586 = por %p584, %p585
      %p587 = scmp.ne.s32.totalorder %s579, %s581
      %p588 = scmp.eq.s32.totalorder %s46, 1
      %p589 = por %p587, %p588
      %p590 = scmp.ne.s32.totalorder %s581, %s582
      %p591 = scmp.eq.s32.totalorder %s46, 0
      %p592 = por %p590, %p591
      %p593 = scmp.ne.s32.totalorder %s581, %s582
      %p594 = scmp.eq.s32.totalorder %s47, 1
      %p595 = por %p593, %p594
      %p597 = scmp.ne.s32.totalorder %s582, %s596
      %p598 = scmp.eq.s32.totalorder %s47, 0
      %p599 = por %p597, %p598
      %s600 = ssub.s32 %s41, %s48
      %p601 = scmp.eq.s32.totalorder %s600, 0
      %s603 = sadd.s32 %s602, 1
      %s604 = scalar_select %p601, %s602, %s603
      %p607 = pneg %p601
      %p608 = scmp.eq.s32.totalorder %s41, 1
      %p609 = por %p607, %p608
      %p610 = scmp.ne.s32.totalorder %s602, %s605
      %p611 = scmp.eq.s32.totalorder %s41, 0
      %p612 = por %p610, %p611
      %p613 = scmp.ne.s32.totalorder %s602, %s605
      %p614 = scmp.eq.s32.totalorder %s46, 1
      %p615 = por %p613, %p614
      %p616 = scmp.ne.s32.totalorder %s605, %s606
      %p617 = scmp.eq.s32.totalorder %s46, 0
      %p618 = por %p616, %p617
      %p619 = scmp.ne.s32.totalorder %s605, %s606
      %p620 = scmp.eq.s32.totalorder %s47, 1
      %p621 = por %p619, %p620
      %p623 = scmp.ne.s32.totalorder %s606, %s622
      %p624 = scmp.eq.s32.totalorder %s47, 0
      %p625 = por %p623, %p624
      %p626 = scmp.le.s32.totalorder 1, %s41
      %p627 = scmp.lt.s32.totalorder %s41, 3
      %p628 = pnand %p626, %p627
      %p629 = pneg %p628
      // Predicated region
      $region9: #{vagmsda_forward.1} parent=5 // pred_check
        _
      $region10: #{vagmsda_forward.1} parent=5 // pred_check_branch
        %631 = sbr.rel (%p628) target = $region12
      $region11: #{vagmsda_forward.1} parent=5 // pred_region
        %s632 = ssub.s32 %s41, 1
        // Predicated region
        $region13: #{vagmsda_forward.1} parent=11 // pred_check
          %p633 = pneg %p88
        $region14: #{vagmsda_forward.1} parent=11 // pred_check_branch
          %635 = sbr.rel (%p633) target = $region16
        $region15: #{vagmsda_forward.1} parent=11 // pred_region
          %s637 = ssub.s32 128, 128
          %638 = vsyncadd [#allocation6], %s637
          %s640 = sshll.u32 %s1, 4
          %s641 = int_to_ptr.vmem [resolvable:$true] %s640
          %643 = dma.vmem_to_smem %s641, 128, [#allocation3], [#allocation6]
        $region16: #{vagmsda_forward.1} parent=11 // pred_fallthru
          _
        // Predicated region
        $region17: #{vagmsda_forward.1} parent=11 // pred_check
          %p644 = pneg %p109
        $region18: #{vagmsda_forward.1} parent=11 // pred_check_branch
          %646 = sbr.rel (%p644) target = $region20
        $region19: #{vagmsda_forward.1} parent=11 // pred_region
          %s648 = ssub.s32 16, 16
          %649 = vsyncadd [#allocation8], %s648
          %s651 = sshll.u32 %s2, 4
          %s652 = int_to_ptr.vmem [resolvable:$true] %s651
          %654 = dma.vmem_to_smem %s652, 16, [#allocation7], [#allocation8]
        $region20: #{vagmsda_forward.1} parent=11 // pred_fallthru
          _
        // Predicated region
        $region21: #{vagmsda_forward.1} parent=11 // pred_check
          %p655 = pneg %p130
        $region22: #{vagmsda_forward.1} parent=11 // pred_check_branch
          %657 = sbr.rel (%p655) target = $region24
        $region23: #{vagmsda_forward.1} parent=11 // pred_region
          %s659 = ssub.s32 128, 128
          %660 = vsyncadd [#allocation5], %s659
          %663 = dma.hbm_to_smem %s3, 128, [#allocation9], [#allocation5]
        $region24: #{vagmsda_forward.1} parent=11 // pred_fallthru
          _
        // Predicated region
        $region25: #{vagmsda_forward.1} parent=11 // pred_check
          %p664 = pneg %p151
        $region26: #{vagmsda_forward.1} parent=11 // pred_check_branch
          %666 = sbr.rel (%p664) target = $region28
        $region27: #{vagmsda_forward.1} parent=11 // pred_region
          %s668 = ssub.s32 128, 128
          %669 = vsyncadd [#allocation11], %s668
          %672 = dma.hbm_to_smem %s4, 128, [#allocation10], [#allocation11]
        $region28: #{vagmsda_forward.1} parent=11 // pred_fallthru
          _
        // Predicated region
        $region29: #{vagmsda_forward.1} parent=11 // pred_check
          %p673 = pneg %p172
        $region30: #{vagmsda_forward.1} parent=11 // pred_check_branch
          %675 = sbr.rel (%p673) target = $region32
        $region31: #{vagmsda_forward.1} parent=11 // pred_region
          %s677 = ssub.s32 512, 512
          %678 = vsyncadd [#allocation4], %s677
          %s679 = sshll.u32 [#allocation12], 4
          %s680 = int_to_ptr.vmem [resolvable:$true] %s679
          %685 = dma.hbm_to_vmem [thread:$0]  %s5, 512, %s680, [#allocation4], 64, 64, 4
        $region32: #{vagmsda_forward.1} parent=11 // pred_fallthru
          _
        // Predicated region
        $region33: #{vagmsda_forward.1} parent=11 // pred_check
          %p686 = pneg %p193
        $region34: #{vagmsda_forward.1} parent=11 // pred_check_branch
          %688 = sbr.rel (%p686) target = $region36
        $region35: #{vagmsda_forward.1} parent=11 // pred_region
          %s690 = ssub.s32 128, 128
          %691 = vsyncadd [#allocation14], %s690
          %s693 = sshll.u32 [#allocation13], 4
          %s694 = int_to_ptr.vmem [resolvable:$true] %s693
          %696 = dma.hbm_to_vmem [thread:$0]  %s6, 128, %s694, [#allocation14]
        $region36: #{vagmsda_forward.1} parent=11 // pred_fallthru
          _
        // Predicated region
        $region37: #{vagmsda_forward.1} parent=11 // pred_check
          %p697 = pneg %p214
        $region38: #{vagmsda_forward.1} parent=11 // pred_check_branch
          %699 = sbr.rel (%p697) target = $region40
        $region39: #{vagmsda_forward.1} parent=11 // pred_region
          _
        $region40: #{vagmsda_forward.1} parent=11 // pred_fallthru
          _
        // Predicated region
        $region41: #{vagmsda_forward.1} parent=11 // pred_check
          %p700 = pneg %p235
        $region42: #{vagmsda_forward.1} parent=11 // pred_check_branch
          %702 = sbr.rel (%p700) target = $region44
        $region43: #{vagmsda_forward.1} parent=11 // pred_region
          _
        $region44: #{vagmsda_forward.1} parent=11 // pred_fallthru
          _
        // Predicated region
        $region45: #{vagmsda_forward.1} parent=11 // pred_check
          %p703 = pneg %p256
        $region46: #{vagmsda_forward.1} parent=11 // pred_check_branch
          %705 = sbr.rel (%p703) target = $region48
        $region47: #{vagmsda_forward.1} parent=11 // pred_region
          %s707 = ssub.s32 512, 512
          %708 = vsyncadd [#allocation14], %s707
          %s709 = sshll.u32 [#allocation15], 4
          %s710 = int_to_ptr.vmem [resolvable:$true] %s709
          %715 = dma.hbm_to_vmem [thread:$0]  %s9, 512, %s710, [#allocation14], 128, 128, 8
        $region48: #{vagmsda_forward.1} parent=11 // pred_fallthru
          _
        // Predicated region
        $region49: #{vagmsda_forward.1} parent=11 // pred_check
          %p716 = pneg %p277
        $region50: #{vagmsda_forward.1} parent=11 // pred_check_branch
          %718 = sbr.rel (%p716) target = $region52
        $region51: #{vagmsda_forward.1} parent=11 // pred_region
          %s720 = ssub.s32 512, 512
          %721 = vsyncadd [#allocation17], %s720
          %s722 = sshll.u32 [#allocation16], 4
          %s723 = int_to_ptr.vmem [resolvable:$true] %s722
          %728 = dma.hbm_to_vmem [thread:$0]  %s10, 512, %s723, [#allocation17], 64, 64, 4
        $region52: #{vagmsda_forward.1} parent=11 // pred_fallthru
          _
        // Predicated region
        $region53: #{vagmsda_forward.1} parent=11 // pred_check
          %p729 = pneg %p298
        $region54: #{vagmsda_forward.1} parent=11 // pred_check_branch
          %731 = sbr.rel (%p729) target = $region56
        $region55: #{vagmsda_forward.1} parent=11 // pred_region
          _
        $region56: #{vagmsda_forward.1} parent=11 // pred_fallthru
          _
        // Predicated region
        $region57: #{vagmsda_forward.1} parent=11 // pred_check
          %p732 = pneg %p319
        $region58: #{vagmsda_forward.1} parent=11 // pred_check_branch
          %734 = sbr.rel (%p732) target = $region60
        $region59: #{vagmsda_forward.1} parent=11 // pred_region
          _
        $region60: #{vagmsda_forward.1} parent=11 // pred_fallthru
          _
        // Predicated region
        $region61: #{vagmsda_forward.1} parent=11 // pred_check
          %p735 = pneg %p340
        $region62: #{vagmsda_forward.1} parent=11 // pred_check_branch
          %737 = sbr.rel (%p735) target = $region64
        $region63: #{vagmsda_forward.1} parent=11 // pred_region
          %s739 = ssub.s32 512, 512
          %740 = vsyncadd [#allocation17], %s739
          %s741 = sshll.u32 [#allocation18], 4
          %s742 = int_to_ptr.vmem [resolvable:$true] %s741
          %747 = dma.hbm_to_vmem [thread:$0]  %s13, 512, %s742, [#allocation17], 64, 64, 4
        $region64: #{vagmsda_forward.1} parent=11 // pred_fallthru
          _
        // Predicated region
        $region65: #{vagmsda_forward.1} parent=11 // pred_check
          %p748 = pneg %p361
        $region66: #{vagmsda_forward.1} parent=11 // pred_check_branch
          %750 = sbr.rel (%p748) target = $region68
        $region67: #{vagmsda_forward.1} parent=11 // pred_region
          _
        $region68: #{vagmsda_forward.1} parent=11 // pred_fallthru
          _
        // Predicated region
        $region69: #{vagmsda_forward.1} parent=11 // pred_check
          %p751 = pneg %p382
        $region70: #{vagmsda_forward.1} parent=11 // pred_check_branch
          %753 = sbr.rel (%p751) target = $region72
        $region71: #{vagmsda_forward.1} parent=11 // pred_region
          %s755 = ssub.s32 128, 128
          %756 = vsyncadd [#allocation20], %s755
          %s758 = sshll.u32 [#allocation19], 4
          %s759 = int_to_ptr.vmem [resolvable:$true] %s758
          %761 = dma.hbm_to_vmem [thread:$0]  %s15, 128, %s759, [#allocation20]
        $region72: #{vagmsda_forward.1} parent=11 // pred_fallthru
          _
        // Predicated region
        $region73: #{vagmsda_forward.1} parent=11 // pred_check
          %p762 = pneg %p403
        $region74: #{vagmsda_forward.1} parent=11 // pred_check_branch
          %764 = sbr.rel (%p762) target = $region76
        $region75: #{vagmsda_forward.1} parent=11 // pred_region
          _
        $region76: #{vagmsda_forward.1} parent=11 // pred_fallthru
          _
        // Predicated region
        $region77: #{vagmsda_forward.1} parent=11 // pred_check
          %p765 = pneg %p424
        $region78: #{vagmsda_forward.1} parent=11 // pred_check_branch
          %767 = sbr.rel (%p765) target = $region80
        $region79: #{vagmsda_forward.1} parent=11 // pred_region
          _
        $region80: #{vagmsda_forward.1} parent=11 // pred_fallthru
          _
        // Predicated region
        $region81: #{vagmsda_forward.1} parent=11 // pred_check
          %p768 = pneg %p445
        $region82: #{vagmsda_forward.1} parent=11 // pred_check_branch
          %770 = sbr.rel (%p768) target = $region84
        $region83: #{vagmsda_forward.1} parent=11 // pred_region
          %s772 = ssub.s32 2048, 2048
          %773 = vsyncadd [#allocation20], %s772
          %s774 = sshll.u32 [#allocation21], 4
          %s775 = int_to_ptr.vmem [resolvable:$true] %s774
          %780 = dma.hbm_to_vmem [thread:$0]  %s18, 2048, %s775, [#allocation20], 64, 64, 4
        $region84: #{vagmsda_forward.1} parent=11 // pred_fallthru
          _
        // Predicated region
        $region85: #{vagmsda_forward.1} parent=11 // pred_check
          %p781 = pneg %p466
        $region86: #{vagmsda_forward.1} parent=11 // pred_check_branch
          %783 = sbr.rel (%p781) target = $region88
        $region87: #{vagmsda_forward.1} parent=11 // pred_region
          _
        $region88: #{vagmsda_forward.1} parent=11 // pred_fallthru
          _
        // Predicated region
        $region89: #{vagmsda_forward.1} parent=11 // pred_check
          %p784 = pneg %p487
        $region90: #{vagmsda_forward.1} parent=11 // pred_check_branch
          %786 = sbr.rel (%p784) target = $region92
        $region91: #{vagmsda_forward.1} parent=11 // pred_region
          _
        $region92: #{vagmsda_forward.1} parent=11 // pred_fallthru
          _
        // Predicated region
        $region93: #{vagmsda_forward.1} parent=11 // pred_check
          %p787 = pneg %p508
        $region94: #{vagmsda_forward.1} parent=11 // pred_check_branch
          %789 = sbr.rel (%p787) target = $region96
        $region95: #{vagmsda_forward.1} parent=11 // pred_region
          _
        $region96: #{vagmsda_forward.1} parent=11 // pred_fallthru
          _
        // Predicated region
        $region97: #{vagmsda_forward.1} parent=11 // pred_check
          %p790 = pneg %p529
        $region98: #{vagmsda_forward.1} parent=11 // pred_check_branch
          %792 = sbr.rel (%p790) target = $region100
        $region99: #{vagmsda_forward.1} parent=11 // pred_region
          %s794 = ssub.s32 512, 512
          %795 = vsyncadd [#allocation23], %s794
          %s796 = sshll.u32 [#allocation22], 4
          %s797 = int_to_ptr.vmem [resolvable:$true] %s796
          %802 = dma.hbm_to_vmem [thread:$0]  %s22, 512, %s797, [#allocation23], 64, 64, 4
        $region100: #{vagmsda_forward.1} parent=11 // pred_fallthru
          _
        // Predicated region
        $region101: #{vagmsda_forward.1} parent=11 // pred_check
          %p803 = pneg %p550
        $region102: #{vagmsda_forward.1} parent=11 // pred_check_branch
          %805 = sbr.rel (%p803) target = $region104
        $region103: #{vagmsda_forward.1} parent=11 // pred_region
          %s807 = ssub.s32 16, 16
          %808 = vsyncadd [#allocation23], %s807
          %s810 = sshll.u32 [#allocation24], 4
          %s811 = int_to_ptr.vmem [resolvable:$true] %s810
          %813 = dma.hbm_to_vmem [thread:$0]  %s23, 16, %s811, [#allocation23]
        $region104: #{vagmsda_forward.1} parent=11 // pred_fallthru
          _
        // Predicated region
        $region105: #{vagmsda_forward.1} parent=11 // pred_check
          %p814 = pneg %p571
        $region106: #{vagmsda_forward.1} parent=11 // pred_check_branch
          %816 = sbr.rel (%p814) target = $region108
        $region107: #{vagmsda_forward.1} parent=11 // pred_region
          _
        $region108: #{vagmsda_forward.1} parent=11 // pred_fallthru
          _
        // Predicated region
        $region109: #{vagmsda_forward.1} parent=11 // pred_check
          %p817 = pneg %p592
        $region110: #{vagmsda_forward.1} parent=11 // pred_check_branch
          %819 = sbr.rel (%p817) target = $region112
        $region111: #{vagmsda_forward.1} parent=11 // pred_region
          _
        $region112: #{vagmsda_forward.1} parent=11 // pred_fallthru
          _
      $region12: #{vagmsda_forward.1} parent=5 // pred_fallthru
        _
      %p820 = scmp.lt.s32.totalorder %s41, 2
      // Predicated region
      $region113: #{vagmsda_forward.1} parent=5 // pred_check
        %p821 = pneg %p820
      $region114: #{vagmsda_forward.1} parent=5 // pred_check_branch
        %823 = sbr.rel (%p821) target = $region116
      $region115: #{vagmsda_forward.1} parent=5 // pred_region
        // Predicated region
        $region117: #{vagmsda_forward.1} parent=115 // pred_check
          %p824 = pneg %p61
        $region118: #{vagmsda_forward.1} parent=115 // pred_check_branch
          %826 = sbr.rel (%p824) target = $region120
        $region119: #{vagmsda_forward.1} parent=115 // pred_region
          %s827 = sand.u32 %s51, 1
          %s828 = sand.u32 %s51, 1
          %s829 = smul.addr %s828, 40
          %s830 = scalar_lea.vmem [#allocation2], %s829
          %s831 = smul.addr %s41, 8
          %s832 = scalar_lea.vmem %s0, %s831
          // Predicated region
          $region121: #{vagmsda_forward.1} parent=119 // pred_check
            _
          $region122: #{vagmsda_forward.1} parent=119 // pred_check_branch
            %834 = sbr.rel (0) target = $region124
          $region123: #{vagmsda_forward.1} parent=119 // pred_region
            // Predicated region
            $region125: #{vagmsda_forward.1} parent=123 // pred_check
              _
            $region126: #{vagmsda_forward.1} parent=123 // pred_check_branch
              %836 = sbr.rel (0) target = $region128
            $region127: #{vagmsda_forward.1} parent=123 // pred_region
              // Predicated region
              $region140: #{vagmsda_forward.1} parent=127 // pred_check
                _
              $region141: #{vagmsda_forward.1} parent=127 // pred_check_branch
                %859 = sbr.rel (0) target = $region143
              $region142: #{vagmsda_forward.1} parent=127 // pred_region
                loop: start=0, step=1, limit=1
                $region144: #{vagmsda_forward.1} parent=142 // loop_pre_header
                  _
                $region145: #{vagmsda_forward.1} parent=142 // loop_header
                  %s861 = sphi 0, %s865
                  %p862 = scmp.ge.s32.totalorder %s861, 1
                  %s866 = sphi %s832, %s832
                  %s867 = sphi %s830, %s830
                $region146: #{vagmsda_forward.1} parent=142 // loop_header_branch
                  %864 = sbr.rel (%p862) target = $region150
                $region147: #{vagmsda_forward.1} parent=142 // loop_body
                  %v868 = vld [vmem:[%s866] sm:$0xff]
                  %869 = vst [vmem:[%s867] sm:$0xff] %v868
                  %v870 = vld [vmem:[%s866 + $0x10] sm:$0xff]
                  %871 = vst [vmem:[%s867 + $0x8] sm:$0xff] %v870
                  %v872 = vld [vmem:[%s866 + $0x20] sm:$0xff]
                  %873 = vst [vmem:[%s867 + $0x10] sm:$0xff] %v872
                  %v874 = vld [vmem:[%s866 + $0x30] sm:$0xff]
                  %875 = vst [vmem:[%s867 + $0x18] sm:$0xff] %v874
                  %v876 = vld [vmem:[%s866 + $0x40] sm:$0xff]
                  %877 = vst [vmem:[%s867 + $0x20] sm:$0xff] %v876
                $region148: #{vagmsda_forward.1} parent=142 // loop_footer
                  %s865 = sadd.s32 1, %s861
                $region149: #{vagmsda_forward.1} parent=142 // loop_footer_branch
                  %860 = sbr.rel target = $region145
                $region150: #{vagmsda_forward.1} parent=142 // loop_exit
                  _
              $region143: #{vagmsda_forward.1} parent=127 // pred_fallthru
                _
              // Predicated region
              $region151: #{vagmsda_forward.1} parent=127 // pred_check
                _
              $region152: #{vagmsda_forward.1} parent=127 // pred_check_branch
                %879 = sbr.rel target = $region154
              $region153: #{vagmsda_forward.1} parent=127 // pred_region
                _
              $region154: #{vagmsda_forward.1} parent=127 // pred_fallthru
                _
            $region128: #{vagmsda_forward.1} parent=123 // pred_fallthru
              _
            // Predicated region
            $region129: #{vagmsda_forward.1} parent=123 // pred_check
              _
            $region130: #{vagmsda_forward.1} parent=123 // pred_check_branch
              %838 = sbr.rel target = $region132
            $region131: #{vagmsda_forward.1} parent=123 // pred_region
              loop: start=0, step=1, limit=1
              $region133: #{vagmsda_forward.1} parent=131 // loop_pre_header
                _
              $region134: #{vagmsda_forward.1} parent=131 // loop_header
                %s841 = sphi 0, %s845
                %p842 = scmp.ge.s32.totalorder %s841, 1
                %s846 = sphi %s832, %s832
                %s847 = sphi %s830, %s830
              $region135: #{vagmsda_forward.1} parent=131 // loop_header_branch
                %844 = sbr.rel (%p842) target = $region139
              $region136: #{vagmsda_forward.1} parent=131 // loop_body
                %v848 = vld [vmem:[%s846] sm:$0xff]
                %849 = vst [vmem:[%s847] sm:$0xff] %v848
                %v850 = vld [vmem:[%s846 + $0x10] sm:$0xff]
                %851 = vst [vmem:[%s847 + $0x8] sm:$0xff] %v850
                %v852 = vld [vmem:[%s846 + $0x20] sm:$0xff]
                %853 = vst [vmem:[%s847 + $0x10] sm:$0xff] %v852
                %v854 = vld [vmem:[%s846 + $0x30] sm:$0xff]
                %855 = vst [vmem:[%s847 + $0x18] sm:$0xff] %v854
                %v856 = vld [vmem:[%s846 + $0x40] sm:$0xff]
                %857 = vst [vmem:[%s847 + $0x20] sm:$0xff] %v856
              $region137: #{vagmsda_forward.1} parent=131 // loop_footer
                %s845 = sadd.s32 1, %s841
              $region138: #{vagmsda_forward.1} parent=131 // loop_footer_branch
                %840 = sbr.rel target = $region134
              $region139: #{vagmsda_forward.1} parent=131 // loop_exit
                _
            $region132: #{vagmsda_forward.1} parent=123 // pred_fallthru
              _
          $region124: #{vagmsda_forward.1} parent=119 // pred_fallthru
            _
          %880 = vnop
        $region120: #{vagmsda_forward.1} parent=115 // pred_fallthru
          _
      $region116: #{vagmsda_forward.1} parent=5 // pred_fallthru
        _
      %p881 = scmp.le.s32.totalorder 1, %s41
      %p882 = scmp.lt.s32.totalorder %s41, 3
      %p883 = pnand %p881, %p882
      %p884 = pneg %p883
      // Predicated region
      $region155: #{vagmsda_forward.1} parent=5 // pred_check
        _
      $region156: #{vagmsda_forward.1} parent=5 // pred_check_branch
        %886 = sbr.rel (%p883) target = $region158
      $region157: #{vagmsda_forward.1} parent=5 // pred_region
        %s887 = ssub.s32 %s41, 1
        %s888 = sand.u32 %s54, 1
        %s889 = sand.u32 %s54, 1
        %s890 = smul.addr %s889, 40
        %s891 = scalar_lea.vmem [#allocation2], %s890
        // Predicated region
        $region159: #{vagmsda_forward.1} parent=157 // pred_check
          %p892 = pneg %p67
        $region160: #{vagmsda_forward.1} parent=157 // pred_check_branch
          %894 = sbr.rel (%p892) target = $region162
        $region161: #{vagmsda_forward.1} parent=157 // pred_region
          _
        $region162: #{vagmsda_forward.1} parent=157 // pred_fallthru
          _
        // Predicated region
        $region163: #{vagmsda_forward.1} parent=157 // pred_check
          %p895 = pneg %p88
        $region164: #{vagmsda_forward.1} parent=157 // pred_check_branch
          %897 = sbr.rel (%p895) target = $region166
        $region165: #{vagmsda_forward.1} parent=157 // pred_region
          %898 = dma.done [#allocation6], 128
        $region166: #{vagmsda_forward.1} parent=157 // pred_fallthru
          _
        // Predicated region
        $region167: #{vagmsda_forward.1} parent=157 // pred_check
          %p899 = pneg %p109
        $region168: #{vagmsda_forward.1} parent=157 // pred_check_branch
          %901 = sbr.rel (%p899) target = $region170
        $region169: #{vagmsda_forward.1} parent=157 // pred_region
          %902 = dma.done [#allocation8], 16
        $region170: #{vagmsda_forward.1} parent=157 // pred_fallthru
          _
        // Predicated region
        $region171: #{vagmsda_forward.1} parent=157 // pred_check
          %p903 = pneg %p130
        $region172: #{vagmsda_forward.1} parent=157 // pred_check_branch
          %905 = sbr.rel (%p903) target = $region174
        $region173: #{vagmsda_forward.1} parent=157 // pred_region
          %906 = dma.done [#allocation5], 128
        $region174: #{vagmsda_forward.1} parent=157 // pred_fallthru
          _
        // Predicated region
        $region175: #{vagmsda_forward.1} parent=157 // pred_check
          %p907 = pneg %p151
        $region176: #{vagmsda_forward.1} parent=157 // pred_check_branch
          %909 = sbr.rel (%p907) target = $region178
        $region177: #{vagmsda_forward.1} parent=157 // pred_region
          %910 = dma.done [#allocation11], 128
        $region178: #{vagmsda_forward.1} parent=157 // pred_fallthru
          _
        // Predicated region
        $region179: #{vagmsda_forward.1} parent=157 // pred_check
          %p911 = pneg %p172
        $region180: #{vagmsda_forward.1} parent=157 // pred_check_branch
          %913 = sbr.rel (%p911) target = $region182
        $region181: #{vagmsda_forward.1} parent=157 // pred_region
          %914 = dma.done [#allocation4], 512
        $region182: #{vagmsda_forward.1} parent=157 // pred_fallthru
          _
        // Predicated region
        $region183: #{vagmsda_forward.1} parent=157 // pred_check
          %p915 = pneg %p193
        $region184: #{vagmsda_forward.1} parent=157 // pred_check_branch
          %917 = sbr.rel (%p915) target = $region186
        $region185: #{vagmsda_forward.1} parent=157 // pred_region
          %918 = dma.done [#allocation14], 128
        $region186: #{vagmsda_forward.1} parent=157 // pred_fallthru
          _
        // Predicated region
        $region187: #{vagmsda_forward.1} parent=157 // pred_check
          %p919 = pneg %p256
        $region188: #{vagmsda_forward.1} parent=157 // pred_check_branch
          %921 = sbr.rel (%p919) target = $region190
        $region189: #{vagmsda_forward.1} parent=157 // pred_region
          %922 = dma.done [#allocation14], 512
        $region190: #{vagmsda_forward.1} parent=157 // pred_fallthru
          _
        // Predicated region
        $region191: #{vagmsda_forward.1} parent=157 // pred_check
          %p923 = pneg %p277
        $region192: #{vagmsda_forward.1} parent=157 // pred_check_branch
          %925 = sbr.rel (%p923) target = $region194
        $region193: #{vagmsda_forward.1} parent=157 // pred_region
          %926 = dma.done [#allocation17], 512
        $region194: #{vagmsda_forward.1} parent=157 // pred_fallthru
          _
        // Predicated region
        $region195: #{vagmsda_forward.1} parent=157 // pred_check
          %p927 = pneg %p340
        $region196: #{vagmsda_forward.1} parent=157 // pred_check_branch
          %929 = sbr.rel (%p927) target = $region198
        $region197: #{vagmsda_forward.1} parent=157 // pred_region
          %930 = dma.done [#allocation17], 512
        $region198: #{vagmsda_forward.1} parent=157 // pred_fallthru
          _
        // Predicated region
        $region199: #{vagmsda_forward.1} parent=157 // pred_check
          %p931 = pneg %p382
        $region200: #{vagmsda_forward.1} parent=157 // pred_check_branch
          %933 = sbr.rel (%p931) target = $region202
        $region201: #{vagmsda_forward.1} parent=157 // pred_region
          %934 = dma.done [#allocation20], 128
        $region202: #{vagmsda_forward.1} parent=157 // pred_fallthru
          _
        // Predicated region
        $region203: #{vagmsda_forward.1} parent=157 // pred_check
          %p935 = pneg %p445
        $region204: #{vagmsda_forward.1} parent=157 // pred_check_branch
          %937 = sbr.rel (%p935) target = $region206
        $region205: #{vagmsda_forward.1} parent=157 // pred_region
          %938 = dma.done [#allocation20], 2048
        $region206: #{vagmsda_forward.1} parent=157 // pred_fallthru
          _
        // Predicated region
        $region207: #{vagmsda_forward.1} parent=157 // pred_check
          %p939 = pneg %p529
        $region208: #{vagmsda_forward.1} parent=157 // pred_check_branch
          %941 = sbr.rel (%p939) target = $region210
        $region209: #{vagmsda_forward.1} parent=157 // pred_region
          %942 = dma.done [#allocation23], 512
        $region210: #{vagmsda_forward.1} parent=157 // pred_fallthru
          _
        // Predicated region
        $region211: #{vagmsda_forward.1} parent=157 // pred_check
          %p943 = pneg %p550
        $region212: #{vagmsda_forward.1} parent=157 // pred_check_branch
          %945 = sbr.rel (%p943) target = $region214
        $region213: #{vagmsda_forward.1} parent=157 // pred_region
          %946 = dma.done [#allocation23], 16
        $region214: #{vagmsda_forward.1} parent=157 // pred_fallthru
          _
        %947 = sfence
        %s948 = sand.u32 %s54, 1
        %s949 = sand.u32 %s54, 1
        %s950 = smul.addr %s949, 40
        %s951 = scalar_lea.vmem [#allocation2], %s950
        %p952 = pneg %p67
        %p953 = pneg %p64
        %p954 = pneg %p88
        %p955 = pneg %p85
        %p956 = pneg %p109
        %p957 = pneg %p106
        %p958 = pneg %p130
        %p959 = pneg %p127
        %p960 = pneg %p151
        %p961 = pneg %p148
        %p962 = pneg %p172
        %p963 = pneg %p169
        %p964 = pneg %p193
        %p965 = pneg %p190
        %p966 = pneg %p214
        %p967 = pneg %p211
        %p968 = pneg %p235
        %p969 = pneg %p232
        %p970 = pneg %p256
        %p971 = pneg %p253
        %p972 = pneg %p277
        %p973 = pneg %p274
        %p974 = pneg %p298
        %p975 = pneg %p295
        %p976 = pneg %p319
        %p977 = pneg %p316
        %p978 = pneg %p340
        %p979 = pneg %p337
        %p980 = pneg %p361
        %p981 = pneg %p358
        %p982 = pneg %p382
        %p983 = pneg %p379
        %p984 = pneg %p403
        %p985 = pneg %p400
        %p986 = pneg %p424
        %p987 = pneg %p421
        %p988 = pneg %p445
        %p989 = pneg %p442
        %p990 = pneg %p466
        %p991 = pneg %p463
        %p992 = pneg %p487
        %p993 = pneg %p484
        %p994 = pneg %p508
        %p995 = pneg %p505
        %p996 = pneg %p529
        %p997 = pneg %p526
        %p998 = pneg %p550
        %p999 = pneg %p547
        %p1000 = pneg %p571
        %p1001 = pneg %p568
        %p1002 = pneg %p592
        %p1003 = pneg %p589
        %p1004 = pneg %p618
        %p1005 = pneg %p615
        %p1006 = scmp.lt.s32.totalorder %s46, 1
        %s1007 = scalar_select %p1006, %s46, 1
        %s1008 = smul.addr %s1007, 8
        %s1009 = scalar_lea.vmem %s26, %s1008
        %p1010 = scmp.lt.s32.totalorder %s46, 1
        %s1011 = scalar_select %p1010, %s46, 1
        %s1012 = smul.addr %s1011, 8
        %s1013 = scalar_lea.vmem %s26, %s1012
        %v1015 = vld [vmem:[%s891] sm:$0xff]
        %s1016 = scalar_lea.vmem %s891, 8 [#allocation2]
        %v1017 = vld [vmem:[%s1016] sm:$0xff]
        %s1018 = scalar_lea.vmem %s891, 16 [#allocation2]
        %v1019 = vld [vmem:[%s1018] sm:$0xff]
        %s1020 = scalar_lea.vmem %s891, 24 [#allocation2]
        %v1021 = vld [vmem:[%s1020] sm:$0xff]
        %s1022 = scalar_lea.vmem %s891, 32 [#allocation2]
        %v1023 = vld [vmem:[%s1022] sm:$0xff]
        %v1024 = vld [vmem:[#allocation12] sm:$0xf]
        %v1025 = vld [vmem:[#allocation12 + $0x4] sm:$0xf]
        %v1026 = vld [vmem:[#allocation12 + $0x8] sm:$0xf]
        %v1027 = vld [vmem:[#allocation12 + $0xc] sm:$0xf]
        %v1028 = vld [vmem:[#allocation12 + $0x10] sm:$0xf]
        %v1029 = vld [vmem:[#allocation12 + $0x14] sm:$0xf]
        %v1030 = vld [vmem:[#allocation12 + $0x18] sm:$0xf]
        %v1031 = vld [vmem:[#allocation12 + $0x1c] sm:$0x7]
        %v1032 = vpack.c.bf16 %v1017, %v1015
        %v1033 = vpack.c.bf16 %v1021, %v1019
        %v1034 = vpack.c.bf16 %v1023, %v1023
        %v1043 = vunpack.c.l.b16 %v1024
        %v1044 = vunpack.c.l.b16 %v1025
        %v1045 = vunpack.c.l.b16 %v1026
        %v1046 = vunpack.c.l.b16 %v1027
        %v1047 = vunpack.c.l.b16 %v1028
        %v1048 = vunpack.c.l.b16 %v1029
        %v1049 = vunpack.c.l.b16 %v1030
        %v1050 = vunpack.c.l.b16 %v1031
        %v1051 = vpack.c.b16 %v1044, %v1043
        %v1052 = vpack.c.b16 %v1046, %v1045
        %v1053 = vpack.c.b16 %v1048, %v1047
        %v1054 = vpack.c.b16 %v1050, %v1049
        %vm1058 = vcmask 506880
        %v1060 = vsel %vm1058, %v1032, 0
        %v1063 = vsel %vm1058, %v1033, 0
        %v1066 = vsel %vm1058, %v1034, 0
        %vm1068 = vcmask 1046528
        %v1070 = vsel %vm1068, %v1054, 0
        %1072 = vmatprep.subr.bf16.mxu0 0
        %1073 = vmatpush1.bf16.msra.mxu0 %v1051
        %1074 = vmatprep.subr.bf16.mxu0 0
        %1075 = vmatpush1.bf16.msra.mxu0 %v1052
        %1076 = vmatprep.subr.bf16.mxu0 0
        %1077 = vmatpush1.bf16.msra.mxu0 %v1053
        %1078 = vmatprep.subr.bf16.mxu0 0
        %1079 = vmatpush1.bf16.msra.mxu0 %v1070
        %1080 = vmatprep.subr.bf16.mxu0 0
        %1081 = vmatpush1.bf16.msra.mxu0 0
        %1082 = vmatprep.subr.bf16.mxu0 0
        %1083 = vmatpush1.bf16.msra.mxu0 0
        %1084 = vmatprep.subr.bf16.mxu0 0
        %1085 = vmatpush1.bf16.msra.mxu0 0
        %1086 = vmatprep.subr.bf16.mxu0 0
        %1087 = vmatpush1.bf16.msra.mxu0 0
        %1088 = vmatprep.subr.bf16.mxu0 0
        %1089 = vmatpush1.bf16.msra.mxu0 0
        %1090 = vmatprep.subr.bf16.mxu0 0
        %1091 = vmatpush1.bf16.msra.mxu0 0
        %1092 = vmatprep.subr.bf16.mxu0 0
        %1093 = vmatpush1.bf16.msra.mxu0 0
        %1094 = vmatprep.subr.bf16.mxu0 0
        %1095 = vmatpush1.bf16.msra.mxu0 0
        %1096 = vmatprep.subr.bf16.mxu0 0
        %1097 = vmatpush1.bf16.msra.mxu0 0
        %1098 = vmatprep.subr.bf16.mxu0 0
        %1099 = vmatpush1.bf16.msra.mxu0 0
        %1100 = vmatprep.subr.bf16.mxu0 0
        %1101 = vmatpush1.bf16.msra.mxu0 0
        %1102 = vmatprep.subr.bf16.mxu0 0
        %1103 = vmatpush1.bf16.msra.mxu0 0
        %1104 = vmatprep.mubr.bf16.mxu0 0
        %1105 = vmatmul.mubr.bf16.gmra.mrb[0].mxu0 %v1060
        %v1106 = vpop.f32.mrb[0].mxu0
        %v1107 = vadd.f32 0.0, %v1106
        %v1108 = vpop.f32.mrb[0].mxu0
        %v1109 = vpop.f32.mrb[0].mxu0
        %v1110 = vadd.f32 0.0, %v1109
        %v1111 = vpop.f32.mrb[0].mxu0
        %1112 = vmatprep.mubr.bf16.mxu0 0
        %1113 = vmatmul.mubr.bf16.gmra.mrb[0].mxu0 %v1063
        %v1114 = vpop.f32.mrb[0].mxu0
        %v1115 = vadd.f32 0.0, %v1114
        %v1116 = vpop.f32.mrb[0].mxu0
        %v1117 = vpop.f32.mrb[0].mxu0
        %v1118 = vadd.f32 0.0, %v1117
        %v1119 = vpop.f32.mrb[0].mxu0
        %1120 = vmatprep.mubr.bf16.mxu0 0
        %1121 = vmatmul.mubr.bf16.gmra.mrb[0].mxu0 %v1066
        %v1122 = vpop.f32.mrb[0].mxu0
        %v1123 = vadd.f32 0.0, %v1122
        %v1124 = vpop.f32.mrb[0].mxu0
        %v1125 = vpop.f32.mrb[0].mxu0
        %v1126 = vpop.f32.mrb[0].mxu0
        %1127 = vdwg.mxu0
        %s1128 = sld [smem:[#allocation3]]
        %v1129 = vstv %s1128
        %v1130 = vmul.f32 %v1107, %v1129
        %s1131 = sld [smem:[#allocation3 + $0x80]]
        %v1132 = vstv %s1131
        %v1133 = vmul.f32 %v1110, %v1132
        %v1134 = vadd.f32 %v1130, %v1133
        %s1135 = sld [smem:[#allocation3 + $0x100]]
        %v1136 = vstv %s1135
        %v1137 = vmul.f32 %v1115, %v1136
        %v1138 = vadd.f32 %v1134, %v1137
        %s1139 = sld [smem:[#allocation3 + $0x180]]
        %v1140 = vstv %s1139
        %v1141 = vmul.f32 %v1118, %v1140
        %v1142 = vadd.f32 %v1138, %v1141
        %s1143 = sld [smem:[#allocation3 + $0x200]]
        %v1144 = vstv %s1143
        %v1145 = vmul.f32 %v1123, %v1144
        %v1146 = vadd.f32 %v1142, %v1145
        %s1147 = sld [smem:[#allocation7]]
        %v1148 = vstv %s1147
        %v1149 = vadd.f32 %v1146, %v1148
        %s1150 = sld [smem:[#allocation3 + $0x1]]
        %v1151 = vstv %s1150
        %v1152 = vmul.f32 %v1107, %v1151
        %s1153 = sld [smem:[#allocation3 + $0x81]]
        %v1154 = vstv %s1153
        %v1155 = vmul.f32 %v1110, %v1154
        %v1156 = vadd.f32 %v1152, %v1155
        %s1157 = sld [smem:[#allocation3 + $0x101]]
        %v1158 = vstv %s1157
        %v1159 = vmul.f32 %v1115, %v1158
        %v1160 = vadd.f32 %v1156, %v1159
        %s1161 = sld [smem:[#allocation3 + $0x181]]
        %v1162 = vstv %s1161
        %v1163 = vmul.f32 %v1118, %v1162
        %v1164 = vadd.f32 %v1160, %v1163
        %s1165 = sld [smem:[#allocation3 + $0x201]]
        %v1166 = vstv %s1165
        %v1167 = vmul.f32 %v1123, %v1166
        %v1168 = vadd.f32 %v1164, %v1167
        %s1169 = sld [smem:[#allocation7 + $0x1]]
        %v1170 = vstv %s1169
        %v1171 = vadd.f32 %v1168, %v1170
        %s1172 = sld [smem:[#allocation3 + $0x2]]
        %v1173 = vstv %s1172
        %v1174 = vmul.f32 %v1107, %v1173
        %s1175 = sld [smem:[#allocation3 + $0x82]]
        %v1176 = vstv %s1175
        %v1177 = vmul.f32 %v1110, %v1176
        %v1178 = vadd.f32 %v1174, %v1177
        %s1179 = sld [smem:[#allocation3 + $0x102]]
        %v1180 = vstv %s1179
        %v1181 = vmul.f32 %v1115, %v1180
        %v1182 = vadd.f32 %v1178, %v1181
        %s1183 = sld [smem:[#allocation3 + $0x182]]
        %v1184 = vstv %s1183
        %v1185 = vmul.f32 %v1118, %v1184
        %v1186 = vadd.f32 %v1182, %v1185
        %s1187 = sld [smem:[#allocation3 + $0x202]]
        %v1188 = vstv %s1187
        %v1189 = vmul.f32 %v1123, %v1188
        %v1190 = vadd.f32 %v1186, %v1189
        %s1191 = sld [smem:[#allocation7 + $0x2]]
        %v1192 = vstv %s1191
        %v1193 = vadd.f32 %v1190, %v1192
        %s1194 = sld [smem:[#allocation3 + $0x3]]
        %v1195 = vstv %s1194
        %v1196 = vmul.f32 %v1107, %v1195
        %s1197 = sld [smem:[#allocation3 + $0x83]]
        %v1198 = vstv %s1197
        %v1199 = vmul.f32 %v1110, %v1198
        %v1200 = vadd.f32 %v1196, %v1199
        %s1201 = sld [smem:[#allocation3 + $0x103]]
        %v1202 = vstv %s1201
        %v1203 = vmul.f32 %v1115, %v1202
        %v1204 = vadd.f32 %v1200, %v1203
        %s1205 = sld [smem:[#allocation3 + $0x183]]
        %v1206 = vstv %s1205
        %v1207 = vmul.f32 %v1118, %v1206
        %v1208 = vadd.f32 %v1204, %v1207
        %s1209 = sld [smem:[#allocation3 + $0x203]]
        %v1210 = vstv %s1209
        %v1211 = vmul.f32 %v1123, %v1210
        %v1212 = vadd.f32 %v1208, %v1211
        %s1213 = sld [smem:[#allocation7 + $0x3]]
        %v1214 = vstv %s1213
        %v1215 = vadd.f32 %v1212, %v1214
        %s1216 = sld [smem:[#allocation3 + $0x4]]
        %v1217 = vstv %s1216
        %v1218 = vmul.f32 %v1107, %v1217
        %s1219 = sld [smem:[#allocation3 + $0x84]]
        %v1220 = vstv %s1219
        %v1221 = vmul.f32 %v1110, %v1220
        %v1222 = vadd.f32 %v1218, %v1221
        %s1223 = sld [smem:[#allocation3 + $0x104]]
        %v1224 = vstv %s1223
        %v1225 = vmul.f32 %v1115, %v1224
        %v1226 = vadd.f32 %v1222, %v1225
        %s1227 = sld [smem:[#allocation3 + $0x184]]
        %v1228 = vstv %s1227
        %v1229 = vmul.f32 %v1118, %v1228
        %v1230 = vadd.f32 %v1226, %v1229
        %s1231 = sld [smem:[#allocation3 + $0x204]]
        %v1232 = vstv %s1231
        %v1233 = vmul.f32 %v1123, %v1232
        %v1234 = vadd.f32 %v1230, %v1233
        %s1235 = sld [smem:[#allocation7 + $0x4]]
        %v1236 = vstv %s1235
        %v1237 = vadd.f32 %v1234, %v1236
        %v1238 = vsel %vm1058, %v1149, 0.0
        %1239 = vadd.xlane.f32.xlu0 %v1238
        %v1240 = vpop.xlane.xlu0 %1239
        %v1241 = vrcp.pop 62.0
        %v1242 = vmul.f32 %v1240, %v1241
        %v1243 = vsel %vm1058, %v1171, 0.0
        %1244 = vadd.xlane.f32.xlu0 %v1243
        %v1245 = vpop.xlane.xlu0 %1244
        %v1246 = vmul.f32 %v1245, %v1241
        %v1247 = vsel %vm1058, %v1193, 0.0
        %1248 = vadd.xlane.f32.xlu0 %v1247
        %v1249 = vpop.xlane.xlu0 %1248
        %v1250 = vmul.f32 %v1249, %v1241
        %v1251 = vsel %vm1058, %v1215, 0.0
        %1252 = vadd.xlane.f32.xlu0 %v1251
        %v1253 = vpop.xlane.xlu0 %1252
        %v1254 = vmul.f32 %v1253, %v1241
        %v1255 = vsel %vm1058, %v1237, 0.0
        %1256 = vadd.xlane.f32.xlu0 %v1255
        %v1257 = vpop.xlane.xlu0 %1256
        %v1258 = vmul.f32 %v1257, %v1241
        %vm1259 = vcmask 7168
        %v1260 = vsel %vm1259, %v1242, %v1246
        %vm1261 = vcmask 15360
        %v1262 = vsel %vm1261, %v1260, %v1250
        %vm1263 = vcmask 23552
        %v1264 = vsel %vm1263, %v1262, %v1254
        %vm1265 = vcmask 31744
        %v1266 = vsel %vm1265, %v1264, %v1258
        %v1267 = vsel %vm1058, %v1149, -inf
        %1268 = vmax.xlane.f32.xlu0 %v1267
        %v1269 = vpop.xlane.xlu0 %1268
        %v1270 = vsel %vm1058, %v1171, -inf
        %1271 = vmax.xlane.f32.xlu0 %v1270
        %v1272 = vpop.xlane.xlu0 %1271
        %v1273 = vsel %vm1058, %v1193, -inf
        %1274 = vmax.xlane.f32.xlu0 %v1273
        %v1275 = vpop.xlane.xlu0 %1274
        %v1276 = vsel %vm1058, %v1215, -inf
        %1277 = vmax.xlane.f32.xlu0 %v1276
        %v1278 = vpop.xlane.xlu0 %1277
        %v1279 = vsel %vm1058, %v1237, -inf
        %1280 = vmax.xlane.f32.xlu0 %v1279
        %v1281 = vpop.xlane.xlu0 %1280
        %v1282 = vsel %vm1259, %v1269, %v1272
        %v1283 = vsel %vm1261, %v1282, %v1275
        %v1284 = vsel %vm1263, %v1283, %v1278
        %v1285 = vsel %vm1265, %v1284, %v1281
        %v1286 = vld [vmem:[#allocation13] sm:$0x1f]
        %v1287 = vld [vmem:[%s7] sm:$0xff]
        %v1288 = vld [vmem:[%s7 + $0x8] sm:$0xff]
        %v1289 = vld [vmem:[%s7 + $0x10] sm:$0xff]
        %v1290 = vld [vmem:[%s7 + $0x18] sm:$0xff]
        %vm1291 = vcmask 39936
        %v1293 = vsel %vm1291, %v1266, 0
        %vm1295 = vcmask 1044480
        %v1297 = vsel %vm1295, %v1286, 0
        %1299 = vmatprep.subr.mxu0 0.0
        %1300 = vmatpush1.msra.mxu0 %v1297
        %1301 = vmatprep.subr.mxu0 0.0
        %1302 = vmatpush1.msra.mxu0 0.0
        %1303 = vmatprep.subr.mxu0 0.0
        %1304 = vmatpush1.msra.mxu0 0.0
        %1305 = vmatprep.subr.mxu0 0.0
        %1306 = vmatpush1.msra.mxu0 0.0
        %1307 = vmatprep.subr.mxu0 0.0
        %1308 = vmatpush1.msra.mxu0 0.0
        %1309 = vmatprep.subr.mxu0 0.0
        %1310 = vmatpush1.msra.mxu0 0.0
        %1311 = vmatprep.subr.mxu0 0.0
        %1312 = vmatpush1.msra.mxu0 0.0
        %1313 = vmatprep.subr.mxu0 0.0
        %1314 = vmatpush1.msra.mxu0 0.0
        %1315 = vmatprep.subr.mxu0 0.0
        %1316 = vmatpush1.msra.mxu0 0.0
        %1317 = vmatprep.subr.mxu0 0.0
        %1318 = vmatpush1.msra.mxu0 0.0
        %1319 = vmatprep.subr.mxu0 0.0
        %1320 = vmatpush1.msra.mxu0 0.0
        %1321 = vmatprep.subr.mxu0 0.0
        %1322 = vmatpush1.msra.mxu0 0.0
        %1323 = vmatprep.subr.mxu0 0.0
        %1324 = vmatpush1.msra.mxu0 0.0
        %1325 = vmatprep.subr.mxu0 0.0
        %1326 = vmatpush1.msra.mxu0 0.0
        %1327 = vmatprep.subr.mxu0 0.0
        %1328 = vmatpush1.msra.mxu0 0.0
        %1329 = vmatprep.subr.mxu0 0.0
        %1330 = vmatpush1.msra.mxu0 0.0
        %1331 = vmatprep.subr.mxu0 0.0
        %1332 = vmatpush1.msra.mxu0 0.0
        %1333 = vmatprep.subr.mxu0 0.0
        %1334 = vmatpush1.msra.mxu0 0.0
        %1335 = vmatprep.subr.mxu0 0.0
        %1336 = vmatpush1.msra.mxu0 0.0
        %1337 = vmatprep.subr.mxu0 0.0
        %1338 = vmatpush1.msra.mxu0 0.0
        %1339 = vmatprep.subr.mxu0 0.0
        %1340 = vmatpush1.msra.mxu0 0.0
        %1341 = vmatprep.subr.mxu0 0.0
        %1342 = vmatpush1.msra.mxu0 0.0
        %1343 = vmatprep.subr.mxu0 0.0
        %1344 = vmatpush1.msra.mxu0 0.0
        %1345 = vmatprep.subr.mxu0 0.0
        %1346 = vmatpush1.msra.mxu0 0.0
        %1347 = vmatprep.subr.mxu0 0.0
        %1348 = vmatpush1.msra.mxu0 0.0
        %1349 = vmatprep.subr.mxu0 0.0
        %1350 = vmatpush1.msra.mxu0 0.0
        %1351 = vmatprep.subr.mxu0 0.0
        %1352 = vmatpush1.msra.mxu0 0.0
        %1353 = vmatprep.subr.mxu0 0.0
        %1354 = vmatpush1.msra.mxu0 0.0
        %1355 = vmatprep.subr.mxu0 0.0
        %1356 = vmatpush1.msra.mxu0 0.0
        %1357 = vmatprep.subr.mxu0 0.0
        %1358 = vmatpush1.msra.mxu0 0.0
        %1359 = vmatprep.subr.mxu0 0.0
        %1360 = vmatpush1.msra.mxu0 0.0
        %1361 = vmatprep.subr.mxu0 0.0
        %1362 = vmatpush1.msra.mxu0 0.0
        %1363 = vmatprep.mubr.f32.mxu0 0.0
        %1364 = vmatmul.mubr.f32.gmra.mrb[0].mxu0 %v1293
        %v1365 = vpop.f32.mrb[0].mxu0
        %v1366 = vadd.f32 0.0, %v1365
        %v1367 = vpop.f32.mrb[0].mxu0
        %1368 = vdwg.mxu0
        %v1369 = vmax.f32 %v1366, 0.0
        %v1371 = vsel %vm1291, %v1285, 0
        %1373 = vmatprep.subr.mxu0 0.0
        %1374 = vmatpush1.msra.mxu0 %v1297
        %1375 = vmatprep.subr.mxu0 0.0
        %1376 = vmatpush1.msra.mxu0 0.0
        %1377 = vmatprep.subr.mxu0 0.0
        %1378 = vmatpush1.msra.mxu0 0.0
        %1379 = vmatprep.subr.mxu0 0.0
        %1380 = vmatpush1.msra.mxu0 0.0
        %1381 = vmatprep.subr.mxu0 0.0
        %1382 = vmatpush1.msra.mxu0 0.0
        %1383 = vmatprep.subr.mxu0 0.0
        %1384 = vmatpush1.msra.mxu0 0.0
        %1385 = vmatprep.subr.mxu0 0.0
        %1386 = vmatpush1.msra.mxu0 0.0
        %1387 = vmatprep.subr.mxu0 0.0
        %1388 = vmatpush1.msra.mxu0 0.0
        %1389 = vmatprep.subr.mxu0 0.0
        %1390 = vmatpush1.msra.mxu0 0.0
        %1391 = vmatprep.subr.mxu0 0.0
        %1392 = vmatpush1.msra.mxu0 0.0
        %1393 = vmatprep.subr.mxu0 0.0
        %1394 = vmatpush1.msra.mxu0 0.0
        %1395 = vmatprep.subr.mxu0 0.0
        %1396 = vmatpush1.msra.mxu0 0.0
        %1397 = vmatprep.subr.mxu0 0.0
        %1398 = vmatpush1.msra.mxu0 0.0
        %1399 = vmatprep.subr.mxu0 0.0
        %1400 = vmatpush1.msra.mxu0 0.0
        %1401 = vmatprep.subr.mxu0 0.0
        %1402 = vmatpush1.msra.mxu0 0.0
        %1403 = vmatprep.subr.mxu0 0.0
        %1404 = vmatpush1.msra.mxu0 0.0
        %1405 = vmatprep.subr.mxu0 0.0
        %1406 = vmatpush1.msra.mxu0 0.0
        %1407 = vmatprep.subr.mxu0 0.0
        %1408 = vmatpush1.msra.mxu0 0.0
        %1409 = vmatprep.subr.mxu0 0.0
        %1410 = vmatpush1.msra.mxu0 0.0
        %1411 = vmatprep.subr.mxu0 0.0
        %1412 = vmatpush1.msra.mxu0 0.0
        %1413 = vmatprep.subr.mxu0 0.0
        %1414 = vmatpush1.msra.mxu0 0.0
        %1415 = vmatprep.subr.mxu0 0.0
        %1416 = vmatpush1.msra.mxu0 0.0
        %1417 = vmatprep.subr.mxu0 0.0
        %1418 = vmatpush1.msra.mxu0 0.0
        %1419 = vmatprep.subr.mxu0 0.0
        %1420 = vmatpush1.msra.mxu0 0.0
        %1421 = vmatprep.subr.mxu0 0.0
        %1422 = vmatpush1.msra.mxu0 0.0
        %1423 = vmatprep.subr.mxu0 0.0
        %1424 = vmatpush1.msra.mxu0 0.0
        %1425 = vmatprep.subr.mxu0 0.0
        %1426 = vmatpush1.msra.mxu0 0.0
        %1427 = vmatprep.subr.mxu0 0.0
        %1428 = vmatpush1.msra.mxu0 0.0
        %1429 = vmatprep.subr.mxu0 0.0
        %1430 = vmatpush1.msra.mxu0 0.0
        %1431 = vmatprep.subr.mxu0 0.0
        %1432 = vmatpush1.msra.mxu0 0.0
        %1433 = vmatprep.subr.mxu0 0.0
        %1434 = vmatpush1.msra.mxu0 0.0
        %1435 = vmatprep.subr.mxu0 0.0
        %1436 = vmatpush1.msra.mxu0 0.0
        %1437 = vmatprep.mubr.f32.mxu0 0.0
        %1438 = vmatmul.mubr.f32.gmra.mrb[0].mxu0 %v1371
        %v1439 = vpop.f32.mrb[0].mxu0
        %v1440 = vadd.f32 0.0, %v1439
        %v1441 = vpop.f32.mrb[0].mxu0
        %1442 = vdwg.mxu0
        %v1443 = vmax.f32 %v1440, 0.0
        %vm1444 = vcmask 261120
        %v1446 = vsel %vm1444, %v1443, 0
        %1448 = vmatprep.subr.mxu0 0.0
        %1449 = vmatpush1.msra.mxu0 %v1287
        %1450 = vmatprep.subr.mxu0 0.0
        %1451 = vmatpush1.msra.mxu0 %v1288
        %1452 = vmatprep.subr.mxu0 0.0
        %1453 = vmatpush1.msra.mxu0 %v1289
        %1454 = vmatprep.subr.mxu0 0.0
        %1455 = vmatpush1.msra.mxu0 %v1290
        %1456 = vmatprep.subr.mxu0 0.0
        %1457 = vmatpush1.msra.mxu0 0.0
        %1458 = vmatprep.subr.mxu0 0.0
        %1459 = vmatpush1.msra.mxu0 0.0
        %1460 = vmatprep.subr.mxu0 0.0
        %1461 = vmatpush1.msra.mxu0 0.0
        %1462 = vmatprep.subr.mxu0 0.0
        %1463 = vmatpush1.msra.mxu0 0.0
        %1464 = vmatprep.subr.mxu0 0.0
        %1465 = vmatpush1.msra.mxu0 0.0
        %1466 = vmatprep.subr.mxu0 0.0
        %1467 = vmatpush1.msra.mxu0 0.0
        %1468 = vmatprep.subr.mxu0 0.0
        %1469 = vmatpush1.msra.mxu0 0.0
        %1470 = vmatprep.subr.mxu0 0.0
        %1471 = vmatpush1.msra.mxu0 0.0
        %1472 = vmatprep.subr.mxu0 0.0
        %1473 = vmatpush1.msra.mxu0 0.0
        %1474 = vmatprep.subr.mxu0 0.0
        %1475 = vmatpush1.msra.mxu0 0.0
        %1476 = vmatprep.subr.mxu0 0.0
        %1477 = vmatpush1.msra.mxu0 0.0
        %1478 = vmatprep.subr.mxu0 0.0
        %1479 = vmatpush1.msra.mxu0 0.0
        %1480 = vmatprep.subr.mxu0 0.0
        %1481 = vmatpush1.msra.mxu0 0.0
        %1482 = vmatprep.subr.mxu0 0.0
        %1483 = vmatpush1.msra.mxu0 0.0
        %1484 = vmatprep.subr.mxu0 0.0
        %1485 = vmatpush1.msra.mxu0 0.0
        %1486 = vmatprep.subr.mxu0 0.0
        %1487 = vmatpush1.msra.mxu0 0.0
        %1488 = vmatprep.subr.mxu0 0.0
        %1489 = vmatpush1.msra.mxu0 0.0
        %1490 = vmatprep.subr.mxu0 0.0
        %1491 = vmatpush1.msra.mxu0 0.0
        %1492 = vmatprep.subr.mxu0 0.0
        %1493 = vmatpush1.msra.mxu0 0.0
        %1494 = vmatprep.subr.mxu0 0.0
        %1495 = vmatpush1.msra.mxu0 0.0
        %1496 = vmatprep.subr.mxu0 0.0
        %1497 = vmatpush1.msra.mxu0 0.0
        %1498 = vmatprep.subr.mxu0 0.0
        %1499 = vmatpush1.msra.mxu0 0.0
        %1500 = vmatprep.subr.mxu0 0.0
        %1501 = vmatpush1.msra.mxu0 0.0
        %1502 = vmatprep.subr.mxu0 0.0
        %1503 = vmatpush1.msra.mxu0 0.0
        %1504 = vmatprep.subr.mxu0 0.0
        %1505 = vmatpush1.msra.mxu0 0.0
        %1506 = vmatprep.subr.mxu0 0.0
        %1507 = vmatpush1.msra.mxu0 0.0
        %1508 = vmatprep.subr.mxu0 0.0
        %1509 = vmatpush1.msra.mxu0 0.0
        %1510 = vmatprep.subr.mxu0 0.0
        %1511 = vmatpush1.msra.mxu0 0.0
        %1512 = vmatprep.mubr.f32.mxu0 0.0
        %1513 = vmatmul.mubr.f32.gmra.mrb[0].mxu0 %v1446
        %v1514 = vpop.f32.mrb[0].mxu0
        %v1515 = vadd.f32 0.0, %v1514
        %v1516 = vpop.f32.mrb[0].mxu0
        %1517 = vdwg.mxu0
        %v1519 = vsel %vm1444, %v1369, 0
        %1521 = vmatprep.subr.mxu0 0.0
        %1522 = vmatpush1.msra.mxu0 %v1287
        %1523 = vmatprep.subr.mxu0 0.0
        %1524 = vmatpush1.msra.mxu0 %v1288
        %1525 = vmatprep.subr.mxu0 0.0
        %1526 = vmatpush1.msra.mxu0 %v1289
        %1527 = vmatprep.subr.mxu0 0.0
        %1528 = vmatpush1.msra.mxu0 %v1290
        %1529 = vmatprep.subr.mxu0 0.0
        %1530 = vmatpush1.msra.mxu0 0.0
        %1531 = vmatprep.subr.mxu0 0.0
        %1532 = vmatpush1.msra.mxu0 0.0
        %1533 = vmatprep.subr.mxu0 0.0
        %1534 = vmatpush1.msra.mxu0 0.0
        %1535 = vmatprep.subr.mxu0 0.0
        %1536 = vmatpush1.msra.mxu0 0.0
        %1537 = vmatprep.subr.mxu0 0.0
        %1538 = vmatpush1.msra.mxu0 0.0
        %1539 = vmatprep.subr.mxu0 0.0
        %1540 = vmatpush1.msra.mxu0 0.0
        %1541 = vmatprep.subr.mxu0 0.0
        %1542 = vmatpush1.msra.mxu0 0.0
        %1543 = vmatprep.subr.mxu0 0.0
        %1544 = vmatpush1.msra.mxu0 0.0
        %1545 = vmatprep.subr.mxu0 0.0
        %1546 = vmatpush1.msra.mxu0 0.0
        %1547 = vmatprep.subr.mxu0 0.0
        %1548 = vmatpush1.msra.mxu0 0.0
        %1549 = vmatprep.subr.mxu0 0.0
        %1550 = vmatpush1.msra.mxu0 0.0
        %1551 = vmatprep.subr.mxu0 0.0
        %1552 = vmatpush1.msra.mxu0 0.0
        %1553 = vmatprep.subr.mxu0 0.0
        %1554 = vmatpush1.msra.mxu0 0.0
        %1555 = vmatprep.subr.mxu0 0.0
        %1556 = vmatpush1.msra.mxu0 0.0
        %1557 = vmatprep.subr.mxu0 0.0
        %1558 = vmatpush1.msra.mxu0 0.0
        %1559 = vmatprep.subr.mxu0 0.0
        %1560 = vmatpush1.msra.mxu0 0.0
        %1561 = vmatprep.subr.mxu0 0.0
        %1562 = vmatpush1.msra.mxu0 0.0
        %1563 = vmatprep.subr.mxu0 0.0
        %1564 = vmatpush1.msra.mxu0 0.0
        %1565 = vmatprep.subr.mxu0 0.0
        %1566 = vmatpush1.msra.mxu0 0.0
        %1567 = vmatprep.subr.mxu0 0.0
        %1568 = vmatpush1.msra.mxu0 0.0
        %1569 = vmatprep.subr.mxu0 0.0
        %1570 = vmatpush1.msra.mxu0 0.0
        %1571 = vmatprep.subr.mxu0 0.0
        %1572 = vmatpush1.msra.mxu0 0.0
        %1573 = vmatprep.subr.mxu0 0.0
        %1574 = vmatpush1.msra.mxu0 0.0
        %1575 = vmatprep.subr.mxu0 0.0
        %1576 = vmatpush1.msra.mxu0 0.0
        %1577 = vmatprep.subr.mxu0 0.0
        %1578 = vmatpush1.msra.mxu0 0.0
        %1579 = vmatprep.subr.mxu0 0.0
        %1580 = vmatpush1.msra.mxu0 0.0
        %1581 = vmatprep.subr.mxu0 0.0
        %1582 = vmatpush1.msra.mxu0 0.0
        %1583 = vmatprep.subr.mxu0 0.0
        %1584 = vmatpush1.msra.mxu0 0.0
        %1585 = vmatprep.mubr.f32.mxu0 0.0
        %1586 = vmatmul.mubr.f32.gmra.mrb[0].mxu0 %v1519
        %v1587 = vpop.f32.mrb[0].mxu0
        %v1588 = vadd.f32 %v1515, %v1587
        %v1589 = vpop.f32.mrb[0].mxu0
        %1590 = vdwg.mxu0
        %v1591 = vxor.u32 %v1588, 2147483648
        %v1592 = vmul.f32 %v1591, 1.442695
        %v1593 = vpow.pop %v1592
        %v1594 = vadd.f32 %v1593, 1.0
        %v1595 = vrcp.pop %v1594
        %v1596 = vmul.f32 1.0, %v1595
        %v1597 = vadd.f32 %v1596, 1.0
        %1599 = vset.pattern.permute.xlu0 0
        %1600 = vperm.xlu0 %1599, %v1597
        %v1601 = vpop.permute.xlu0 %1600
        %v1603 = vmul.f32 %v1149, %v1601
        %1604 = vset.pattern.permute.xlu0 1
        %1605 = vperm.xlu0 %1604, %v1597
        %v1606 = vpop.permute.xlu0 %1605
        %v1608 = vmul.f32 %v1171, %v1606
        %1609 = vset.pattern.permute.xlu0 2
        %1610 = vperm.xlu0 %1609, %v1597
        %v1611 = vpop.permute.xlu0 %1610
        %v1613 = vmul.f32 %v1193, %v1611
        %1614 = vset.pattern.permute.xlu0 3
        %1615 = vperm.xlu0 %1614, %v1597
        %v1616 = vpop.permute.xlu0 %1615
        %v1618 = vmul.f32 %v1215, %v1616
        %1619 = vset.pattern.permute.xlu0 4
        %1620 = vperm.xlu0 %1619, %v1597
        %v1621 = vpop.permute.xlu0 %1620
        %v1623 = vmul.f32 %v1237, %v1621
        %v1624 = vadd.f32 %v1603, %v1608
        %v1625 = vmax.f32 %v1603, %v1608
        %v1626 = vadd.f32 %v1624, %v1613
        %v1627 = vmax.f32 %v1625, %v1613
        %v1628 = vadd.f32 %v1626, %v1618
        %v1629 = vmax.f32 %v1627, %v1618
        %v1630 = vadd.f32 %v1628, %v1623
        %v1631 = vmax.f32 %v1629, %v1623
        %v1632 = vmul.f32 %v1630, 0.2
        %v1633 = vld [vmem:[%s8] sm:$0xff]
        %v1634 = vld [vmem:[%s8 + $0x8] sm:$0xff]
        %v1635 = vld [vmem:[%s8 + $0x10] sm:$0xff]
        %v1636 = vld [vmem:[%s8 + $0x18] sm:$0xff]
        %v1637 = vld [vmem:[%s8 + $0x20] sm:$0xff]
        %v1638 = vld [vmem:[%s8 + $0x28] sm:$0xff]
        %v1639 = vld [vmem:[%s8 + $0x30] sm:$0xff]
        %v1640 = vld [vmem:[%s8 + $0x38] sm:$0x3f]
        %v1641 = vld [vmem:[#allocation15] sm:$0xff]
        %v1642 = vld [vmem:[#allocation15 + $0x8] sm:$0xff]
        %v1643 = vld [vmem:[#allocation15 + $0x10] sm:$0xff]
        %v1644 = vld [vmem:[#allocation15 + $0x18] sm:$0xff]
        %v1646 = vsel %vm1058, %v1632, 0
        %vm1648 = vcmask 1045504
        %v1650 = vsel %vm1648, %v1640, 0
        %1652 = vmatprep.subr.mxu0 0.0
        %1653 = vmatpush1.msra.mxu0 %v1633
        %1654 = vmatprep.subr.mxu0 0.0
        %1655 = vmatpush1.msra.mxu0 %v1634
        %1656 = vmatprep.subr.mxu0 0.0
        %1657 = vmatpush1.msra.mxu0 %v1635
        %1658 = vmatprep.subr.mxu0 0.0
        %1659 = vmatpush1.msra.mxu0 %v1636
        %1660 = vmatprep.subr.mxu0 0.0
        %1661 = vmatpush1.msra.mxu0 %v1637
        %1662 = vmatprep.subr.mxu0 0.0
        %1663 = vmatpush1.msra.mxu0 %v1638
        %1664 = vmatprep.subr.mxu0 0.0
        %1665 = vmatpush1.msra.mxu0 %v1639
        %1666 = vmatprep.subr.mxu0 0.0
        %1667 = vmatpush1.msra.mxu0 %v1650
        %1668 = vmatprep.subr.mxu0 0.0
        %1669 = vmatpush1.msra.mxu0 0.0
        %1670 = vmatprep.subr.mxu0 0.0
        %1671 = vmatpush1.msra.mxu0 0.0
        %1672 = vmatprep.subr.mxu0 0.0
        %1673 = vmatpush1.msra.mxu0 0.0
        %1674 = vmatprep.subr.mxu0 0.0
        %1675 = vmatpush1.msra.mxu0 0.0
        %1676 = vmatprep.subr.mxu0 0.0
        %1677 = vmatpush1.msra.mxu0 0.0
        %1678 = vmatprep.subr.mxu0 0.0
        %1679 = vmatpush1.msra.mxu0 0.0
        %1680 = vmatprep.subr.mxu0 0.0
        %1681 = vmatpush1.msra.mxu0 0.0
        %1682 = vmatprep.subr.mxu0 0.0
        %1683 = vmatpush1.msra.mxu0 0.0
        %1684 = vmatprep.subr.mxu0 0.0
        %1685 = vmatpush1.msra.mxu0 0.0
        %1686 = vmatprep.subr.mxu0 0.0
        %1687 = vmatpush1.msra.mxu0 0.0
        %1688 = vmatprep.subr.mxu0 0.0
        %1689 = vmatpush1.msra.mxu0 0.0
        %1690 = vmatprep.subr.mxu0 0.0
        %1691 = vmatpush1.msra.mxu0 0.0
        %1692 = vmatprep.subr.mxu0 0.0
        %1693 = vmatpush1.msra.mxu0 0.0
        %1694 = vmatprep.subr.mxu0 0.0
        %1695 = vmatpush1.msra.mxu0 0.0
        %1696 = vmatprep.subr.mxu0 0.0
        %1697 = vmatpush1.msra.mxu0 0.0
        %1698 = vmatprep.subr.mxu0 0.0
        %1699 = vmatpush1.msra.mxu0 0.0
        %1700 = vmatprep.subr.mxu0 0.0
        %1701 = vmatpush1.msra.mxu0 0.0
        %1702 = vmatprep.subr.mxu0 0.0
        %1703 = vmatpush1.msra.mxu0 0.0
        %1704 = vmatprep.subr.mxu0 0.0
        %1705 = vmatpush1.msra.mxu0 0.0
        %1706 = vmatprep.subr.mxu0 0.0
        %1707 = vmatpush1.msra.mxu0 0.0
        %1708 = vmatprep.subr.mxu0 0.0
        %1709 = vmatpush1.msra.mxu0 0.0
        %1710 = vmatprep.subr.mxu0 0.0
        %1711 = vmatpush1.msra.mxu0 0.0
        %1712 = vmatprep.subr.mxu0 0.0
        %1713 = vmatpush1.msra.mxu0 0.0
        %1714 = vmatprep.subr.mxu0 0.0
        %1715 = vmatpush1.msra.mxu0 0.0
        %1716 = vmatprep.mubr.f32.mxu0 0.0
        %1717 = vmatmul.mubr.f32.gmra.mrb[0].mxu0 %v1646
        %v1718 = vpop.f32.mrb[0].mxu0
        %v1719 = vadd.f32 0.0, %v1718
        %v1720 = vpop.f32.mrb[0].mxu0
        %1721 = vdwg.mxu0
        %v1722 = vmax.f32 %v1719, 0.0
        %v1724 = vsel %vm1058, %v1631, 0
        %1726 = vmatprep.subr.mxu0 0.0
        %1727 = vmatpush1.msra.mxu0 %v1633
        %1728 = vmatprep.subr.mxu0 0.0
        %1729 = vmatpush1.msra.mxu0 %v1634
        %1730 = vmatprep.subr.mxu0 0.0
        %1731 = vmatpush1.msra.mxu0 %v1635
        %1732 = vmatprep.subr.mxu0 0.0
        %1733 = vmatpush1.msra.mxu0 %v1636
        %1734 = vmatprep.subr.mxu0 0.0
        %1735 = vmatpush1.msra.mxu0 %v1637
        %1736 = vmatprep.subr.mxu0 0.0
        %1737 = vmatpush1.msra.mxu0 %v1638
        %1738 = vmatprep.subr.mxu0 0.0
        %1739 = vmatpush1.msra.mxu0 %v1639
        %1740 = vmatprep.subr.mxu0 0.0
        %1741 = vmatpush1.msra.mxu0 %v1650
        %1742 = vmatprep.subr.mxu0 0.0
        %1743 = vmatpush1.msra.mxu0 0.0
        %1744 = vmatprep.subr.mxu0 0.0
        %1745 = vmatpush1.msra.mxu0 0.0
        %1746 = vmatprep.subr.mxu0 0.0
        %1747 = vmatpush1.msra.mxu0 0.0
        %1748 = vmatprep.subr.mxu0 0.0
        %1749 = vmatpush1.msra.mxu0 0.0
        %1750 = vmatprep.subr.mxu0 0.0
        %1751 = vmatpush1.msra.mxu0 0.0
        %1752 = vmatprep.subr.mxu0 0.0
        %1753 = vmatpush1.msra.mxu0 0.0
        %1754 = vmatprep.subr.mxu0 0.0
        %1755 = vmatpush1.msra.mxu0 0.0
        %1756 = vmatprep.subr.mxu0 0.0
        %1757 = vmatpush1.msra.mxu0 0.0
        %1758 = vmatprep.subr.mxu0 0.0
        %1759 = vmatpush1.msra.mxu0 0.0
        %1760 = vmatprep.subr.mxu0 0.0
        %1761 = vmatpush1.msra.mxu0 0.0
        %1762 = vmatprep.subr.mxu0 0.0
        %1763 = vmatpush1.msra.mxu0 0.0
        %1764 = vmatprep.subr.mxu0 0.0
        %1765 = vmatpush1.msra.mxu0 0.0
        %1766 = vmatprep.subr.mxu0 0.0
        %1767 = vmatpush1.msra.mxu0 0.0
        %1768 = vmatprep.subr.mxu0 0.0
        %1769 = vmatpush1.msra.mxu0 0.0
        %1770 = vmatprep.subr.mxu0 0.0
        %1771 = vmatpush1.msra.mxu0 0.0
        %1772 = vmatprep.subr.mxu0 0.0
        %1773 = vmatpush1.msra.mxu0 0.0
        %1774 = vmatprep.subr.mxu0 0.0
        %1775 = vmatpush1.msra.mxu0 0.0
        %1776 = vmatprep.subr.mxu0 0.0
        %1777 = vmatpush1.msra.mxu0 0.0
        %1778 = vmatprep.subr.mxu0 0.0
        %1779 = vmatpush1.msra.mxu0 0.0
        %1780 = vmatprep.subr.mxu0 0.0
        %1781 = vmatpush1.msra.mxu0 0.0
        %1782 = vmatprep.subr.mxu0 0.0
        %1783 = vmatpush1.msra.mxu0 0.0
        %1784 = vmatprep.subr.mxu0 0.0
        %1785 = vmatpush1.msra.mxu0 0.0
        %1786 = vmatprep.subr.mxu0 0.0
        %1787 = vmatpush1.msra.mxu0 0.0
        %1788 = vmatprep.subr.mxu0 0.0
        %1789 = vmatpush1.msra.mxu0 0.0
        %1790 = vmatprep.mubr.f32.mxu0 0.0
        %1791 = vmatmul.mubr.f32.gmra.mrb[0].mxu0 %v1724
        %v1792 = vpop.f32.mrb[0].mxu0
        %v1793 = vadd.f32 0.0, %v1792
        %v1794 = vpop.f32.mrb[0].mxu0
        %1795 = vdwg.mxu0
        %v1796 = vmax.f32 %v1793, 0.0
        %v1798 = vsel %vm1444, %v1796, 0
        %1800 = vmatprep.subr.mxu0 0.0
        %1801 = vmatpush1.msra.mxu0 %v1641
        %1802 = vmatprep.subr.mxu0 0.0
        %1803 = vmatpush1.msra.mxu0 %v1642
        %1804 = vmatprep.subr.mxu0 0.0
        %1805 = vmatpush1.msra.mxu0 %v1643
        %1806 = vmatprep.subr.mxu0 0.0
        %1807 = vmatpush1.msra.mxu0 %v1644
        %1808 = vmatprep.subr.mxu0 0.0
        %1809 = vmatpush1.msra.mxu0 0.0
        %1810 = vmatprep.subr.mxu0 0.0
        %1811 = vmatpush1.msra.mxu0 0.0
        %1812 = vmatprep.subr.mxu0 0.0
        %1813 = vmatpush1.msra.mxu0 0.0
        %1814 = vmatprep.subr.mxu0 0.0
        %1815 = vmatpush1.msra.mxu0 0.0
        %1816 = vmatprep.subr.mxu0 0.0
        %1817 = vmatpush1.msra.mxu0 0.0
        %1818 = vmatprep.subr.mxu0 0.0
        %1819 = vmatpush1.msra.mxu0 0.0
        %1820 = vmatprep.subr.mxu0 0.0
        %1821 = vmatpush1.msra.mxu0 0.0
        %1822 = vmatprep.subr.mxu0 0.0
        %1823 = vmatpush1.msra.mxu0 0.0
        %1824 = vmatprep.subr.mxu0 0.0
        %1825 = vmatpush1.msra.mxu0 0.0
        %1826 = vmatprep.subr.mxu0 0.0
        %1827 = vmatpush1.msra.mxu0 0.0
        %1828 = vmatprep.subr.mxu0 0.0
        %1829 = vmatpush1.msra.mxu0 0.0
        %1830 = vmatprep.subr.mxu0 0.0
        %1831 = vmatpush1.msra.mxu0 0.0
        %1832 = vmatprep.subr.mxu0 0.0
        %1833 = vmatpush1.msra.mxu0 0.0
        %1834 = vmatprep.subr.mxu0 0.0
        %1835 = vmatpush1.msra.mxu0 0.0
        %1836 = vmatprep.subr.mxu0 0.0
        %1837 = vmatpush1.msra.mxu0 0.0
        %1838 = vmatprep.subr.mxu0 0.0
        %1839 = vmatpush1.msra.mxu0 0.0
        %1840 = vmatprep.subr.mxu0 0.0
        %1841 = vmatpush1.msra.mxu0 0.0
        %1842 = vmatprep.subr.mxu0 0.0
        %1843 = vmatpush1.msra.mxu0 0.0
        %1844 = vmatprep.subr.mxu0 0.0
        %1845 = vmatpush1.msra.mxu0 0.0
        %1846 = vmatprep.subr.mxu0 0.0
        %1847 = vmatpush1.msra.mxu0 0.0
        %1848 = vmatprep.subr.mxu0 0.0
        %1849 = vmatpush1.msra.mxu0 0.0
        %1850 = vmatprep.subr.mxu0 0.0
        %1851 = vmatpush1.msra.mxu0 0.0
        %1852 = vmatprep.subr.mxu0 0.0
        %1853 = vmatpush1.msra.mxu0 0.0
        %1854 = vmatprep.subr.mxu0 0.0
        %1855 = vmatpush1.msra.mxu0 0.0
        %1856 = vmatprep.subr.mxu0 0.0
        %1857 = vmatpush1.msra.mxu0 0.0
        %1858 = vmatprep.subr.mxu0 0.0
        %1859 = vmatpush1.msra.mxu0 0.0
        %1860 = vmatprep.subr.mxu0 0.0
        %1861 = vmatpush1.msra.mxu0 0.0
        %1862 = vmatprep.subr.mxu0 0.0
        %1863 = vmatpush1.msra.mxu0 0.0
        %1864 = vmatprep.mubr.f32.mxu0 0.0
        %1865 = vmatmul.mubr.f32.gmra.mrb[0].mxu0 %v1798
        %v1866 = vpop.f32.mrb[0].mxu0
        %v1867 = vadd.f32 0.0, %v1866
        %v1868 = vpop.f32.mrb[0].mxu0
        %1869 = vdwg.mxu0
        %v1871 = vsel %vm1444, %v1722, 0
        %1873 = vmatprep.subr.mxu0 0.0
        %1874 = vmatpush1.msra.mxu0 %v1641
        %1875 = vmatprep.subr.mxu0 0.0
        %1876 = vmatpush1.msra.mxu0 %v1642
        %1877 = vmatprep.subr.mxu0 0.0
        %1878 = vmatpush1.msra.mxu0 %v1643
        %1879 = vmatprep.subr.mxu0 0.0
        %1880 = vmatpush1.msra.mxu0 %v1644
        %1881 = vmatprep.subr.mxu0 0.0
        %1882 = vmatpush1.msra.mxu0 0.0
        %1883 = vmatprep.subr.mxu0 0.0
        %1884 = vmatpush1.msra.mxu0 0.0
        %1885 = vmatprep.subr.mxu0 0.0
        %1886 = vmatpush1.msra.mxu0 0.0
        %1887 = vmatprep.subr.mxu0 0.0
        %1888 = vmatpush1.msra.mxu0 0.0
        %1889 = vmatprep.subr.mxu0 0.0
        %1890 = vmatpush1.msra.mxu0 0.0
        %1891 = vmatprep.subr.mxu0 0.0
        %1892 = vmatpush1.msra.mxu0 0.0
        %1893 = vmatprep.subr.mxu0 0.0
        %1894 = vmatpush1.msra.mxu0 0.0
        %1895 = vmatprep.subr.mxu0 0.0
        %1896 = vmatpush1.msra.mxu0 0.0
        %1897 = vmatprep.subr.mxu0 0.0
        %1898 = vmatpush1.msra.mxu0 0.0
        %1899 = vmatprep.subr.mxu0 0.0
        %1900 = vmatpush1.msra.mxu0 0.0
        %1901 = vmatprep.subr.mxu0 0.0
        %1902 = vmatpush1.msra.mxu0 0.0
        %1903 = vmatprep.subr.mxu0 0.0
        %1904 = vmatpush1.msra.mxu0 0.0
        %1905 = vmatprep.subr.mxu0 0.0
        %1906 = vmatpush1.msra.mxu0 0.0
        %1907 = vmatprep.subr.mxu0 0.0
        %1908 = vmatpush1.msra.mxu0 0.0
        %1909 = vmatprep.subr.mxu0 0.0
        %1910 = vmatpush1.msra.mxu0 0.0
        %1911 = vmatprep.subr.mxu0 0.0
        %1912 = vmatpush1.msra.mxu0 0.0
        %1913 = vmatprep.subr.mxu0 0.0
        %1914 = vmatpush1.msra.mxu0 0.0
        %1915 = vmatprep.subr.mxu0 0.0
        %1916 = vmatpush1.msra.mxu0 0.0
        %1917 = vmatprep.subr.mxu0 0.0
        %1918 = vmatpush1.msra.mxu0 0.0
        %1919 = vmatprep.subr.mxu0 0.0
        %1920 = vmatpush1.msra.mxu0 0.0
        %1921 = vmatprep.subr.mxu0 0.0
        %1922 = vmatpush1.msra.mxu0 0.0
        %1923 = vmatprep.subr.mxu0 0.0
        %1924 = vmatpush1.msra.mxu0 0.0
        %1925 = vmatprep.subr.mxu0 0.0
        %1926 = vmatpush1.msra.mxu0 0.0
        %1927 = vmatprep.subr.mxu0 0.0
        %1928 = vmatpush1.msra.mxu0 0.0
        %1929 = vmatprep.subr.mxu0 0.0
        %1930 = vmatpush1.msra.mxu0 0.0
        %1931 = vmatprep.subr.mxu0 0.0
        %1932 = vmatpush1.msra.mxu0 0.0
        %1933 = vmatprep.subr.mxu0 0.0
        %1934 = vmatpush1.msra.mxu0 0.0
        %1935 = vmatprep.subr.mxu0 0.0
        %1936 = vmatpush1.msra.mxu0 0.0
        %1937 = vmatprep.mubr.f32.mxu0 0.0
        %1938 = vmatmul.mubr.f32.gmra.mrb[0].mxu0 %v1871
        %v1939 = vpop.f32.mrb[0].mxu0
        %v1940 = vadd.f32 %v1867, %v1939
        %v1941 = vpop.f32.mrb[0].mxu0
        %1942 = vdwg.mxu0
        %v1943 = vxor.u32 %v1940, 2147483648
        %v1944 = vmul.f32 %v1943, 1.442695
        %v1945 = vpow.pop %v1944
        %v1946 = vadd.f32 %v1945, 1.0
        %v1947 = vrcp.pop %v1946
        %v1948 = vmul.f32 1.0, %v1947
        %v1949 = vadd.f32 %v1948, 1.0
        %v1950 = vmul.f32 %v1603, %v1949
        %v1951 = vmul.f32 %v1608, %v1949
        %v1952 = vmul.f32 %v1613, %v1949
        %v1953 = vmul.f32 %v1618, %v1949
        %v1954 = vmul.f32 %v1623, %v1949
        %v1955 = vld [vmem:[%s11] sm:$0xff]
        %v1956 = vld [vmem:[%s11 + $0x8] sm:$0xff]
        %v1957 = vld [vmem:[%s11 + $0x10] sm:$0xff]
        %v1958 = vld [vmem:[%s11 + $0x18] sm:$0xff]
        %v1959 = vld [vmem:[%s11 + $0x20] sm:$0xff]
        %v1960 = vld [vmem:[%s11 + $0x28] sm:$0xff]
        %v1961 = vld [vmem:[%s11 + $0x30] sm:$0xff]
        %v1962 = vld [vmem:[%s11 + $0x38] sm:$0xff]
        %v1963 = vld [vmem:[%s11 + $0x40] sm:$0xff]
        %v1964 = vld [vmem:[%s11 + $0x48] sm:$0x1]
        %v1965 = vld [vmem:[%s12] sm:$0xff]
        %v1966 = vld [vmem:[%s12 + $0x8] sm:$0xff]
        %v1967 = vld [vmem:[#allocation16] sm:$0xf]
        %v1968 = vld [vmem:[#allocation16 + $0x4] sm:$0xf]
        %v1969 = vld [vmem:[#allocation16 + $0x8] sm:$0xf]
        %v1970 = vld [vmem:[#allocation16 + $0xc] sm:$0xf]
        %v1971 = vld [vmem:[#allocation16 + $0x10] sm:$0xf]
        %v1972 = vld [vmem:[#allocation16 + $0x14] sm:$0xf]
        %v1973 = vld [vmem:[#allocation16 + $0x18] sm:$0xf]
        %v1974 = vld [vmem:[#allocation16 + $0x1c] sm:$0x7]
        %v1975 = vpack.c.bf16 %v1171, %v1149
        %v1976 = vpack.c.bf16 %v1215, %v1193
        %v1977 = vpack.c.bf16 %v1237, %v1237
        %v1986 = vunpack.c.l.b16 %v1967
        %v1987 = vunpack.c.l.b16 %v1968
        %v1988 = vunpack.c.l.b16 %v1969
        %v1989 = vunpack.c.l.b16 %v1970
        %v1990 = vunpack.c.l.b16 %v1971
        %v1991 = vunpack.c.l.b16 %v1972
        %v1992 = vunpack.c.l.b16 %v1973
        %v1993 = vunpack.c.l.b16 %v1974
        %v1994 = vpack.c.b16 %v1987, %v1986
        %v1995 = vpack.c.b16 %v1989, %v1988
        %v1996 = vpack.c.b16 %v1991, %v1990
        %v1997 = vpack.c.b16 %v1993, %v1992
        %v2002 = vsel %vm1058, %v1975, 0
        %v2005 = vsel %vm1058, %v1976, 0
        %v2008 = vsel %vm1058, %v1977, 0
        %v2011 = vsel %vm1068, %v1997, 0
        %2013 = vmatprep.subr.bf16.mxu0 0
        %2014 = vmatpush1.bf16.msra.mxu0 %v1994
        %2015 = vmatprep.subr.bf16.mxu0 0
        %2016 = vmatpush1.bf16.msra.mxu0 %v1995
        %2017 = vmatprep.subr.bf16.mxu0 0
        %2018 = vmatpush1.bf16.msra.mxu0 %v1996
        %2019 = vmatprep.subr.bf16.mxu0 0
        %2020 = vmatpush1.bf16.msra.mxu0 %v2011
        %2021 = vmatprep.subr.bf16.mxu0 0
        %2022 = vmatpush1.bf16.msra.mxu0 0
        %2023 = vmatprep.subr.bf16.mxu0 0
        %2024 = vmatpush1.bf16.msra.mxu0 0
        %2025 = vmatprep.subr.bf16.mxu0 0
        %2026 = vmatpush1.bf16.msra.mxu0 0
        %2027 = vmatprep.subr.bf16.mxu0 0
        %2028 = vmatpush1.bf16.msra.mxu0 0
        %2029 = vmatprep.subr.bf16.mxu0 0
        %2030 = vmatpush1.bf16.msra.mxu0 0
        %2031 = vmatprep.subr.bf16.mxu0 0
        %2032 = vmatpush1.bf16.msra.mxu0 0
        %2033 = vmatprep.subr.bf16.mxu0 0
        %2034 = vmatpush1.bf16.msra.mxu0 0
        %2035 = vmatprep.subr.bf16.mxu0 0
        %2036 = vmatpush1.bf16.msra.mxu0 0
        %2037 = vmatprep.subr.bf16.mxu0 0
        %2038 = vmatpush1.bf16.msra.mxu0 0
        %2039 = vmatprep.subr.bf16.mxu0 0
        %2040 = vmatpush1.bf16.msra.mxu0 0
        %2041 = vmatprep.subr.bf16.mxu0 0
        %2042 = vmatpush1.bf16.msra.mxu0 0
        %2043 = vmatprep.subr.bf16.mxu0 0
        %2044 = vmatpush1.bf16.msra.mxu0 0
        %2045 = vmatprep.mubr.bf16.mxu0 0
        %2046 = vmatmul.mubr.bf16.gmra.mrb[0].mxu0 %v2002
        %v2047 = vpop.f32.mrb[0].mxu0
        %v2048 = vadd.f32 0.0, %v2047
        %v2049 = vpop.f32.mrb[0].mxu0
        %v2050 = vpop.f32.mrb[0].mxu0
        %v2051 = vadd.f32 0.0, %v2050
        %v2052 = vpop.f32.mrb[0].mxu0
        %2053 = vmatprep.mubr.bf16.mxu0 0
        %2054 = vmatmul.mubr.bf16.gmra.mrb[0].mxu0 %v2005
        %v2055 = vpop.f32.mrb[0].mxu0
        %v2056 = vadd.f32 0.0, %v2055
        %v2057 = vpop.f32.mrb[0].mxu0
        %v2058 = vpop.f32.mrb[0].mxu0
        %v2059 = vadd.f32 0.0, %v2058
        %v2060 = vpop.f32.mrb[0].mxu0
        %2061 = vmatprep.mubr.bf16.mxu0 0
        %2062 = vmatmul.mubr.bf16.gmra.mrb[0].mxu0 %v2008
        %v2063 = vpop.f32.mrb[0].mxu0
        %v2064 = vadd.f32 0.0, %v2063
        %v2065 = vpop.f32.mrb[0].mxu0
        %v2066 = vpop.f32.mrb[0].mxu0
        %v2067 = vpop.f32.mrb[0].mxu0
        %2068 = vdwg.mxu0
        %vm2069 = vcmask 596992
        %v2071 = vsel %vm2069, %v2048, 0
        %v2074 = vsel %vm2069, %v2051, 0
        %v2077 = vsel %vm2069, %v2056, 0
        %v2080 = vsel %vm2069, %v2059, 0
        %v2083 = vsel %vm2069, %v2064, 0
        %vm2085 = vcmask 1040384
        %v2087 = vsel %vm2085, %v1964, 0
        %2089 = vmatprep.subr.mxu0 0.0
        %2090 = vmatpush1.msra.mxu0 %v1955
        %2091 = vmatprep.subr.mxu0 0.0
        %2092 = vmatpush1.msra.mxu0 %v1956
        %2093 = vmatprep.subr.mxu0 0.0
        %2094 = vmatpush1.msra.mxu0 %v1957
        %2095 = vmatprep.subr.mxu0 0.0
        %2096 = vmatpush1.msra.mxu0 %v1958
        %2097 = vmatprep.subr.mxu0 0.0
        %2098 = vmatpush1.msra.mxu0 %v1959
        %2099 = vmatprep.subr.mxu0 0.0
        %2100 = vmatpush1.msra.mxu0 %v1960
        %2101 = vmatprep.subr.mxu0 0.0
        %2102 = vmatpush1.msra.mxu0 %v1961
        %2103 = vmatprep.subr.mxu0 0.0
        %2104 = vmatpush1.msra.mxu0 %v1962
        %2105 = vmatprep.subr.mxu0 0.0
        %2106 = vmatpush1.msra.mxu0 %v1963
        %2107 = vmatprep.subr.mxu0 0.0
        %2108 = vmatpush1.msra.mxu0 %v2087
        %2109 = vmatprep.subr.mxu0 0.0
        %2110 = vmatpush1.msra.mxu0 0.0
        %2111 = vmatprep.subr.mxu0 0.0
        %2112 = vmatpush1.msra.mxu0 0.0
        %2113 = vmatprep.subr.mxu0 0.0
        %2114 = vmatpush1.msra.mxu0 0.0
        %2115 = vmatprep.subr.mxu0 0.0
        %2116 = vmatpush1.msra.mxu0 0.0
        %2117 = vmatprep.subr.mxu0 0.0
        %2118 = vmatpush1.msra.mxu0 0.0
        %2119 = vmatprep.subr.mxu0 0.0
        %2120 = vmatpush1.msra.mxu0 0.0
        %2121 = vmatprep.subr.mxu0 0.0
        %2122 = vmatpush1.msra.mxu0 0.0
        %2123 = vmatprep.subr.mxu0 0.0
        %2124 = vmatpush1.msra.mxu0 0.0
        %2125 = vmatprep.subr.mxu0 0.0
        %2126 = vmatpush1.msra.mxu0 0.0
        %2127 = vmatprep.subr.mxu0 0.0
        %2128 = vmatpush1.msra.mxu0 0.0
        %2129 = vmatprep.subr.mxu0 0.0
        %2130 = vmatpush1.msra.mxu0 0.0
        %2131 = vmatprep.subr.mxu0 0.0
        %2132 = vmatpush1.msra.mxu0 0.0
        %2133 = vmatprep.subr.mxu0 0.0
        %2134 = vmatpush1.msra.mxu0 0.0
        %2135 = vmatprep.subr.mxu0 0.0
        %2136 = vmatpush1.msra.mxu0 0.0
        %2137 = vmatprep.subr.mxu0 0.0
        %2138 = vmatpush1.msra.mxu0 0.0
        %2139 = vmatprep.subr.mxu0 0.0
        %2140 = vmatpush1.msra.mxu0 0.0
        %2141 = vmatprep.subr.mxu0 0.0
        %2142 = vmatpush1.msra.mxu0 0.0
        %2143 = vmatprep.subr.mxu0 0.0
        %2144 = vmatpush1.msra.mxu0 0.0
        %2145 = vmatprep.subr.mxu0 0.0
        %2146 = vmatpush1.msra.mxu0 0.0
        %2147 = vmatprep.subr.mxu0 0.0
        %2148 = vmatpush1.msra.mxu0 0.0
        %2149 = vmatprep.subr.mxu0 0.0
        %2150 = vmatpush1.msra.mxu0 0.0
        %2151 = vmatprep.subr.mxu0 0.0
        %2152 = vmatpush1.msra.mxu0 0.0
        %2153 = vmatprep.mubr.f32.mxu0 0.0
        %2154 = vmatmul.mubr.f32.gmra.mrb[0].mxu0 %v2071
        %v2155 = vpop.f32.mrb[0].mxu0
        %v2156 = vadd.f32 0.0, %v2155
        %v2157 = vpop.f32.mrb[0].mxu0
        %2158 = vmatprep.mubr.f32.mxu0 0.0
        %2159 = vmatmul.mubr.f32.gmra.mrb[0].mxu0 %v2074
        %v2160 = vpop.f32.mrb[0].mxu0
        %v2161 = vadd.f32 0.0, %v2160
        %v2162 = vpop.f32.mrb[0].mxu0
        %2163 = vmatprep.mubr.f32.mxu0 0.0
        %2164 = vmatmul.mubr.f32.gmra.mrb[0].mxu0 %v2077
        %v2165 = vpop.f32.mrb[0].mxu0
        %v2166 = vadd.f32 0.0, %v2165
        %v2167 = vpop.f32.mrb[0].mxu0
        %2168 = vmatprep.mubr.f32.mxu0 0.0
        %2169 = vmatmul.mubr.f32.gmra.mrb[0].mxu0 %v2080
        %v2170 = vpop.f32.mrb[0].mxu0
        %v2171 = vadd.f32 0.0, %v2170
        %v2172 = vpop.f32.mrb[0].mxu0
        %2173 = vmatprep.mubr.f32.mxu0 0.0
        %2174 = vmatmul.mubr.f32.gmra.mrb[0].mxu0 %v2083
        %v2175 = vpop.f32.mrb[0].mxu0
        %v2176 = vadd.f32 0.0, %v2175
        %v2177 = vpop.f32.mrb[0].mxu0
        %2178 = vdwg.mxu0
        %vm2179 = vcmask 130048
        %v2181 = vsel %vm2179, %v2156, 0
        %v2184 = vsel %vm2179, %v2161, 0
        %v2187 = vsel %vm2179, %v2166, 0
        %v2190 = vsel %vm2179, %v2171, 0
        %v2193 = vsel %vm2179, %v2176, 0
        %2195 = vmatprep.subr.mxu0 0.0
        %2196 = vmatpush1.msra.mxu0 %v1965
        %2197 = vmatprep.subr.mxu0 0.0
        %2198 = vmatpush1.msra.mxu0 %v1966
        %2199 = vmatprep.subr.mxu0 0.0
        %2200 = vmatpush1.msra.mxu0 0.0
        %2201 = vmatprep.subr.mxu0 0.0
        %2202 = vmatpush1.msra.mxu0 0.0
        %2203 = vmatprep.subr.mxu0 0.0
        %2204 = vmatpush1.msra.mxu0 0.0
        %2205 = vmatprep.subr.mxu0 0.0
        %2206 = vmatpush1.msra.mxu0 0.0
        %2207 = vmatprep.subr.mxu0 0.0
        %2208 = vmatpush1.msra.mxu0 0.0
        %2209 = vmatprep.subr.mxu0 0.0
        %2210 = vmatpush1.msra.mxu0 0.0
        %2211 = vmatprep.subr.mxu0 0.0
        %2212 = vmatpush1.msra.mxu0 0.0
        %2213 = vmatprep.subr.mxu0 0.0
        %2214 = vmatpush1.msra.mxu0 0.0
        %2215 = vmatprep.subr.mxu0 0.0
        %2216 = vmatpush1.msra.mxu0 0.0
        %2217 = vmatprep.subr.mxu0 0.0
        %2218 = vmatpush1.msra.mxu0 0.0
        %2219 = vmatprep.subr.mxu0 0.0
        %2220 = vmatpush1.msra.mxu0 0.0
        %2221 = vmatprep.subr.mxu0 0.0
        %2222 = vmatpush1.msra.mxu0 0.0
        %2223 = vmatprep.subr.mxu0 0.0
        %2224 = vmatpush1.msra.mxu0 0.0
        %2225 = vmatprep.subr.mxu0 0.0
        %2226 = vmatpush1.msra.mxu0 0.0
        %2227 = vmatprep.subr.mxu0 0.0
        %2228 = vmatpush1.msra.mxu0 0.0
        %2229 = vmatprep.subr.mxu0 0.0
        %2230 = vmatpush1.msra.mxu0 0.0
        %2231 = vmatprep.subr.mxu0 0.0
        %2232 = vmatpush1.msra.mxu0 0.0
        %2233 = vmatprep.subr.mxu0 0.0
        %2234 = vmatpush1.msra.mxu0 0.0
        %2235 = vmatprep.subr.mxu0 0.0
        %2236 = vmatpush1.msra.mxu0 0.0
        %2237 = vmatprep.subr.mxu0 0.0
        %2238 = vmatpush1.msra.mxu0 0.0
        %2239 = vmatprep.subr.mxu0 0.0
        %2240 = vmatpush1.msra.mxu0 0.0
        %2241 = vmatprep.subr.mxu0 0.0
        %2242 = vmatpush1.msra.mxu0 0.0
        %2243 = vmatprep.subr.mxu0 0.0
        %2244 = vmatpush1.msra.mxu0 0.0
        %2245 = vmatprep.subr.mxu0 0.0
        %2246 = vmatpush1.msra.mxu0 0.0
        %2247 = vmatprep.subr.mxu0 0.0
        %2248 = vmatpush1.msra.mxu0 0.0
        %2249 = vmatprep.subr.mxu0 0.0
        %2250 = vmatpush1.msra.mxu0 0.0
        %2251 = vmatprep.subr.mxu0 0.0
        %2252 = vmatpush1.msra.mxu0 0.0
        %2253 = vmatprep.subr.mxu0 0.0
        %2254 = vmatpush1.msra.mxu0 0.0
        %2255 = vmatprep.subr.mxu0 0.0
        %2256 = vmatpush1.msra.mxu0 0.0
        %2257 = vmatprep.subr.mxu0 0.0
        %2258 = vmatpush1.msra.mxu0 0.0
        %2259 = vmatprep.mubr.f32.mxu0 0.0
        %2260 = vmatmul.mubr.f32.gmra.mrb[0].mxu0 %v2181
        %v2261 = vpop.f32.mrb[0].mxu0
        %v2262 = vadd.f32 0.0, %v2261
        %v2263 = vpop.f32.mrb[0].mxu0
        %2264 = vmatprep.mubr.f32.mxu0 0.0
        %2265 = vmatmul.mubr.f32.gmra.mrb[0].mxu0 %v2184
        %v2266 = vpop.f32.mrb[0].mxu0
        %v2267 = vadd.f32 0.0, %v2266
        %v2268 = vpop.f32.mrb[0].mxu0
        %2269 = vmatprep.mubr.f32.mxu0 0.0
        %2270 = vmatmul.mubr.f32.gmra.mrb[0].mxu0 %v2187
        %v2271 = vpop.f32.mrb[0].mxu0
        %v2272 = vadd.f32 0.0, %v2271
        %v2273 = vpop.f32.mrb[0].mxu0
        %2274 = vmatprep.mubr.f32.mxu0 0.0
        %2275 = vmatmul.mubr.f32.gmra.mrb[0].mxu0 %v2190
        %v2276 = vpop.f32.mrb[0].mxu0
        %v2277 = vadd.f32 0.0, %v2276
        %v2278 = vpop.f32.mrb[0].mxu0
        %2279 = vmatprep.mubr.f32.mxu0 0.0
        %2280 = vmatmul.mubr.f32.gmra.mrb[0].mxu0 %v2193
        %v2281 = vpop.f32.mrb[0].mxu0
        %v2282 = vadd.f32 0.0, %v2281
        %v2283 = vpop.f32.mrb[0].mxu0
        %2284 = vdwg.mxu0
        %s2285 = sld [smem:[#allocation9]]
        %v2286 = vstv %s2285
        %v2287 = vmul.f32 %v2262, %v2286
        %s2288 = sld [smem:[#allocation9 + $0x1]]
        %v2289 = vstv %s2288
        %v2290 = vmul.f32 %v2267, %v2289
        %v2291 = vadd.f32 %v2287, %v2290
        %s2292 = sld [smem:[#allocation9 + $0x2]]
        %v2293 = vstv %s2292
        %v2294 = vmul.f32 %v2272, %v2293
        %v2295 = vadd.f32 %v2291, %v2294
        %s2296 = sld [smem:[#allocation9 + $0x3]]
        %v2297 = vstv %s2296
        %v2298 = vmul.f32 %v2277, %v2297
        %v2299 = vadd.f32 %v2295, %v2298
        %s2300 = sld [smem:[#allocation9 + $0x4]]
        %v2301 = vstv %s2300
        %v2302 = vmul.f32 %v2282, %v2301
        %v2303 = vadd.f32 %v2299, %v2302
        %v2304 = vmul.f32 %v2048, %v2303
        %s2305 = sld [smem:[#allocation9 + $0x80]]
        %v2306 = vstv %s2305
        %v2307 = vmul.f32 %v2262, %v2306
        %s2308 = sld [smem:[#allocation9 + $0x81]]
        %v2309 = vstv %s2308
        %v2310 = vmul.f32 %v2267, %v2309
        %v2311 = vadd.f32 %v2307, %v2310
        %s2312 = sld [smem:[#allocation9 + $0x82]]
        %v2313 = vstv %s2312
        %v2314 = vmul.f32 %v2272, %v2313
        %v2315 = vadd.f32 %v2311, %v2314
        %s2316 = sld [smem:[#allocation9 + $0x83]]
        %v2317 = vstv %s2316
        %v2318 = vmul.f32 %v2277, %v2317
        %v2319 = vadd.f32 %v2315, %v2318
        %s2320 = sld [smem:[#allocation9 + $0x84]]
        %v2321 = vstv %s2320
        %v2322 = vmul.f32 %v2282, %v2321
        %v2323 = vadd.f32 %v2319, %v2322
        %v2324 = vmul.f32 %v2051, %v2323
        %v2325 = vadd.f32 %v2304, %v2324
        %s2326 = sld [smem:[#allocation9 + $0x100]]
        %v2327 = vstv %s2326
        %v2328 = vmul.f32 %v2262, %v2327
        %s2329 = sld [smem:[#allocation9 + $0x101]]
        %v2330 = vstv %s2329
        %v2331 = vmul.f32 %v2267, %v2330
        %v2332 = vadd.f32 %v2328, %v2331
        %s2333 = sld [smem:[#allocation9 + $0x102]]
        %v2334 = vstv %s2333
        %v2335 = vmul.f32 %v2272, %v2334
        %v2336 = vadd.f32 %v2332, %v2335
        %s2337 = sld [smem:[#allocation9 + $0x103]]
        %v2338 = vstv %s2337
        %v2339 = vmul.f32 %v2277, %v2338
        %v2340 = vadd.f32 %v2336, %v2339
        %s2341 = sld [smem:[#allocation9 + $0x104]]
        %v2342 = vstv %s2341
        %v2343 = vmul.f32 %v2282, %v2342
        %v2344 = vadd.f32 %v2340, %v2343
        %v2345 = vmul.f32 %v2056, %v2344
        %v2346 = vadd.f32 %v2325, %v2345
        %s2347 = sld [smem:[#allocation9 + $0x180]]
        %v2348 = vstv %s2347
        %v2349 = vmul.f32 %v2262, %v2348
        %s2350 = sld [smem:[#allocation9 + $0x181]]
        %v2351 = vstv %s2350
        %v2352 = vmul.f32 %v2267, %v2351
        %v2353 = vadd.f32 %v2349, %v2352
        %s2354 = sld [smem:[#allocation9 + $0x182]]
        %v2355 = vstv %s2354
        %v2356 = vmul.f32 %v2272, %v2355
        %v2357 = vadd.f32 %v2353, %v2356
        %s2358 = sld [smem:[#allocation9 + $0x183]]
        %v2359 = vstv %s2358
        %v2360 = vmul.f32 %v2277, %v2359
        %v2361 = vadd.f32 %v2357, %v2360
        %s2362 = sld [smem:[#allocation9 + $0x184]]
        %v2363 = vstv %s2362
        %v2364 = vmul.f32 %v2282, %v2363
        %v2365 = vadd.f32 %v2361, %v2364
        %v2366 = vmul.f32 %v2059, %v2365
        %v2367 = vadd.f32 %v2346, %v2366
        %s2368 = sld [smem:[#allocation9 + $0x200]]
        %v2369 = vstv %s2368
        %v2370 = vmul.f32 %v2262, %v2369
        %s2371 = sld [smem:[#allocation9 + $0x201]]
        %v2372 = vstv %s2371
        %v2373 = vmul.f32 %v2267, %v2372
        %v2374 = vadd.f32 %v2370, %v2373
        %s2375 = sld [smem:[#allocation9 + $0x202]]
        %v2376 = vstv %s2375
        %v2377 = vmul.f32 %v2272, %v2376
        %v2378 = vadd.f32 %v2374, %v2377
        %s2379 = sld [smem:[#allocation9 + $0x203]]
        %v2380 = vstv %s2379
        %v2381 = vmul.f32 %v2277, %v2380
        %v2382 = vadd.f32 %v2378, %v2381
        %s2383 = sld [smem:[#allocation9 + $0x204]]
        %v2384 = vstv %s2383
        %v2385 = vmul.f32 %v2282, %v2384
        %v2386 = vadd.f32 %v2382, %v2385
        %v2387 = vmul.f32 %v2064, %v2386
        %v2388 = vadd.f32 %v2367, %v2387
        %v2389 = vsel %vm1291, %v2388, -inf
        %2390 = vmax.xlane.f32.xlu0 %v2389
        %v2391 = vpop.xlane.xlu0 %2390
        %vm2392 = vcmask 64552
        %v2393 = vsel %vm2392, %v2388, -inf
        %2394 = vmax.xlane.f32.xlu0 %v2393
        %v2395 = vpop.xlane.xlu0 %2394
        %vm2396 = vcmask 89152
        %v2397 = vsel %vm2396, %v2388, -inf
        %2398 = vmax.xlane.f32.xlu0 %v2397
        %v2399 = vpop.xlane.xlu0 %2398
        %vm2400 = vcmask 113752
        %v2401 = vsel %vm2400, %v2388, -inf
        %2402 = vmax.xlane.f32.xlu0 %v2401
        %v2403 = vpop.xlane.xlu0 %2402
        %vm2404 = vcmask 138352
        %v2405 = vsel %vm2404, %v2388, -inf
        %2406 = vmax.xlane.f32.xlu0 %v2405
        %v2407 = vpop.xlane.xlu0 %2406
        %vm2408 = vcmask 162952
        %v2409 = vsel %vm2408, %v2388, -inf
        %2410 = vmax.xlane.f32.xlu0 %v2409
        %v2411 = vpop.xlane.xlu0 %2410
        %vm2412 = vcmask 203936
        %v2413 = vsel %vm2412, %v2388, -inf
        %2414 = vmax.xlane.f32.xlu0 %v2413
        %v2415 = vpop.xlane.xlu0 %2414
        %vm2416 = vcmask 244936
        %v2417 = vsel %vm2416, %v2388, -inf
        %2418 = vmax.xlane.f32.xlu0 %v2417
        %v2419 = vpop.xlane.xlu0 %2418
        %vm2420 = vcmask 285936
        %v2421 = vsel %vm2420, %v2388, -inf
        %2422 = vmax.xlane.f32.xlu0 %v2421
        %v2423 = vpop.xlane.xlu0 %2422
        %vm2424 = vcmask 376088
        %v2425 = vsel %vm2424, %v2388, -inf
        %2426 = vmax.xlane.f32.xlu0 %v2425
        %v2427 = vpop.xlane.xlu0 %2426
        %vm2428 = vcmask 400752
        %v2429 = vsel %vm2428, %v2388, -inf
        %2430 = vmax.xlane.f32.xlu0 %v2429
        %v2431 = vpop.xlane.xlu0 %2430
        %vm2432 = vcmask 425352
        %v2433 = vsel %vm2432, %v2388, -inf
        %2434 = vmax.xlane.f32.xlu0 %v2433
        %v2435 = vpop.xlane.xlu0 %2434
        %vm2436 = vcmask 449952
        %v2437 = vsel %vm2436, %v2388, -inf
        %2438 = vmax.xlane.f32.xlu0 %v2437
        %v2439 = vpop.xlane.xlu0 %2438
        %vm2440 = vcmask 474552
        %v2441 = vsel %vm2440, %v2388, -inf
        %2442 = vmax.xlane.f32.xlu0 %v2441
        %v2443 = vpop.xlane.xlu0 %2442
        %vm2444 = vcmask 499152
        %v2445 = vsel %vm2444, %v2388, -inf
        %2446 = vmax.xlane.f32.xlu0 %v2445
        %v2447 = vpop.xlane.xlu0 %2446
        %vm2448 = vcmask 597480
        %v2449 = vsel %vm2448, %v2388, -inf
        %2450 = vmax.xlane.f32.xlu0 %v2449
        %v2451 = vpop.xlane.xlu0 %2450
        %v2452 = vsel %vm1259, %v2391, %v2395
        %v2453 = vsel %vm1261, %v2452, %v2399
        %v2454 = vsel %vm1263, %v2453, %v2403
        %v2455 = vsel %vm1265, %v2454, %v2407
        %v2456 = vsel %vm1291, %v2455, %v2411
        %vm2457 = vcmask 48128
        %v2458 = vsel %vm2457, %v2456, %v2415
        %vm2459 = vcmask 56320
        %v2460 = vsel %vm2459, %v2458, %v2419
        %vm2461 = vcmask 64512
        %v2462 = vsel %vm2461, %v2460, %v2423
        %vm2463 = vcmask 72704
        %v2464 = vsel %vm2463, %v2462, %v2427
        %vm2465 = vcmask 80896
        %v2466 = vsel %vm2465, %v2464, %v2431
        %vm2467 = vcmask 89088
        %v2468 = vsel %vm2467, %v2466, %v2435
        %vm2469 = vcmask 97280
        %v2470 = vsel %vm2469, %v2468, %v2439
        %vm2471 = vcmask 105472
        %v2472 = vsel %vm2471, %v2470, %v2443
        %vm2473 = vcmask 113664
        %v2474 = vsel %vm2473, %v2472, %v2447
        %vm2475 = vcmask 121856
        %v2476 = vsel %vm2475, %v2474, %v2451
        %v2478 = vsel %vm2179, %v2476, 0
        %2480 = vmatprep.subr.mxu0 0.0
        %2481 = vmatpush1.msra.mxu0 %v1965
        %2482 = vmatprep.subr.mxu0 0.0
        %2483 = vmatpush1.msra.mxu0 %v1966
        %2484 = vmatprep.subr.mxu0 0.0
        %2485 = vmatpush1.msra.mxu0 0.0
        %2486 = vmatprep.subr.mxu0 0.0
        %2487 = vmatpush1.msra.mxu0 0.0
        %2488 = vmatprep.subr.mxu0 0.0
        %2489 = vmatpush1.msra.mxu0 0.0
        %2490 = vmatprep.subr.mxu0 0.0
        %2491 = vmatpush1.msra.mxu0 0.0
        %2492 = vmatprep.subr.mxu0 0.0
        %2493 = vmatpush1.msra.mxu0 0.0
        %2494 = vmatprep.subr.mxu0 0.0
        %2495 = vmatpush1.msra.mxu0 0.0
        %2496 = vmatprep.subr.mxu0 0.0
        %2497 = vmatpush1.msra.mxu0 0.0
        %2498 = vmatprep.subr.mxu0 0.0
        %2499 = vmatpush1.msra.mxu0 0.0
        %2500 = vmatprep.subr.mxu0 0.0
        %2501 = vmatpush1.msra.mxu0 0.0
        %2502 = vmatprep.subr.mxu0 0.0
        %2503 = vmatpush1.msra.mxu0 0.0
        %2504 = vmatprep.subr.mxu0 0.0
        %2505 = vmatpush1.msra.mxu0 0.0
        %2506 = vmatprep.subr.mxu0 0.0
        %2507 = vmatpush1.msra.mxu0 0.0
        %2508 = vmatprep.subr.mxu0 0.0
        %2509 = vmatpush1.msra.mxu0 0.0
        %2510 = vmatprep.subr.mxu0 0.0
        %2511 = vmatpush1.msra.mxu0 0.0
        %2512 = vmatprep.subr.mxu0 0.0
        %2513 = vmatpush1.msra.mxu0 0.0
        %2514 = vmatprep.subr.mxu0 0.0
        %2515 = vmatpush1.msra.mxu0 0.0
        %2516 = vmatprep.subr.mxu0 0.0
        %2517 = vmatpush1.msra.mxu0 0.0
        %2518 = vmatprep.subr.mxu0 0.0
        %2519 = vmatpush1.msra.mxu0 0.0
        %2520 = vmatprep.subr.mxu0 0.0
        %2521 = vmatpush1.msra.mxu0 0.0
        %2522 = vmatprep.subr.mxu0 0.0
        %2523 = vmatpush1.msra.mxu0 0.0
        %2524 = vmatprep.subr.mxu0 0.0
        %2525 = vmatpush1.msra.mxu0 0.0
        %2526 = vmatprep.subr.mxu0 0.0
        %2527 = vmatpush1.msra.mxu0 0.0
        %2528 = vmatprep.subr.mxu0 0.0
        %2529 = vmatpush1.msra.mxu0 0.0
        %2530 = vmatprep.subr.mxu0 0.0
        %2531 = vmatpush1.msra.mxu0 0.0
        %2532 = vmatprep.subr.mxu0 0.0
        %2533 = vmatpush1.msra.mxu0 0.0
        %2534 = vmatprep.subr.mxu0 0.0
        %2535 = vmatpush1.msra.mxu0 0.0
        %2536 = vmatprep.subr.mxu0 0.0
        %2537 = vmatpush1.msra.mxu0 0.0
        %2538 = vmatprep.subr.mxu0 0.0
        %2539 = vmatpush1.msra.mxu0 0.0
        %2540 = vmatprep.subr.mxu0 0.0
        %2541 = vmatpush1.msra.mxu0 0.0
        %2542 = vmatprep.subr.mxu0 0.0
        %2543 = vmatpush1.msra.mxu0 0.0
        %2544 = vmatprep.mubr.f32.mxu0 0.0
        %2545 = vmatmul.mubr.f32.gmra.mrb[0].mxu0 %v2478
        %v2546 = vpop.f32.mrb[0].mxu0
        %v2547 = vadd.f32 0.0, %v2546
        %v2548 = vpop.f32.mrb[0].mxu0
        %2549 = vdwg.mxu0
        %v2550 = vsub.f32 %v2388, %v2547
        %v2551 = vmul.f32 %v2550, 1.442695
        %v2552 = vpow.pop %v2551
        %v2554 = vsel %vm2069, %v2552, 0
        %2556 = vmatprep.subr.mxu0 0.0
        %2557 = vmatpush1.msra.mxu0 %v1955
        %2558 = vmatprep.subr.mxu0 0.0
        %2559 = vmatpush1.msra.mxu0 %v1956
        %2560 = vmatprep.subr.mxu0 0.0
        %2561 = vmatpush1.msra.mxu0 %v1957
        %2562 = vmatprep.subr.mxu0 0.0
        %2563 = vmatpush1.msra.mxu0 %v1958
        %2564 = vmatprep.subr.mxu0 0.0
        %2565 = vmatpush1.msra.mxu0 %v1959
        %2566 = vmatprep.subr.mxu0 0.0
        %2567 = vmatpush1.msra.mxu0 %v1960
        %2568 = vmatprep.subr.mxu0 0.0
        %2569 = vmatpush1.msra.mxu0 %v1961
        %2570 = vmatprep.subr.mxu0 0.0
        %2571 = vmatpush1.msra.mxu0 %v1962
        %2572 = vmatprep.subr.mxu0 0.0
        %2573 = vmatpush1.msra.mxu0 %v1963
        %2574 = vmatprep.subr.mxu0 0.0
        %2575 = vmatpush1.msra.mxu0 %v2087
        %2576 = vmatprep.subr.mxu0 0.0
        %2577 = vmatpush1.msra.mxu0 0.0
        %2578 = vmatprep.subr.mxu0 0.0
        %2579 = vmatpush1.msra.mxu0 0.0
        %2580 = vmatprep.subr.mxu0 0.0
        %2581 = vmatpush1.msra.mxu0 0.0
        %2582 = vmatprep.subr.mxu0 0.0
        %2583 = vmatpush1.msra.mxu0 0.0
        %2584 = vmatprep.subr.mxu0 0.0
        %2585 = vmatpush1.msra.mxu0 0.0
        %2586 = vmatprep.subr.mxu0 0.0
        %2587 = vmatpush1.msra.mxu0 0.0
        %2588 = vmatprep.subr.mxu0 0.0
        %2589 = vmatpush1.msra.mxu0 0.0
        %2590 = vmatprep.subr.mxu0 0.0
        %2591 = vmatpush1.msra.mxu0 0.0
        %2592 = vmatprep.subr.mxu0 0.0
        %2593 = vmatpush1.msra.mxu0 0.0
        %2594 = vmatprep.subr.mxu0 0.0
        %2595 = vmatpush1.msra.mxu0 0.0
        %2596 = vmatprep.subr.mxu0 0.0
        %2597 = vmatpush1.msra.mxu0 0.0
        %2598 = vmatprep.subr.mxu0 0.0
        %2599 = vmatpush1.msra.mxu0 0.0
        %2600 = vmatprep.subr.mxu0 0.0
        %2601 = vmatpush1.msra.mxu0 0.0
        %2602 = vmatprep.subr.mxu0 0.0
        %2603 = vmatpush1.msra.mxu0 0.0
        %2604 = vmatprep.subr.mxu0 0.0
        %2605 = vmatpush1.msra.mxu0 0.0
        %2606 = vmatprep.subr.mxu0 0.0
        %2607 = vmatpush1.msra.mxu0 0.0
        %2608 = vmatprep.subr.mxu0 0.0
        %2609 = vmatpush1.msra.mxu0 0.0
        %2610 = vmatprep.subr.mxu0 0.0
        %2611 = vmatpush1.msra.mxu0 0.0
        %2612 = vmatprep.subr.mxu0 0.0
        %2613 = vmatpush1.msra.mxu0 0.0
        %2614 = vmatprep.subr.mxu0 0.0
        %2615 = vmatpush1.msra.mxu0 0.0
        %2616 = vmatprep.subr.mxu0 0.0
        %2617 = vmatpush1.msra.mxu0 0.0
        %2618 = vmatprep.subr.mxu0 0.0
        %2619 = vmatpush1.msra.mxu0 0.0
        %2620 = vmatprep.mubr.f32.mxu0 0.0
        %2621 = vmatmul.mubr.f32.gmra.mrb[0].mxu0 %v2554
        %v2622 = vpop.f32.mrb[0].mxu0
        %v2623 = vadd.f32 0.0, %v2622
        %v2624 = vpop.f32.mrb[0].mxu0
        %2625 = vdwg.mxu0
        %v2626 = vrcp.pop %v2623
        %v2628 = vsel %vm2179, %v2626, 0
        %2630 = vmatprep.subr.mxu0 0.0
        %2631 = vmatpush1.msra.mxu0 %v1965
        %2632 = vmatprep.subr.mxu0 0.0
        %2633 = vmatpush1.msra.mxu0 %v1966
        %2634 = vmatprep.subr.mxu0 0.0
        %2635 = vmatpush1.msra.mxu0 0.0
        %2636 = vmatprep.subr.mxu0 0.0
        %2637 = vmatpush1.msra.mxu0 0.0
        %2638 = vmatprep.subr.mxu0 0.0
        %2639 = vmatpush1.msra.mxu0 0.0
        %2640 = vmatprep.subr.mxu0 0.0
        %2641 = vmatpush1.msra.mxu0 0.0
        %2642 = vmatprep.subr.mxu0 0.0
        %2643 = vmatpush1.msra.mxu0 0.0
        %2644 = vmatprep.subr.mxu0 0.0
        %2645 = vmatpush1.msra.mxu0 0.0
        %2646 = vmatprep.subr.mxu0 0.0
        %2647 = vmatpush1.msra.mxu0 0.0
        %2648 = vmatprep.subr.mxu0 0.0
        %2649 = vmatpush1.msra.mxu0 0.0
        %2650 = vmatprep.subr.mxu0 0.0
        %2651 = vmatpush1.msra.mxu0 0.0
        %2652 = vmatprep.subr.mxu0 0.0
        %2653 = vmatpush1.msra.mxu0 0.0
        %2654 = vmatprep.subr.mxu0 0.0
        %2655 = vmatpush1.msra.mxu0 0.0
        %2656 = vmatprep.subr.mxu0 0.0
        %2657 = vmatpush1.msra.mxu0 0.0
        %2658 = vmatprep.subr.mxu0 0.0
        %2659 = vmatpush1.msra.mxu0 0.0
        %2660 = vmatprep.subr.mxu0 0.0
        %2661 = vmatpush1.msra.mxu0 0.0
        %2662 = vmatprep.subr.mxu0 0.0
        %2663 = vmatpush1.msra.mxu0 0.0
        %2664 = vmatprep.subr.mxu0 0.0
        %2665 = vmatpush1.msra.mxu0 0.0
        %2666 = vmatprep.subr.mxu0 0.0
        %2667 = vmatpush1.msra.mxu0 0.0
        %2668 = vmatprep.subr.mxu0 0.0
        %2669 = vmatpush1.msra.mxu0 0.0
        %2670 = vmatprep.subr.mxu0 0.0
        %2671 = vmatpush1.msra.mxu0 0.0
        %2672 = vmatprep.subr.mxu0 0.0
        %2673 = vmatpush1.msra.mxu0 0.0
        %2674 = vmatprep.subr.mxu0 0.0
        %2675 = vmatpush1.msra.mxu0 0.0
        %2676 = vmatprep.subr.mxu0 0.0
        %2677 = vmatpush1.msra.mxu0 0.0
        %2678 = vmatprep.subr.mxu0 0.0
        %2679 = vmatpush1.msra.mxu0 0.0
        %2680 = vmatprep.subr.mxu0 0.0
        %2681 = vmatpush1.msra.mxu0 0.0
        %2682 = vmatprep.subr.mxu0 0.0
        %2683 = vmatpush1.msra.mxu0 0.0
        %2684 = vmatprep.subr.mxu0 0.0
        %2685 = vmatpush1.msra.mxu0 0.0
        %2686 = vmatprep.subr.mxu0 0.0
        %2687 = vmatpush1.msra.mxu0 0.0
        %2688 = vmatprep.subr.mxu0 0.0
        %2689 = vmatpush1.msra.mxu0 0.0
        %2690 = vmatprep.subr.mxu0 0.0
        %2691 = vmatpush1.msra.mxu0 0.0
        %2692 = vmatprep.subr.mxu0 0.0
        %2693 = vmatpush1.msra.mxu0 0.0
        %2694 = vmatprep.mubr.f32.mxu0 0.0
        %2695 = vmatmul.mubr.f32.gmra.mrb[0].mxu0 %v2628
        %v2696 = vpop.f32.mrb[0].mxu0
        %v2697 = vadd.f32 0.0, %v2696
        %v2698 = vpop.f32.mrb[0].mxu0
        %2699 = vdwg.mxu0
        %v2700 = vmul.f32 %v2552, %v2697
        %v2701 = vmul.f32 %v2048, %v2700
        %v2702 = vmul.f32 %v2051, %v2700
        %v2703 = vmul.f32 %v2056, %v2700
        %v2704 = vmul.f32 %v2059, %v2700
        %v2705 = vmul.f32 %v2064, %v2700
        %v2707 = vsel %vm2069, %v2701, 0
        %v2710 = vsel %vm2069, %v2702, 0
        %v2713 = vsel %vm2069, %v2703, 0
        %v2716 = vsel %vm2069, %v2704, 0
        %v2719 = vsel %vm2069, %v2705, 0
        %2721 = vmatprep.subr.mxu0 0.0
        %2722 = vmatpush1.msra.mxu0 %v1955
        %2723 = vmatprep.subr.mxu0 0.0
        %2724 = vmatpush1.msra.mxu0 %v1956
        %2725 = vmatprep.subr.mxu0 0.0
        %2726 = vmatpush1.msra.mxu0 %v1957
        %2727 = vmatprep.subr.mxu0 0.0
        %2728 = vmatpush1.msra.mxu0 %v1958
        %2729 = vmatprep.subr.mxu0 0.0
        %2730 = vmatpush1.msra.mxu0 %v1959
        %2731 = vmatprep.subr.mxu0 0.0
        %2732 = vmatpush1.msra.mxu0 %v1960
        %2733 = vmatprep.subr.mxu0 0.0
        %2734 = vmatpush1.msra.mxu0 %v1961
        %2735 = vmatprep.subr.mxu0 0.0
        %2736 = vmatpush1.msra.mxu0 %v1962
        %2737 = vmatprep.subr.mxu0 0.0
        %2738 = vmatpush1.msra.mxu0 %v1963
        %2739 = vmatprep.subr.mxu0 0.0
        %2740 = vmatpush1.msra.mxu0 %v2087
        %2741 = vmatprep.subr.mxu0 0.0
        %2742 = vmatpush1.msra.mxu0 0.0
        %2743 = vmatprep.subr.mxu0 0.0
        %2744 = vmatpush1.msra.mxu0 0.0
        %2745 = vmatprep.subr.mxu0 0.0
        %2746 = vmatpush1.msra.mxu0 0.0
        %2747 = vmatprep.subr.mxu0 0.0
        %2748 = vmatpush1.msra.mxu0 0.0
        %2749 = vmatprep.subr.mxu0 0.0
        %2750 = vmatpush1.msra.mxu0 0.0
        %2751 = vmatprep.subr.mxu0 0.0
        %2752 = vmatpush1.msra.mxu0 0.0
        %2753 = vmatprep.subr.mxu0 0.0
        %2754 = vmatpush1.msra.mxu0 0.0
        %2755 = vmatprep.subr.mxu0 0.0
        %2756 = vmatpush1.msra.mxu0 0.0
        %2757 = vmatprep.subr.mxu0 0.0
        %2758 = vmatpush1.msra.mxu0 0.0
        %2759 = vmatprep.subr.mxu0 0.0
        %2760 = vmatpush1.msra.mxu0 0.0
        %2761 = vmatprep.subr.mxu0 0.0
        %2762 = vmatpush1.msra.mxu0 0.0
        %2763 = vmatprep.subr.mxu0 0.0
        %2764 = vmatpush1.msra.mxu0 0.0
        %2765 = vmatprep.subr.mxu0 0.0
        %2766 = vmatpush1.msra.mxu0 0.0
        %2767 = vmatprep.subr.mxu0 0.0
        %2768 = vmatpush1.msra.mxu0 0.0
        %2769 = vmatprep.subr.mxu0 0.0
        %2770 = vmatpush1.msra.mxu0 0.0
        %2771 = vmatprep.subr.mxu0 0.0
        %2772 = vmatpush1.msra.mxu0 0.0
        %2773 = vmatprep.subr.mxu0 0.0
        %2774 = vmatpush1.msra.mxu0 0.0
        %2775 = vmatprep.subr.mxu0 0.0
        %2776 = vmatpush1.msra.mxu0 0.0
        %2777 = vmatprep.subr.mxu0 0.0
        %2778 = vmatpush1.msra.mxu0 0.0
        %2779 = vmatprep.subr.mxu0 0.0
        %2780 = vmatpush1.msra.mxu0 0.0
        %2781 = vmatprep.subr.mxu0 0.0
        %2782 = vmatpush1.msra.mxu0 0.0
        %2783 = vmatprep.subr.mxu0 0.0
        %2784 = vmatpush1.msra.mxu0 0.0
        %2785 = vmatprep.mubr.f32.mxu0 0.0
        %2786 = vmatmul.mubr.f32.gmra.mrb[0].mxu0 %v2707
        %v2787 = vpop.f32.mrb[0].mxu0
        %v2788 = vadd.f32 0.0, %v2787
        %v2789 = vpop.f32.mrb[0].mxu0
        %2790 = vmatprep.mubr.f32.mxu0 0.0
        %2791 = vmatmul.mubr.f32.gmra.mrb[0].mxu0 %v2710
        %v2792 = vpop.f32.mrb[0].mxu0
        %v2793 = vadd.f32 0.0, %v2792
        %v2794 = vpop.f32.mrb[0].mxu0
        %2795 = vmatprep.mubr.f32.mxu0 0.0
        %2796 = vmatmul.mubr.f32.gmra.mrb[0].mxu0 %v2713
        %v2797 = vpop.f32.mrb[0].mxu0
        %v2798 = vadd.f32 0.0, %v2797
        %v2799 = vpop.f32.mrb[0].mxu0
        %2800 = vmatprep.mubr.f32.mxu0 0.0
        %2801 = vmatmul.mubr.f32.gmra.mrb[0].mxu0 %v2716
        %v2802 = vpop.f32.mrb[0].mxu0
        %v2803 = vadd.f32 0.0, %v2802
        %v2804 = vpop.f32.mrb[0].mxu0
        %2805 = vmatprep.mubr.f32.mxu0 0.0
        %2806 = vmatmul.mubr.f32.gmra.mrb[0].mxu0 %v2719
        %v2807 = vpop.f32.mrb[0].mxu0
        %v2808 = vadd.f32 0.0, %v2807
        %v2809 = vpop.f32.mrb[0].mxu0
        %2810 = vdwg.mxu0
        %v2811 = vld [vmem:[%s14] sm:$0xff]
        %v2812 = vld [vmem:[%s14 + $0x8] sm:$0xff]
        %v2813 = vld [vmem:[%s14 + $0x10] sm:$0xff]
        %v2814 = vld [vmem:[%s14 + $0x18] sm:$0xff]
        %v2815 = vld [vmem:[%s14 + $0x20] sm:$0xff]
        %v2816 = vld [vmem:[%s14 + $0x28] sm:$0xff]
        %v2817 = vld [vmem:[%s14 + $0x30] sm:$0xff]
        %v2818 = vld [vmem:[%s14 + $0x38] sm:$0xff]
        %v2819 = vld [vmem:[%s14 + $0x40] sm:$0xff]
        %v2820 = vld [vmem:[%s14 + $0x48] sm:$0x3f]
        %v2821 = vld [vmem:[#allocation19] sm:$0x7f]
        %v2822 = vld [vmem:[#allocation18] sm:$0xf]
        %v2823 = vld [vmem:[#allocation18 + $0x4] sm:$0xf]
        %v2824 = vld [vmem:[#allocation18 + $0x8] sm:$0xf]
        %v2825 = vld [vmem:[#allocation18 + $0xc] sm:$0xf]
        %v2826 = vld [vmem:[#allocation18 + $0x10] sm:$0xf]
        %v2827 = vld [vmem:[#allocation18 + $0x14] sm:$0xf]
        %v2828 = vld [vmem:[#allocation18 + $0x18] sm:$0xf]
        %v2829 = vld [vmem:[#allocation18 + $0x1c] sm:$0x7]
        %v2838 = vunpack.c.l.b16 %v2822
        %v2839 = vunpack.c.l.b16 %v2823
        %v2840 = vunpack.c.l.b16 %v2824
        %v2841 = vunpack.c.l.b16 %v2825
        %v2842 = vunpack.c.l.b16 %v2826
        %v2843 = vunpack.c.l.b16 %v2827
        %v2844 = vunpack.c.l.b16 %v2828
        %v2845 = vunpack.c.l.b16 %v2829
        %v2846 = vpack.c.b16 %v2839, %v2838
        %v2847 = vpack.c.b16 %v2841, %v2840
        %v2848 = vpack.c.b16 %v2843, %v2842
        %v2849 = vpack.c.b16 %v2845, %v2844
        %v2854 = vsel %vm1068, %v2849, 0
        %2856 = vmatprep.subr.bf16.mxu0 0
        %2857 = vmatpush1.bf16.msra.mxu0 %v2846
        %2858 = vmatprep.subr.bf16.mxu0 0
        %2859 = vmatpush1.bf16.msra.mxu0 %v2847
        %2860 = vmatprep.subr.bf16.mxu0 0
        %2861 = vmatpush1.bf16.msra.mxu0 %v2848
        %2862 = vmatprep.subr.bf16.mxu0 0
        %2863 = vmatpush1.bf16.msra.mxu0 %v2854
        %2864 = vmatprep.subr.bf16.mxu0 0
        %2865 = vmatpush1.bf16.msra.mxu0 0
        %2866 = vmatprep.subr.bf16.mxu0 0
        %2867 = vmatpush1.bf16.msra.mxu0 0
        %2868 = vmatprep.subr.bf16.mxu0 0
        %2869 = vmatpush1.bf16.msra.mxu0 0
        %2870 = vmatprep.subr.bf16.mxu0 0
        %2871 = vmatpush1.bf16.msra.mxu0 0
        %2872 = vmatprep.subr.bf16.mxu0 0
        %2873 = vmatpush1.bf16.msra.mxu0 0
        %2874 = vmatprep.subr.bf16.mxu0 0
        %2875 = vmatpush1.bf16.msra.mxu0 0
        %2876 = vmatprep.subr.bf16.mxu0 0
        %2877 = vmatpush1.bf16.msra.mxu0 0
        %2878 = vmatprep.subr.bf16.mxu0 0
        %2879 = vmatpush1.bf16.msra.mxu0 0
        %2880 = vmatprep.subr.bf16.mxu0 0
        %2881 = vmatpush1.bf16.msra.mxu0 0
        %2882 = vmatprep.subr.bf16.mxu0 0
        %2883 = vmatpush1.bf16.msra.mxu0 0
        %2884 = vmatprep.subr.bf16.mxu0 0
        %2885 = vmatpush1.bf16.msra.mxu0 0
        %2886 = vmatprep.subr.bf16.mxu0 0
        %2887 = vmatpush1.bf16.msra.mxu0 0
        %2888 = vmatprep.mubr.bf16.mxu0 0
        %2889 = vmatmul.mubr.bf16.gmra.mrb[0].mxu0 %v2002
        %v2890 = vpop.f32.mrb[0].mxu0
        %v2891 = vadd.f32 0.0, %v2890
        %v2892 = vpop.f32.mrb[0].mxu0
        %v2893 = vpop.f32.mrb[0].mxu0
        %v2894 = vadd.f32 0.0, %v2893
        %v2895 = vpop.f32.mrb[0].mxu0
        %2896 = vmatprep.mubr.bf16.mxu0 0
        %2897 = vmatmul.mubr.bf16.gmra.mrb[0].mxu0 %v2005
        %v2898 = vpop.f32.mrb[0].mxu0
        %v2899 = vadd.f32 0.0, %v2898
        %v2900 = vpop.f32.mrb[0].mxu0
        %v2901 = vpop.f32.mrb[0].mxu0
        %v2902 = vadd.f32 0.0, %v2901
        %v2903 = vpop.f32.mrb[0].mxu0
        %2904 = vmatprep.mubr.bf16.mxu0 0
        %2905 = vmatmul.mubr.bf16.gmra.mrb[0].mxu0 %v2008
        %v2906 = vpop.f32.mrb[0].mxu0
        %v2907 = vadd.f32 0.0, %v2906
        %v2908 = vpop.f32.mrb[0].mxu0
        %v2909 = vpop.f32.mrb[0].mxu0
        %v2910 = vpop.f32.mrb[0].mxu0
        %2911 = vdwg.mxu0
        %vm2912 = vcmask 637952
        %v2914 = vsel %vm2912, %v2891, 0
        %v2917 = vsel %vm2912, %v2894, 0
        %v2920 = vsel %vm2912, %v2899, 0
        %v2923 = vsel %vm2912, %v2902, 0
        %v2926 = vsel %vm2912, %v2907, 0
        %v2929 = vsel %vm1648, %v2820, 0
        %2931 = vmatprep.subr.mxu0 0.0
        %2932 = vmatpush1.msra.mxu0 %v2811
        %2933 = vmatprep.subr.mxu0 0.0
        %2934 = vmatpush1.msra.mxu0 %v2812
        %2935 = vmatprep.subr.mxu0 0.0
        %2936 = vmatpush1.msra.mxu0 %v2813
        %2937 = vmatprep.subr.mxu0 0.0
        %2938 = vmatpush1.msra.mxu0 %v2814
        %2939 = vmatprep.subr.mxu0 0.0
        %2940 = vmatpush1.msra.mxu0 %v2815
        %2941 = vmatprep.subr.mxu0 0.0
        %2942 = vmatpush1.msra.mxu0 %v2816
        %2943 = vmatprep.subr.mxu0 0.0
        %2944 = vmatpush1.msra.mxu0 %v2817
        %2945 = vmatprep.subr.mxu0 0.0
        %2946 = vmatpush1.msra.mxu0 %v2818
        %2947 = vmatprep.subr.mxu0 0.0
        %2948 = vmatpush1.msra.mxu0 %v2819
        %2949 = vmatprep.subr.mxu0 0.0
        %2950 = vmatpush1.msra.mxu0 %v2929
        %2951 = vmatprep.subr.mxu0 0.0
        %2952 = vmatpush1.msra.mxu0 0.0
        %2953 = vmatprep.subr.mxu0 0.0
        %2954 = vmatpush1.msra.mxu0 0.0
        %2955 = vmatprep.subr.mxu0 0.0
        %2956 = vmatpush1.msra.mxu0 0.0
        %2957 = vmatprep.subr.mxu0 0.0
        %2958 = vmatpush1.msra.mxu0 0.0
        %2959 = vmatprep.subr.mxu0 0.0
        %2960 = vmatpush1.msra.mxu0 0.0
        %2961 = vmatprep.subr.mxu0 0.0
        %2962 = vmatpush1.msra.mxu0 0.0
        %2963 = vmatprep.subr.mxu0 0.0
        %2964 = vmatpush1.msra.mxu0 0.0
        %2965 = vmatprep.subr.mxu0 0.0
        %2966 = vmatpush1.msra.mxu0 0.0
        %2967 = vmatprep.subr.mxu0 0.0
        %2968 = vmatpush1.msra.mxu0 0.0
        %2969 = vmatprep.subr.mxu0 0.0
        %2970 = vmatpush1.msra.mxu0 0.0
        %2971 = vmatprep.subr.mxu0 0.0
        %2972 = vmatpush1.msra.mxu0 0.0
        %2973 = vmatprep.subr.mxu0 0.0
        %2974 = vmatpush1.msra.mxu0 0.0
        %2975 = vmatprep.subr.mxu0 0.0
        %2976 = vmatpush1.msra.mxu0 0.0
        %2977 = vmatprep.subr.mxu0 0.0
        %2978 = vmatpush1.msra.mxu0 0.0
        %2979 = vmatprep.subr.mxu0 0.0
        %2980 = vmatpush1.msra.mxu0 0.0
        %2981 = vmatprep.subr.mxu0 0.0
        %2982 = vmatpush1.msra.mxu0 0.0
        %2983 = vmatprep.subr.mxu0 0.0
        %2984 = vmatpush1.msra.mxu0 0.0
        %2985 = vmatprep.subr.mxu0 0.0
        %2986 = vmatpush1.msra.mxu0 0.0
        %2987 = vmatprep.subr.mxu0 0.0
        %2988 = vmatpush1.msra.mxu0 0.0
        %2989 = vmatprep.subr.mxu0 0.0
        %2990 = vmatpush1.msra.mxu0 0.0
        %2991 = vmatprep.subr.mxu0 0.0
        %2992 = vmatpush1.msra.mxu0 0.0
        %2993 = vmatprep.subr.mxu0 0.0
        %2994 = vmatpush1.msra.mxu0 0.0
        %2995 = vmatprep.mubr.f32.mxu0 0.0
        %2996 = vmatmul.mubr.f32.gmra.mrb[0].mxu0 %v2914
        %v2997 = vpop.f32.mrb[0].mxu0
        %v2998 = vadd.f32 0.0, %v2997
        %v2999 = vpop.f32.mrb[0].mxu0
        %3000 = vmatprep.mubr.f32.mxu0 0.0
        %3001 = vmatmul.mubr.f32.gmra.mrb[0].mxu0 %v2917
        %v3002 = vpop.f32.mrb[0].mxu0
        %v3003 = vadd.f32 0.0, %v3002
        %v3004 = vpop.f32.mrb[0].mxu0
        %3005 = vmatprep.mubr.f32.mxu0 0.0
        %3006 = vmatmul.mubr.f32.gmra.mrb[0].mxu0 %v2920
        %v3007 = vpop.f32.mrb[0].mxu0
        %v3008 = vadd.f32 0.0, %v3007
        %v3009 = vpop.f32.mrb[0].mxu0
        %3010 = vmatprep.mubr.f32.mxu0 0.0
        %3011 = vmatmul.mubr.f32.gmra.mrb[0].mxu0 %v2923
        %v3012 = vpop.f32.mrb[0].mxu0
        %v3013 = vadd.f32 0.0, %v3012
        %v3014 = vpop.f32.mrb[0].mxu0
        %3015 = vmatprep.mubr.f32.mxu0 0.0
        %3016 = vmatmul.mubr.f32.gmra.mrb[0].mxu0 %v2926
        %v3017 = vpop.f32.mrb[0].mxu0
        %v3018 = vadd.f32 0.0, %v3017
        %v3019 = vpop.f32.mrb[0].mxu0
        %3020 = vdwg.mxu0
        %v3022 = vsel %vm2459, %v2998, 0
        %v3025 = vsel %vm2459, %v3003, 0
        %v3028 = vsel %vm2459, %v3008, 0
        %v3031 = vsel %vm2459, %v3013, 0
        %v3034 = vsel %vm2459, %v3018, 0
        %v3037 = vsel %vm1068, %v2821, 0
        %3039 = vmatprep.subr.mxu0 0.0
        %3040 = vmatpush1.msra.mxu0 %v3037
        %3041 = vmatprep.subr.mxu0 0.0
        %3042 = vmatpush1.msra.mxu0 0.0
        %3043 = vmatprep.subr.mxu0 0.0
        %3044 = vmatpush1.msra.mxu0 0.0
        %3045 = vmatprep.subr.mxu0 0.0
        %3046 = vmatpush1.msra.mxu0 0.0
        %3047 = vmatprep.subr.mxu0 0.0
        %3048 = vmatpush1.msra.mxu0 0.0
        %3049 = vmatprep.subr.mxu0 0.0
        %3050 = vmatpush1.msra.mxu0 0.0
        %3051 = vmatprep.subr.mxu0 0.0
        %3052 = vmatpush1.msra.mxu0 0.0
        %3053 = vmatprep.subr.mxu0 0.0
        %3054 = vmatpush1.msra.mxu0 0.0
        %3055 = vmatprep.subr.mxu0 0.0
        %3056 = vmatpush1.msra.mxu0 0.0
        %3057 = vmatprep.subr.mxu0 0.0
        %3058 = vmatpush1.msra.mxu0 0.0
        %3059 = vmatprep.subr.mxu0 0.0
        %3060 = vmatpush1.msra.mxu0 0.0
        %3061 = vmatprep.subr.mxu0 0.0
        %3062 = vmatpush1.msra.mxu0 0.0
        %3063 = vmatprep.subr.mxu0 0.0
        %3064 = vmatpush1.msra.mxu0 0.0
        %3065 = vmatprep.subr.mxu0 0.0
        %3066 = vmatpush1.msra.mxu0 0.0
        %3067 = vmatprep.subr.mxu0 0.0
        %3068 = vmatpush1.msra.mxu0 0.0
        %3069 = vmatprep.subr.mxu0 0.0
        %3070 = vmatpush1.msra.mxu0 0.0
        %3071 = vmatprep.subr.mxu0 0.0
        %3072 = vmatpush1.msra.mxu0 0.0
        %3073 = vmatprep.subr.mxu0 0.0
        %3074 = vmatpush1.msra.mxu0 0.0
        %3075 = vmatprep.subr.mxu0 0.0
        %3076 = vmatpush1.msra.mxu0 0.0
        %3077 = vmatprep.subr.mxu0 0.0
        %3078 = vmatpush1.msra.mxu0 0.0
        %3079 = vmatprep.subr.mxu0 0.0
        %3080 = vmatpush1.msra.mxu0 0.0
        %3081 = vmatprep.subr.mxu0 0.0
        %3082 = vmatpush1.msra.mxu0 0.0
        %3083 = vmatprep.subr.mxu0 0.0
        %3084 = vmatpush1.msra.mxu0 0.0
        %3085 = vmatprep.subr.mxu0 0.0
        %3086 = vmatpush1.msra.mxu0 0.0
        %3087 = vmatprep.subr.mxu0 0.0
        %3088 = vmatpush1.msra.mxu0 0.0
        %3089 = vmatprep.subr.mxu0 0.0
        %3090 = vmatpush1.msra.mxu0 0.0
        %3091 = vmatprep.subr.mxu0 0.0
        %3092 = vmatpush1.msra.mxu0 0.0
        %3093 = vmatprep.subr.mxu0 0.0
        %3094 = vmatpush1.msra.mxu0 0.0
        %3095 = vmatprep.subr.mxu0 0.0
        %3096 = vmatpush1.msra.mxu0 0.0
        %3097 = vmatprep.subr.mxu0 0.0
        %3098 = vmatpush1.msra.mxu0 0.0
        %3099 = vmatprep.subr.mxu0 0.0
        %3100 = vmatpush1.msra.mxu0 0.0
        %3101 = vmatprep.subr.mxu0 0.0
        %3102 = vmatpush1.msra.mxu0 0.0
        %3103 = vmatprep.mubr.f32.mxu0 0.0
        %3104 = vmatmul.mubr.f32.gmra.mrb[0].mxu0 %v3022
        %v3105 = vpop.f32.mrb[0].mxu0
        %v3106 = vadd.f32 0.0, %v3105
        %v3107 = vpop.f32.mrb[0].mxu0
        %3108 = vmatprep.mubr.f32.mxu0 0.0
        %3109 = vmatmul.mubr.f32.gmra.mrb[0].mxu0 %v3025
        %v3110 = vpop.f32.mrb[0].mxu0
        %v3111 = vadd.f32 0.0, %v3110
        %v3112 = vpop.f32.mrb[0].mxu0
        %3113 = vmatprep.mubr.f32.mxu0 0.0
        %3114 = vmatmul.mubr.f32.gmra.mrb[0].mxu0 %v3028
        %v3115 = vpop.f32.mrb[0].mxu0
        %v3116 = vadd.f32 0.0, %v3115
        %v3117 = vpop.f32.mrb[0].mxu0
        %3118 = vmatprep.mubr.f32.mxu0 0.0
        %3119 = vmatmul.mubr.f32.gmra.mrb[0].mxu0 %v3031
        %v3120 = vpop.f32.mrb[0].mxu0
        %v3121 = vadd.f32 0.0, %v3120
        %v3122 = vpop.f32.mrb[0].mxu0
        %3123 = vmatprep.mubr.f32.mxu0 0.0
        %3124 = vmatmul.mubr.f32.gmra.mrb[0].mxu0 %v3034
        %v3125 = vpop.f32.mrb[0].mxu0
        %v3126 = vadd.f32 0.0, %v3125
        %v3127 = vpop.f32.mrb[0].mxu0
        %3128 = vdwg.mxu0
        %s3129 = sld [smem:[#allocation10]]
        %v3130 = vstv %s3129
        %v3131 = vmul.f32 %v3106, %v3130
        %s3132 = sld [smem:[#allocation10 + $0x1]]
        %v3133 = vstv %s3132
        %v3134 = vmul.f32 %v3111, %v3133
        %v3135 = vadd.f32 %v3131, %v3134
        %s3136 = sld [smem:[#allocation10 + $0x2]]
        %v3137 = vstv %s3136
        %v3138 = vmul.f32 %v3116, %v3137
        %v3139 = vadd.f32 %v3135, %v3138
        %s3140 = sld [smem:[#allocation10 + $0x3]]
        %v3141 = vstv %s3140
        %v3142 = vmul.f32 %v3121, %v3141
        %v3143 = vadd.f32 %v3139, %v3142
        %s3144 = sld [smem:[#allocation10 + $0x4]]
        %v3145 = vstv %s3144
        %v3146 = vmul.f32 %v3126, %v3145
        %v3147 = vadd.f32 %v3143, %v3146
        %v3148 = vmul.f32 %v2891, %v3147
        %s3149 = sld [smem:[#allocation10 + $0x80]]
        %v3150 = vstv %s3149
        %v3151 = vmul.f32 %v3106, %v3150
        %s3152 = sld [smem:[#allocation10 + $0x81]]
        %v3153 = vstv %s3152
        %v3154 = vmul.f32 %v3111, %v3153
        %v3155 = vadd.f32 %v3151, %v3154
        %s3156 = sld [smem:[#allocation10 + $0x82]]
        %v3157 = vstv %s3156
        %v3158 = vmul.f32 %v3116, %v3157
        %v3159 = vadd.f32 %v3155, %v3158
        %s3160 = sld [smem:[#allocation10 + $0x83]]
        %v3161 = vstv %s3160
        %v3162 = vmul.f32 %v3121, %v3161
        %v3163 = vadd.f32 %v3159, %v3162
        %s3164 = sld [smem:[#allocation10 + $0x84]]
        %v3165 = vstv %s3164
        %v3166 = vmul.f32 %v3126, %v3165
        %v3167 = vadd.f32 %v3163, %v3166
        %v3168 = vmul.f32 %v2894, %v3167
        %v3169 = vadd.f32 %v3148, %v3168
        %s3170 = sld [smem:[#allocation10 + $0x100]]
        %v3171 = vstv %s3170
        %v3172 = vmul.f32 %v3106, %v3171
        %s3173 = sld [smem:[#allocation10 + $0x101]]
        %v3174 = vstv %s3173
        %v3175 = vmul.f32 %v3111, %v3174
        %v3176 = vadd.f32 %v3172, %v3175
        %s3177 = sld [smem:[#allocation10 + $0x102]]
        %v3178 = vstv %s3177
        %v3179 = vmul.f32 %v3116, %v3178
        %v3180 = vadd.f32 %v3176, %v3179
        %s3181 = sld [smem:[#allocation10 + $0x103]]
        %v3182 = vstv %s3181
        %v3183 = vmul.f32 %v3121, %v3182
        %v3184 = vadd.f32 %v3180, %v3183
        %s3185 = sld [smem:[#allocation10 + $0x104]]
        %v3186 = vstv %s3185
        %v3187 = vmul.f32 %v3126, %v3186
        %v3188 = vadd.f32 %v3184, %v3187
        %v3189 = vmul.f32 %v2899, %v3188
        %v3190 = vadd.f32 %v3169, %v3189
        %s3191 = sld [smem:[#allocation10 + $0x180]]
        %v3192 = vstv %s3191
        %v3193 = vmul.f32 %v3106, %v3192
        %s3194 = sld [smem:[#allocation10 + $0x181]]
        %v3195 = vstv %s3194
        %v3196 = vmul.f32 %v3111, %v3195
        %v3197 = vadd.f32 %v3193, %v3196
        %s3198 = sld [smem:[#allocation10 + $0x182]]
        %v3199 = vstv %s3198
        %v3200 = vmul.f32 %v3116, %v3199
        %v3201 = vadd.f32 %v3197, %v3200
        %s3202 = sld [smem:[#allocation10 + $0x183]]
        %v3203 = vstv %s3202
        %v3204 = vmul.f32 %v3121, %v3203
        %v3205 = vadd.f32 %v3201, %v3204
        %s3206 = sld [smem:[#allocation10 + $0x184]]
        %v3207 = vstv %s3206
        %v3208 = vmul.f32 %v3126, %v3207
        %v3209 = vadd.f32 %v3205, %v3208
        %v3210 = vmul.f32 %v2902, %v3209
        %v3211 = vadd.f32 %v3190, %v3210
        %s3212 = sld [smem:[#allocation10 + $0x200]]
        %v3213 = vstv %s3212
        %v3214 = vmul.f32 %v3106, %v3213
        %s3215 = sld [smem:[#allocation10 + $0x201]]
        %v3216 = vstv %s3215
        %v3217 = vmul.f32 %v3111, %v3216
        %v3218 = vadd.f32 %v3214, %v3217
        %s3219 = sld [smem:[#allocation10 + $0x202]]
        %v3220 = vstv %s3219
        %v3221 = vmul.f32 %v3116, %v3220
        %v3222 = vadd.f32 %v3218, %v3221
        %s3223 = sld [smem:[#allocation10 + $0x203]]
        %v3224 = vstv %s3223
        %v3225 = vmul.f32 %v3121, %v3224
        %v3226 = vadd.f32 %v3222, %v3225
        %s3227 = sld [smem:[#allocation10 + $0x204]]
        %v3228 = vstv %s3227
        %v3229 = vmul.f32 %v3126, %v3228
        %v3230 = vadd.f32 %v3226, %v3229
        %v3231 = vmul.f32 %v2907, %v3230
        %v3232 = vadd.f32 %v3211, %v3231
        %v3233 = vsel %vm1291, %v3232, -inf
        %3234 = vmax.xlane.f32.xlu0 %v3233
        %v3235 = vpop.xlane.xlu0 %3234
        %vm3236 = vcmask 113704
        %v3237 = vsel %vm3236, %v3232, -inf
        %3238 = vmax.xlane.f32.xlu0 %v3237
        %v3239 = vpop.xlane.xlu0 %3238
        %vm3240 = vcmask 187504
        %v3241 = vsel %vm3240, %v3232, -inf
        %3242 = vmax.xlane.f32.xlu0 %v3241
        %v3243 = vpop.xlane.xlu0 %3242
        %vm3244 = vcmask 392376
        %v3245 = vsel %vm3244, %v3232, -inf
        %3246 = vmax.xlane.f32.xlu0 %v3245
        %v3247 = vpop.xlane.xlu0 %3246
        %vm3248 = vcmask 466304
        %v3249 = vsel %vm3248, %v3232, -inf
        %3250 = vmax.xlane.f32.xlu0 %v3249
        %v3251 = vpop.xlane.xlu0 %3250
        %vm3252 = vcmask 540104
        %v3253 = vsel %vm3252, %v3232, -inf
        %3254 = vmax.xlane.f32.xlu0 %v3253
        %v3255 = vpop.xlane.xlu0 %3254
        %vm3256 = vcmask 638480
        %v3257 = vsel %vm3256, %v3232, -inf
        %3258 = vmax.xlane.f32.xlu0 %v3257
        %v3259 = vpop.xlane.xlu0 %3258
        %v3260 = vsel %vm1259, %v3235, %v3239
        %v3261 = vsel %vm1261, %v3260, %v3243
        %v3262 = vsel %vm1263, %v3261, %v3247
        %v3263 = vsel %vm1265, %v3262, %v3251
        %v3264 = vsel %vm1291, %v3263, %v3255
        %v3265 = vsel %vm2457, %v3264, %v3259
        %v3267 = vsel %vm2459, %v3265, 0
        %3269 = vmatprep.subr.mxu0 0.0
        %3270 = vmatpush1.msra.mxu0 %v3037
        %3271 = vmatprep.subr.mxu0 0.0
        %3272 = vmatpush1.msra.mxu0 0.0
        %3273 = vmatprep.subr.mxu0 0.0
        %3274 = vmatpush1.msra.mxu0 0.0
        %3275 = vmatprep.subr.mxu0 0.0
        %3276 = vmatpush1.msra.mxu0 0.0
        %3277 = vmatprep.subr.mxu0 0.0
        %3278 = vmatpush1.msra.mxu0 0.0
        %3279 = vmatprep.subr.mxu0 0.0
        %3280 = vmatpush1.msra.mxu0 0.0
        %3281 = vmatprep.subr.mxu0 0.0
        %3282 = vmatpush1.msra.mxu0 0.0
        %3283 = vmatprep.subr.mxu0 0.0
        %3284 = vmatpush1.msra.mxu0 0.0
        %3285 = vmatprep.subr.mxu0 0.0
        %3286 = vmatpush1.msra.mxu0 0.0
        %3287 = vmatprep.subr.mxu0 0.0
        %3288 = vmatpush1.msra.mxu0 0.0
        %3289 = vmatprep.subr.mxu0 0.0
        %3290 = vmatpush1.msra.mxu0 0.0
        %3291 = vmatprep.subr.mxu0 0.0
        %3292 = vmatpush1.msra.mxu0 0.0
        %3293 = vmatprep.subr.mxu0 0.0
        %3294 = vmatpush1.msra.mxu0 0.0
        %3295 = vmatprep.subr.mxu0 0.0
        %3296 = vmatpush1.msra.mxu0 0.0
        %3297 = vmatprep.subr.mxu0 0.0
        %3298 = vmatpush1.msra.mxu0 0.0
        %3299 = vmatprep.subr.mxu0 0.0
        %3300 = vmatpush1.msra.mxu0 0.0
        %3301 = vmatprep.subr.mxu0 0.0
        %3302 = vmatpush1.msra.mxu0 0.0
        %3303 = vmatprep.subr.mxu0 0.0
        %3304 = vmatpush1.msra.mxu0 0.0
        %3305 = vmatprep.subr.mxu0 0.0
        %3306 = vmatpush1.msra.mxu0 0.0
        %3307 = vmatprep.subr.mxu0 0.0
        %3308 = vmatpush1.msra.mxu0 0.0
        %3309 = vmatprep.subr.mxu0 0.0
        %3310 = vmatpush1.msra.mxu0 0.0
        %3311 = vmatprep.subr.mxu0 0.0
        %3312 = vmatpush1.msra.mxu0 0.0
        %3313 = vmatprep.subr.mxu0 0.0
        %3314 = vmatpush1.msra.mxu0 0.0
        %3315 = vmatprep.subr.mxu0 0.0
        %3316 = vmatpush1.msra.mxu0 0.0
        %3317 = vmatprep.subr.mxu0 0.0
        %3318 = vmatpush1.msra.mxu0 0.0
        %3319 = vmatprep.subr.mxu0 0.0
        %3320 = vmatpush1.msra.mxu0 0.0
        %3321 = vmatprep.subr.mxu0 0.0
        %3322 = vmatpush1.msra.mxu0 0.0
        %3323 = vmatprep.subr.mxu0 0.0
        %3324 = vmatpush1.msra.mxu0 0.0
        %3325 = vmatprep.subr.mxu0 0.0
        %3326 = vmatpush1.msra.mxu0 0.0
        %3327 = vmatprep.subr.mxu0 0.0
        %3328 = vmatpush1.msra.mxu0 0.0
        %3329 = vmatprep.subr.mxu0 0.0
        %3330 = vmatpush1.msra.mxu0 0.0
        %3331 = vmatprep.subr.mxu0 0.0
        %3332 = vmatpush1.msra.mxu0 0.0
        %3333 = vmatprep.mubr.f32.mxu0 0.0
        %3334 = vmatmul.mubr.f32.gmra.mrb[0].mxu0 %v3267
        %v3335 = vpop.f32.mrb[0].mxu0
        %v3336 = vadd.f32 0.0, %v3335
        %v3337 = vpop.f32.mrb[0].mxu0
        %3338 = vdwg.mxu0
        %v3339 = vsub.f32 %v3232, %v3336
        %v3340 = vmul.f32 %v3339, 1.442695
        %v3341 = vpow.pop %v3340
        %v3343 = vsel %vm2912, %v3341, 0
        %3345 = vmatprep.subr.mxu0 0.0
        %3346 = vmatpush1.msra.mxu0 %v2811
        %3347 = vmatprep.subr.mxu0 0.0
        %3348 = vmatpush1.msra.mxu0 %v2812
        %3349 = vmatprep.subr.mxu0 0.0
        %3350 = vmatpush1.msra.mxu0 %v2813
        %3351 = vmatprep.subr.mxu0 0.0
        %3352 = vmatpush1.msra.mxu0 %v2814
        %3353 = vmatprep.subr.mxu0 0.0
        %3354 = vmatpush1.msra.mxu0 %v2815
        %3355 = vmatprep.subr.mxu0 0.0
        %3356 = vmatpush1.msra.mxu0 %v2816
        %3357 = vmatprep.subr.mxu0 0.0
        %3358 = vmatpush1.msra.mxu0 %v2817
        %3359 = vmatprep.subr.mxu0 0.0
        %3360 = vmatpush1.msra.mxu0 %v2818
        %3361 = vmatprep.subr.mxu0 0.0
        %3362 = vmatpush1.msra.mxu0 %v2819
        %3363 = vmatprep.subr.mxu0 0.0
        %3364 = vmatpush1.msra.mxu0 %v2929
        %3365 = vmatprep.subr.mxu0 0.0
        %3366 = vmatpush1.msra.mxu0 0.0
        %3367 = vmatprep.subr.mxu0 0.0
        %3368 = vmatpush1.msra.mxu0 0.0
        %3369 = vmatprep.subr.mxu0 0.0
        %3370 = vmatpush1.msra.mxu0 0.0
        %3371 = vmatprep.subr.mxu0 0.0
        %3372 = vmatpush1.msra.mxu0 0.0
        %3373 = vmatprep.subr.mxu0 0.0
        %3374 = vmatpush1.msra.mxu0 0.0
        %3375 = vmatprep.subr.mxu0 0.0
        %3376 = vmatpush1.msra.mxu0 0.0
        %3377 = vmatprep.subr.mxu0 0.0
        %3378 = vmatpush1.msra.mxu0 0.0
        %3379 = vmatprep.subr.mxu0 0.0
        %3380 = vmatpush1.msra.mxu0 0.0
        %3381 = vmatprep.subr.mxu0 0.0
        %3382 = vmatpush1.msra.mxu0 0.0
        %3383 = vmatprep.subr.mxu0 0.0
        %3384 = vmatpush1.msra.mxu0 0.0
        %3385 = vmatprep.subr.mxu0 0.0
        %3386 = vmatpush1.msra.mxu0 0.0
        %3387 = vmatprep.subr.mxu0 0.0
        %3388 = vmatpush1.msra.mxu0 0.0
        %3389 = vmatprep.subr.mxu0 0.0
        %3390 = vmatpush1.msra.mxu0 0.0
        %3391 = vmatprep.subr.mxu0 0.0
        %3392 = vmatpush1.msra.mxu0 0.0
        %3393 = vmatprep.subr.mxu0 0.0
        %3394 = vmatpush1.msra.mxu0 0.0
        %3395 = vmatprep.subr.mxu0 0.0
        %3396 = vmatpush1.msra.mxu0 0.0
        %3397 = vmatprep.subr.mxu0 0.0
        %3398 = vmatpush1.msra.mxu0 0.0
        %3399 = vmatprep.subr.mxu0 0.0
        %3400 = vmatpush1.msra.mxu0 0.0
        %3401 = vmatprep.subr.mxu0 0.0
        %3402 = vmatpush1.msra.mxu0 0.0
        %3403 = vmatprep.subr.mxu0 0.0
        %3404 = vmatpush1.msra.mxu0 0.0
        %3405 = vmatprep.subr.mxu0 0.0
        %3406 = vmatpush1.msra.mxu0 0.0
        %3407 = vmatprep.subr.mxu0 0.0
        %3408 = vmatpush1.msra.mxu0 0.0
        %3409 = vmatprep.mubr.f32.mxu0 0.0
        %3410 = vmatmul.mubr.f32.gmra.mrb[0].mxu0 %v3343
        %v3411 = vpop.f32.mrb[0].mxu0
        %v3412 = vadd.f32 0.0, %v3411
        %v3413 = vpop.f32.mrb[0].mxu0
        %3414 = vdwg.mxu0
        %v3415 = vrcp.pop %v3412
        %v3417 = vsel %vm2459, %v3415, 0
        %3419 = vmatprep.subr.mxu0 0.0
        %3420 = vmatpush1.msra.mxu0 %v3037
        %3421 = vmatprep.subr.mxu0 0.0
        %3422 = vmatpush1.msra.mxu0 0.0
        %3423 = vmatprep.subr.mxu0 0.0
        %3424 = vmatpush1.msra.mxu0 0.0
        %3425 = vmatprep.subr.mxu0 0.0
        %3426 = vmatpush1.msra.mxu0 0.0
        %3427 = vmatprep.subr.mxu0 0.0
        %3428 = vmatpush1.msra.mxu0 0.0
        %3429 = vmatprep.subr.mxu0 0.0
        %3430 = vmatpush1.msra.mxu0 0.0
        %3431 = vmatprep.subr.mxu0 0.0
        %3432 = vmatpush1.msra.mxu0 0.0
        %3433 = vmatprep.subr.mxu0 0.0
        %3434 = vmatpush1.msra.mxu0 0.0
        %3435 = vmatprep.subr.mxu0 0.0
        %3436 = vmatpush1.msra.mxu0 0.0
        %3437 = vmatprep.subr.mxu0 0.0
        %3438 = vmatpush1.msra.mxu0 0.0
        %3439 = vmatprep.subr.mxu0 0.0
        %3440 = vmatpush1.msra.mxu0 0.0
        %3441 = vmatprep.subr.mxu0 0.0
        %3442 = vmatpush1.msra.mxu0 0.0
        %3443 = vmatprep.subr.mxu0 0.0
        %3444 = vmatpush1.msra.mxu0 0.0
        %3445 = vmatprep.subr.mxu0 0.0
        %3446 = vmatpush1.msra.mxu0 0.0
        %3447 = vmatprep.subr.mxu0 0.0
        %3448 = vmatpush1.msra.mxu0 0.0
        %3449 = vmatprep.subr.mxu0 0.0
        %3450 = vmatpush1.msra.mxu0 0.0
        %3451 = vmatprep.subr.mxu0 0.0
        %3452 = vmatpush1.msra.mxu0 0.0
        %3453 = vmatprep.subr.mxu0 0.0
        %3454 = vmatpush1.msra.mxu0 0.0
        %3455 = vmatprep.subr.mxu0 0.0
        %3456 = vmatpush1.msra.mxu0 0.0
        %3457 = vmatprep.subr.mxu0 0.0
        %3458 = vmatpush1.msra.mxu0 0.0
        %3459 = vmatprep.subr.mxu0 0.0
        %3460 = vmatpush1.msra.mxu0 0.0
        %3461 = vmatprep.subr.mxu0 0.0
        %3462 = vmatpush1.msra.mxu0 0.0
        %3463 = vmatprep.subr.mxu0 0.0
        %3464 = vmatpush1.msra.mxu0 0.0
        %3465 = vmatprep.subr.mxu0 0.0
        %3466 = vmatpush1.msra.mxu0 0.0
        %3467 = vmatprep.subr.mxu0 0.0
        %3468 = vmatpush1.msra.mxu0 0.0
        %3469 = vmatprep.subr.mxu0 0.0
        %3470 = vmatpush1.msra.mxu0 0.0
        %3471 = vmatprep.subr.mxu0 0.0
        %3472 = vmatpush1.msra.mxu0 0.0
        %3473 = vmatprep.subr.mxu0 0.0
        %3474 = vmatpush1.msra.mxu0 0.0
        %3475 = vmatprep.subr.mxu0 0.0
        %3476 = vmatpush1.msra.mxu0 0.0
        %3477 = vmatprep.subr.mxu0 0.0
        %3478 = vmatpush1.msra.mxu0 0.0
        %3479 = vmatprep.subr.mxu0 0.0
        %3480 = vmatpush1.msra.mxu0 0.0
        %3481 = vmatprep.subr.mxu0 0.0
        %3482 = vmatpush1.msra.mxu0 0.0
        %3483 = vmatprep.mubr.f32.mxu0 0.0
        %3484 = vmatmul.mubr.f32.gmra.mrb[0].mxu0 %v3417
        %v3485 = vpop.f32.mrb[0].mxu0
        %v3486 = vadd.f32 0.0, %v3485
        %v3487 = vpop.f32.mrb[0].mxu0
        %3488 = vdwg.mxu0
        %v3489 = vmul.f32 %v3341, %v3486
        %v3490 = vmul.f32 %v2891, %v3489
        %v3491 = vmul.f32 %v2894, %v3489
        %v3492 = vmul.f32 %v2899, %v3489
        %v3493 = vmul.f32 %v2902, %v3489
        %v3494 = vmul.f32 %v2907, %v3489
        %v3496 = vsel %vm2912, %v3490, 0
        %v3499 = vsel %vm2912, %v3491, 0
        %v3502 = vsel %vm2912, %v3492, 0
        %v3505 = vsel %vm2912, %v3493, 0
        %v3508 = vsel %vm2912, %v3494, 0
        %3510 = vmatprep.subr.mxu0 0.0
        %3511 = vmatpush1.msra.mxu0 %v2811
        %3512 = vmatprep.subr.mxu0 0.0
        %3513 = vmatpush1.msra.mxu0 %v2812
        %3514 = vmatprep.subr.mxu0 0.0
        %3515 = vmatpush1.msra.mxu0 %v2813
        %3516 = vmatprep.subr.mxu0 0.0
        %3517 = vmatpush1.msra.mxu0 %v2814
        %3518 = vmatprep.subr.mxu0 0.0
        %3519 = vmatpush1.msra.mxu0 %v2815
        %3520 = vmatprep.subr.mxu0 0.0
        %3521 = vmatpush1.msra.mxu0 %v2816
        %3522 = vmatprep.subr.mxu0 0.0
        %3523 = vmatpush1.msra.mxu0 %v2817
        %3524 = vmatprep.subr.mxu0 0.0
        %3525 = vmatpush1.msra.mxu0 %v2818
        %3526 = vmatprep.subr.mxu0 0.0
        %3527 = vmatpush1.msra.mxu0 %v2819
        %3528 = vmatprep.subr.mxu0 0.0
        %3529 = vmatpush1.msra.mxu0 %v2929
        %3530 = vmatprep.subr.mxu0 0.0
        %3531 = vmatpush1.msra.mxu0 0.0
        %3532 = vmatprep.subr.mxu0 0.0
        %3533 = vmatpush1.msra.mxu0 0.0
        %3534 = vmatprep.subr.mxu0 0.0
        %3535 = vmatpush1.msra.mxu0 0.0
        %3536 = vmatprep.subr.mxu0 0.0
        %3537 = vmatpush1.msra.mxu0 0.0
        %3538 = vmatprep.subr.mxu0 0.0
        %3539 = vmatpush1.msra.mxu0 0.0
        %3540 = vmatprep.subr.mxu0 0.0
        %3541 = vmatpush1.msra.mxu0 0.0
        %3542 = vmatprep.subr.mxu0 0.0
        %3543 = vmatpush1.msra.mxu0 0.0
        %3544 = vmatprep.subr.mxu0 0.0
        %3545 = vmatpush1.msra.mxu0 0.0
        %3546 = vmatprep.subr.mxu0 0.0
        %3547 = vmatpush1.msra.mxu0 0.0
        %3548 = vmatprep.subr.mxu0 0.0
        %3549 = vmatpush1.msra.mxu0 0.0
        %3550 = vmatprep.subr.mxu0 0.0
        %3551 = vmatpush1.msra.mxu0 0.0
        %3552 = vmatprep.subr.mxu0 0.0
        %3553 = vmatpush1.msra.mxu0 0.0
        %3554 = vmatprep.subr.mxu0 0.0
        %3555 = vmatpush1.msra.mxu0 0.0
        %3556 = vmatprep.subr.mxu0 0.0
        %3557 = vmatpush1.msra.mxu0 0.0
        %3558 = vmatprep.subr.mxu0 0.0
        %3559 = vmatpush1.msra.mxu0 0.0
        %3560 = vmatprep.subr.mxu0 0.0
        %3561 = vmatpush1.msra.mxu0 0.0
        %3562 = vmatprep.subr.mxu0 0.0
        %3563 = vmatpush1.msra.mxu0 0.0
        %3564 = vmatprep.subr.mxu0 0.0
        %3565 = vmatpush1.msra.mxu0 0.0
        %3566 = vmatprep.subr.mxu0 0.0
        %3567 = vmatpush1.msra.mxu0 0.0
        %3568 = vmatprep.subr.mxu0 0.0
        %3569 = vmatpush1.msra.mxu0 0.0
        %3570 = vmatprep.subr.mxu0 0.0
        %3571 = vmatpush1.msra.mxu0 0.0
        %3572 = vmatprep.subr.mxu0 0.0
        %3573 = vmatpush1.msra.mxu0 0.0
        %3574 = vmatprep.mubr.f32.mxu0 0.0
        %3575 = vmatmul.mubr.f32.gmra.mrb[0].mxu0 %v3496
        %v3576 = vpop.f32.mrb[0].mxu0
        %v3577 = vadd.f32 0.0, %v3576
        %v3578 = vpop.f32.mrb[0].mxu0
        %3579 = vmatprep.mubr.f32.mxu0 0.0
        %3580 = vmatmul.mubr.f32.gmra.mrb[0].mxu0 %v3499
        %v3581 = vpop.f32.mrb[0].mxu0
        %v3582 = vadd.f32 0.0, %v3581
        %v3583 = vpop.f32.mrb[0].mxu0
        %3584 = vmatprep.mubr.f32.mxu0 0.0
        %3585 = vmatmul.mubr.f32.gmra.mrb[0].mxu0 %v3502
        %v3586 = vpop.f32.mrb[0].mxu0
        %v3587 = vadd.f32 0.0, %v3586
        %v3588 = vpop.f32.mrb[0].mxu0
        %3589 = vmatprep.mubr.f32.mxu0 0.0
        %3590 = vmatmul.mubr.f32.gmra.mrb[0].mxu0 %v3505
        %v3591 = vpop.f32.mrb[0].mxu0
        %v3592 = vadd.f32 0.0, %v3591
        %v3593 = vpop.f32.mrb[0].mxu0
        %3594 = vmatprep.mubr.f32.mxu0 0.0
        %3595 = vmatmul.mubr.f32.gmra.mrb[0].mxu0 %v3508
        %v3596 = vpop.f32.mrb[0].mxu0
        %v3597 = vadd.f32 0.0, %v3596
        %v3598 = vpop.f32.mrb[0].mxu0
        %3599 = vdwg.mxu0
        %3601 = vrot.lane.b32.xlu0 %v1171, 62
        %v3602 = vpop.permute.xlu0 %3601
        %3605 = vrot.lane.b32.xlu0 %v1193, 124
        %v3606 = vpop.permute.xlu0 %3605
        %3609 = vrot.lane.b32.xlu0 %v1215, 58
        %v3610 = vpop.permute.xlu0 %3609
        %3613 = vrot.lane.b32.xlu0 %v1237, 120
        %v3614 = vpop.permute.xlu0 %3613
        %3617 = vrot.lane.b32.xlu0 %v1950, 54
        %v3618 = vpop.permute.xlu0 %3617
        %3621 = vrot.lane.b32.xlu0 %v1951, 116
        %v3622 = vpop.permute.xlu0 %3621
        %3625 = vrot.lane.b32.xlu0 %v1952, 50
        %v3626 = vpop.permute.xlu0 %3625
        %3629 = vrot.lane.b32.xlu0 %v1953, 112
        %v3630 = vpop.permute.xlu0 %3629
        %3633 = vrot.lane.b32.xlu0 %v1954, 46
        %v3634 = vpop.permute.xlu0 %3633
        %3637 = vrot.lane.b32.xlu0 %v2788, 108
        %v3638 = vpop.permute.xlu0 %3637
        %3641 = vrot.lane.b32.xlu0 %v2793, 124
        %v3642 = vpop.permute.xlu0 %3641
        %3645 = vrot.lane.b32.xlu0 %v2798, 12
        %v3646 = vpop.permute.xlu0 %3645
        %3649 = vrot.lane.b32.xlu0 %v2803, 28
        %v3650 = vpop.permute.xlu0 %3649
        %3653 = vrot.lane.b32.xlu0 %v2808, 44
        %v3654 = vpop.permute.xlu0 %3653
        %3657 = vrot.lane.b32.xlu0 %v3577, 60
        %v3658 = vpop.permute.xlu0 %3657
        %v3660 = vsel %vm1058, %v1149, %v3602
        %vm3661 = vcmask 1014784
        %v3662 = vsel %vm3661, %v3660, %v3606
        %vm3663 = vcmask 474112
        %v3664 = vsel %vm3663, %v3606, %v3610
        %vm3665 = vcmask 982016
        %v3666 = vsel %vm3665, %v3664, %v3614
        %vm3667 = vcmask 441344
        %v3668 = vsel %vm3667, %v3614, %v3618
        %vm3669 = vcmask 949248
        %v3670 = vsel %vm3669, %v3668, %v3622
        %vm3671 = vcmask 408576
        %v3672 = vsel %vm3671, %v3622, %v3626
        %vm3673 = vcmask 916480
        %v3674 = vsel %vm3673, %v3672, %v3630
        %vm3675 = vcmask 375808
        %v3676 = vsel %vm3675, %v3630, %v3634
        %vm3677 = vcmask 883712
        %v3678 = vsel %vm3677, %v3676, %v3638
        %v3679 = vsel %vm3661, %v3678, %v3642
        %v3680 = vsel %vm2469, %v3642, %v3646
        %vm3681 = vcmask 228352
        %v3682 = vsel %vm3681, %v3680, %v3650
        %vm3683 = vcmask 359424
        %v3684 = vsel %vm3683, %v3682, %v3654
        %vm3685 = vcmask 490496
        %v3686 = vsel %vm3685, %v3684, %v3658
        %3688 = vrot.lane.b32.xlu0 %v3587, 7
        %v3689 = vpop.permute.xlu0 %3688
        %3692 = vrot.lane.b32.xlu0 %v3592, 14
        %v3693 = vpop.permute.xlu0 %3692
        %3696 = vrot.lane.b32.xlu0 %v3597, 21
        %v3697 = vpop.permute.xlu0 %3696
        %v3699 = vsel %vm2459, %v3582, %v3689
        %v3700 = vsel %vm2473, %v3699, %v3693
        %vm3701 = vcmask 171008
        %v3702 = vsel %vm3701, %v3700, %v3697
        %3704 = vrot.lane.b32.xlu0 %v3702, 67
        %v3705 = vpop.permute.xlu0 %3704
        %vm3707 = vcmask 547840
        %v3708 = vsel %vm3707, %v3686, %v3705
        %v3709 = vld [vmem:[%s16] sm:$0xff]
        %v3710 = vld [vmem:[%s16 + $0x8] sm:$0xff]
        %v3711 = vld [vmem:[%s16 + $0x10] sm:$0xff]
        %v3712 = vld [vmem:[%s16 + $0x18] sm:$0xff]
        %v3713 = vld [vmem:[%s16 + $0x20] sm:$0xff]
        %v3714 = vld [vmem:[%s16 + $0x28] sm:$0xff]
        %v3715 = vld [vmem:[%s16 + $0x30] sm:$0xff]
        %v3716 = vld [vmem:[%s16 + $0x38] sm:$0xff]
        %v3717 = vld [vmem:[%s16 + $0x40] sm:$0xff]
        %v3718 = vld [vmem:[%s16 + $0x48] sm:$0xff]
        %v3719 = vld [vmem:[%s16 + $0x50] sm:$0xff]
        %v3720 = vld [vmem:[%s16 + $0x58] sm:$0xff]
        %v3721 = vld [vmem:[%s16 + $0x60] sm:$0xff]
        %v3722 = vld [vmem:[%s16 + $0x68] sm:$0xff]
        %v3723 = vld [vmem:[%s16 + $0x70] sm:$0xff]
        %v3724 = vld [vmem:[%s16 + $0x78] sm:$0xff]
        %v3725 = vld [vmem:[%s16 + $0x80] sm:$0xff]
        %v3726 = vld [vmem:[%s16 + $0x88] sm:$0xff]
        %v3727 = vld [vmem:[%s16 + $0x90] sm:$0xff]
        %v3728 = vld [vmem:[%s16 + $0x98] sm:$0xff]
        %v3729 = vld [vmem:[%s16 + $0xa0] sm:$0xff]
        %v3730 = vld [vmem:[%s16 + $0xa8] sm:$0xff]
        %v3731 = vld [vmem:[%s16 + $0xb0] sm:$0xff]
        %v3732 = vld [vmem:[%s16 + $0xb8] sm:$0xff]
        %v3733 = vld [vmem:[%s16 + $0xc0] sm:$0xff]
        %v3734 = vld [vmem:[%s16 + $0xc8] sm:$0xff]
        %v3735 = vld [vmem:[%s16 + $0xd0] sm:$0xff]
        %v3736 = vld [vmem:[%s16 + $0xd8] sm:$0xff]
        %v3737 = vld [vmem:[%s16 + $0xe0] sm:$0xff]
        %v3738 = vld [vmem:[%s16 + $0xe8] sm:$0xff]
        %v3739 = vld [vmem:[%s16 + $0xf0] sm:$0xff]
        %v3740 = vld [vmem:[%s16 + $0xf8] sm:$0xff]
        %v3741 = vld [vmem:[%s16 + $0x100] sm:$0xff]
        %v3742 = vld [vmem:[%s16 + $0x108] sm:$0xff]
        %v3743 = vld [vmem:[%s16 + $0x110] sm:$0xff]
        %v3744 = vld [vmem:[%s16 + $0x118] sm:$0xff]
        %v3745 = vld [vmem:[%s16 + $0x120] sm:$0xff]
        %v3746 = vld [vmem:[%s16 + $0x128] sm:$0xff]
        %v3747 = vld [vmem:[%s16 + $0x130] sm:$0xff]
        %v3748 = vld [vmem:[%s16 + $0x138] sm:$0xff]
        %v3749 = vld [vmem:[%s16 + $0x140] sm:$0xff]
        %v3750 = vld [vmem:[%s16 + $0x148] sm:$0xff]
        %v3751 = vld [vmem:[%s16 + $0x150] sm:$0xff]
        %v3752 = vld [vmem:[%s16 + $0x158] sm:$0xff]
        %v3753 = vld [vmem:[%s16 + $0x160] sm:$0xff]
        %v3754 = vld [vmem:[%s16 + $0x168] sm:$0xff]
        %v3755 = vld [vmem:[%s16 + $0x170] sm:$0xff]
        %v3756 = vld [vmem:[%s16 + $0x178] sm:$0xff]
        %v3757 = vld [vmem:[%s16 + $0x180] sm:$0xff]
        %v3758 = vld [vmem:[%s16 + $0x188] sm:$0xff]
        %v3759 = vld [vmem:[%s16 + $0x190] sm:$0xff]
        %v3760 = vld [vmem:[%s16 + $0x198] sm:$0xff]
        %v3761 = vld [vmem:[%s16 + $0x1a0] sm:$0xff]
        %v3762 = vld [vmem:[%s16 + $0x1a8] sm:$0xff]
        %v3763 = vld [vmem:[%s16 + $0x1b0] sm:$0xff]
        %v3764 = vld [vmem:[%s16 + $0x1b8] sm:$0xff]
        %v3765 = vld [vmem:[%s16 + $0x1c0] sm:$0xff]
        %v3766 = vld [vmem:[%s16 + $0x1c8] sm:$0xff]
        %v3767 = vld [vmem:[%s16 + $0x1d0] sm:$0xff]
        %v3768 = vld [vmem:[%s16 + $0x1d8] sm:$0xff]
        %v3769 = vld [vmem:[%s16 + $0x1e0] sm:$0xff]
        %v3770 = vld [vmem:[%s16 + $0x1e8] sm:$0xff]
        %v3771 = vld [vmem:[%s16 + $0x1f0] sm:$0xff]
        %v3772 = vld [vmem:[%s16 + $0x1f8] sm:$0xff]
        %v3773 = vld [vmem:[%s16 + $0x200] sm:$0xff]
        %v3774 = vld [vmem:[%s16 + $0x208] sm:$0xff]
        %v3775 = vld [vmem:[%s16 + $0x210] sm:$0xff]
        %v3776 = vld [vmem:[%s16 + $0x218] sm:$0xff]
        %v3777 = vld [vmem:[%s16 + $0x220] sm:$0xff]
        %v3778 = vld [vmem:[%s16 + $0x228] sm:$0xff]
        %v3779 = vld [vmem:[%s16 + $0x230] sm:$0xff]
        %v3780 = vld [vmem:[%s16 + $0x238] sm:$0xff]
        %v3781 = vld [vmem:[%s16 + $0x240] sm:$0xff]
        %v3782 = vld [vmem:[%s16 + $0x248] sm:$0xff]
        %v3783 = vld [vmem:[%s16 + $0x250] sm:$0xff]
        %v3784 = vld [vmem:[%s16 + $0x258] sm:$0xff]
        %v3785 = vld [vmem:[%s16 + $0x260] sm:$0xff]
        %v3786 = vld [vmem:[%s16 + $0x268] sm:$0xff]
        %v3787 = vld [vmem:[%s16 + $0x270] sm:$0xff]
        %v3788 = vld [vmem:[%s16 + $0x278] sm:$0xff]
        %v3789 = vld [vmem:[%s16 + $0x280] sm:$0xff]
        %v3790 = vld [vmem:[%s16 + $0x288] sm:$0xff]
        %v3791 = vld [vmem:[%s16 + $0x290] sm:$0xff]
        %v3792 = vld [vmem:[%s16 + $0x298] sm:$0xff]
        %v3793 = vld [vmem:[%s16 + $0x2a0] sm:$0xff]
        %v3794 = vld [vmem:[%s16 + $0x2a8] sm:$0xff]
        %v3795 = vld [vmem:[%s16 + $0x2b0] sm:$0xff]
        %v3796 = vld [vmem:[%s16 + $0x2b8] sm:$0xff]
        %v3797 = vld [vmem:[%s16 + $0x2c0] sm:$0xff]
        %v3798 = vld [vmem:[%s16 + $0x2c8] sm:$0xff]
        %v3799 = vld [vmem:[%s16 + $0x2d0] sm:$0xff]
        %v3800 = vld [vmem:[%s16 + $0x2d8] sm:$0xff]
        %v3801 = vpack.c.bf16 %v3662, %v3662
        %v3802 = vpack.c.bf16 %v3666, %v3666
        %v3803 = vpack.c.bf16 %v3670, %v3670
        %v3804 = vpack.c.bf16 %v3674, %v3674
        %v3805 = vpack.c.bf16 %v3679, %v3679
        %v3806 = vpack.c.bf16 %v3708, %v3708
        %v3807 = vld [vmem:[%s17] sm:$0x3]
        %v3809 = vlaneseq
        %v3810 = vshrl.u32 %v3809, 7
        %v3811 = vsub.s32 0, %v3810
        %v3812 = vrot.slane %v3807, %v3811
        %v3813 = vlaneseq
        %v3814 = vshrl.u32 %v3813, 7
        %v3815 = vsub.s32 1, %v3814
        %v3816 = vrot.slane %v3807, %v3815
        %v3911 = vunpack.c.l.b16 %v3709
        %v3912 = vunpack.c.h.b16 %v3709
        %v3913 = vunpack.c.l.b16 %v3710
        %v3914 = vunpack.c.h.b16 %v3710
        %v3915 = vunpack.c.l.b16 %v3711
        %v3916 = vunpack.c.h.b16 %v3711
        %v3917 = vunpack.c.l.b16 %v3712
        %v3918 = vunpack.c.h.b16 %v3712
        %v3919 = vunpack.c.l.b16 %v3713
        %v3920 = vunpack.c.h.b16 %v3713
        %v3921 = vunpack.c.l.b16 %v3714
        %v3922 = vunpack.c.h.b16 %v3714
        %v3923 = vunpack.c.l.b16 %v3715
        %v3924 = vunpack.c.h.b16 %v3715
        %v3925 = vunpack.c.l.b16 %v3716
        %v3926 = vunpack.c.h.b16 %v3716
        %v3927 = vunpack.c.l.b16 %v3717
        %v3928 = vunpack.c.h.b16 %v3717
        %v3929 = vunpack.c.l.b16 %v3718
        %v3930 = vunpack.c.h.b16 %v3718
        %v3931 = vunpack.c.l.b16 %v3719
        %v3932 = vunpack.c.h.b16 %v3719
        %v3933 = vunpack.c.l.b16 %v3720
        %v3934 = vunpack.c.h.b16 %v3720
        %v3935 = vunpack.c.l.b16 %v3721
        %v3936 = vunpack.c.h.b16 %v3721
        %v3937 = vunpack.c.l.b16 %v3722
        %v3938 = vunpack.c.h.b16 %v3722
        %v3939 = vunpack.c.l.b16 %v3723
        %v3940 = vunpack.c.h.b16 %v3723
        %v3941 = vunpack.c.l.b16 %v3724
        %v3942 = vunpack.c.h.b16 %v3724
        %v3943 = vunpack.c.l.b16 %v3725
        %v3944 = vunpack.c.h.b16 %v3725
        %v3945 = vunpack.c.l.b16 %v3726
        %v3946 = vunpack.c.h.b16 %v3726
        %v3947 = vunpack.c.l.b16 %v3727
        %v3948 = vunpack.c.h.b16 %v3727
        %v3949 = vunpack.c.l.b16 %v3728
        %v3950 = vunpack.c.h.b16 %v3728
        %v3951 = vunpack.c.l.b16 %v3729
        %v3952 = vunpack.c.h.b16 %v3729
        %v3953 = vunpack.c.l.b16 %v3730
        %v3954 = vunpack.c.h.b16 %v3730
        %v3955 = vunpack.c.l.b16 %v3731
        %v3956 = vunpack.c.h.b16 %v3731
        %v3957 = vunpack.c.l.b16 %v3732
        %v3958 = vunpack.c.h.b16 %v3732
        %v3959 = vunpack.c.l.b16 %v3733
        %v3960 = vunpack.c.h.b16 %v3733
        %v3961 = vunpack.c.l.b16 %v3734
        %v3962 = vunpack.c.h.b16 %v3734
        %v3963 = vunpack.c.l.b16 %v3735
        %v3964 = vunpack.c.h.b16 %v3735
        %v3965 = vunpack.c.l.b16 %v3736
        %v3966 = vunpack.c.h.b16 %v3736
        %v3967 = vunpack.c.l.b16 %v3737
        %v3968 = vunpack.c.h.b16 %v3737
        %v3969 = vunpack.c.l.b16 %v3738
        %v3970 = vunpack.c.h.b16 %v3738
        %v3971 = vunpack.c.l.b16 %v3739
        %v3972 = vunpack.c.h.b16 %v3739
        %v3973 = vunpack.c.l.b16 %v3740
        %v3974 = vunpack.c.h.b16 %v3740
        %v3975 = vunpack.c.l.b16 %v3741
        %v3976 = vunpack.c.h.b16 %v3741
        %v3977 = vunpack.c.l.b16 %v3742
        %v3978 = vunpack.c.h.b16 %v3742
        %v3979 = vunpack.c.l.b16 %v3743
        %v3980 = vunpack.c.h.b16 %v3743
        %v3981 = vunpack.c.l.b16 %v3744
        %v3982 = vunpack.c.h.b16 %v3744
        %v3983 = vunpack.c.l.b16 %v3745
        %v3984 = vunpack.c.h.b16 %v3745
        %v3985 = vunpack.c.l.b16 %v3746
        %v3986 = vunpack.c.h.b16 %v3746
        %v3987 = vunpack.c.l.b16 %v3747
        %v3988 = vunpack.c.h.b16 %v3747
        %v3989 = vunpack.c.l.b16 %v3748
        %v3990 = vunpack.c.h.b16 %v3748
        %v3991 = vunpack.c.l.b16 %v3749
        %v3992 = vunpack.c.h.b16 %v3749
        %v3993 = vunpack.c.l.b16 %v3750
        %v3994 = vunpack.c.h.b16 %v3750
        %v3995 = vunpack.c.l.b16 %v3751
        %v3996 = vunpack.c.h.b16 %v3751
        %v3997 = vunpack.c.l.b16 %v3752
        %v3998 = vunpack.c.h.b16 %v3752
        %v3999 = vunpack.c.l.b16 %v3753
        %v4000 = vunpack.c.h.b16 %v3753
        %v4001 = vunpack.c.l.b16 %v3754
        %v4002 = vunpack.c.h.b16 %v3754
        %v4003 = vunpack.c.l.b16 %v3755
        %v4004 = vunpack.c.h.b16 %v3755
        %v4005 = vunpack.c.l.b16 %v3756
        %v4006 = vunpack.c.h.b16 %v3756
        %v4007 = vunpack.c.l.b16 %v3757
        %v4008 = vunpack.c.h.b16 %v3757
        %v4009 = vunpack.c.l.b16 %v3758
        %v4010 = vunpack.c.h.b16 %v3758
        %v4011 = vunpack.c.l.b16 %v3759
        %v4012 = vunpack.c.h.b16 %v3759
        %v4013 = vunpack.c.l.b16 %v3760
        %v4014 = vunpack.c.h.b16 %v3760
        %v4015 = vunpack.c.l.b16 %v3761
        %v4016 = vunpack.c.h.b16 %v3761
        %v4017 = vunpack.c.l.b16 %v3762
        %v4018 = vunpack.c.h.b16 %v3762
        %v4019 = vunpack.c.l.b16 %v3763
        %v4020 = vunpack.c.h.b16 %v3763
        %v4021 = vunpack.c.l.b16 %v3764
        %v4022 = vunpack.c.h.b16 %v3764
        %v4023 = vunpack.c.l.b16 %v3765
        %v4024 = vunpack.c.h.b16 %v3765
        %v4025 = vunpack.c.l.b16 %v3766
        %v4026 = vunpack.c.h.b16 %v3766
        %v4027 = vunpack.c.l.b16 %v3767
        %v4028 = vunpack.c.h.b16 %v3767
        %v4029 = vunpack.c.l.b16 %v3768
        %v4030 = vunpack.c.h.b16 %v3768
        %v4031 = vunpack.c.l.b16 %v3769
        %v4032 = vunpack.c.h.b16 %v3769
        %v4033 = vunpack.c.l.b16 %v3770
        %v4034 = vunpack.c.h.b16 %v3770
        %v4035 = vunpack.c.l.b16 %v3771
        %v4036 = vunpack.c.h.b16 %v3771
        %v4037 = vunpack.c.l.b16 %v3772
        %v4038 = vunpack.c.h.b16 %v3772
        %v4039 = vunpack.c.l.b16 %v3773
        %v4040 = vunpack.c.h.b16 %v3773
        %v4041 = vunpack.c.l.b16 %v3774
        %v4042 = vunpack.c.h.b16 %v3774
        %v4043 = vunpack.c.l.b16 %v3775
        %v4044 = vunpack.c.h.b16 %v3775
        %v4045 = vunpack.c.l.b16 %v3776
        %v4046 = vunpack.c.h.b16 %v3776
        %v4047 = vunpack.c.l.b16 %v3777
        %v4048 = vunpack.c.h.b16 %v3777
        %v4049 = vunpack.c.l.b16 %v3778
        %v4050 = vunpack.c.h.b16 %v3778
        %v4051 = vunpack.c.l.b16 %v3779
        %v4052 = vunpack.c.h.b16 %v3779
        %v4053 = vunpack.c.l.b16 %v3780
        %v4054 = vunpack.c.h.b16 %v3780
        %v4055 = vunpack.c.l.b16 %v3781
        %v4056 = vunpack.c.h.b16 %v3781
        %v4057 = vunpack.c.l.b16 %v3782
        %v4058 = vunpack.c.h.b16 %v3782
        %v4059 = vunpack.c.l.b16 %v3783
        %v4060 = vunpack.c.h.b16 %v3783
        %v4061 = vunpack.c.l.b16 %v3784
        %v4062 = vunpack.c.h.b16 %v3784
        %v4063 = vunpack.c.l.b16 %v3785
        %v4064 = vunpack.c.h.b16 %v3785
        %v4065 = vunpack.c.l.b16 %v3786
        %v4066 = vunpack.c.h.b16 %v3786
        %v4067 = vunpack.c.l.b16 %v3787
        %v4068 = vunpack.c.h.b16 %v3787
        %v4069 = vunpack.c.l.b16 %v3788
        %v4070 = vunpack.c.h.b16 %v3788
        %v4071 = vunpack.c.l.b16 %v3789
        %v4072 = vunpack.c.h.b16 %v3789
        %v4073 = vunpack.c.l.b16 %v3790
        %v4074 = vunpack.c.h.b16 %v3790
        %v4075 = vunpack.c.l.b16 %v3791
        %v4076 = vunpack.c.h.b16 %v3791
        %v4077 = vunpack.c.l.b16 %v3792
        %v4078 = vunpack.c.h.b16 %v3792
        %v4079 = vunpack.c.l.b16 %v3793
        %v4080 = vunpack.c.h.b16 %v3793
        %v4081 = vunpack.c.l.b16 %v3794
        %v4082 = vunpack.c.h.b16 %v3794
        %v4083 = vunpack.c.l.b16 %v3795
        %v4084 = vunpack.c.h.b16 %v3795
        %v4085 = vunpack.c.l.b16 %v3796
        %v4086 = vunpack.c.h.b16 %v3796
        %v4087 = vunpack.c.l.b16 %v3797
        %v4088 = vunpack.c.h.b16 %v3797
        %v4089 = vunpack.c.l.b16 %v3798
        %v4090 = vunpack.c.h.b16 %v3798
        %v4091 = vunpack.c.l.b16 %v3799
        %v4092 = vunpack.c.h.b16 %v3799
        %v4093 = vunpack.c.l.b16 %v3800
        %v4094 = vunpack.c.h.b16 %v3800
        %v4095 = vpack.c.b16 %v3913, %v3911
        %v4096 = vpack.c.b16 %v3914, %v3912
        %v4097 = vpack.c.b16 %v3917, %v3915
        %v4098 = vpack.c.b16 %v3918, %v3916
        %v4099 = vpack.c.b16 %v3921, %v3919
        %v4100 = vpack.c.b16 %v3922, %v3920
        %v4101 = vpack.c.b16 %v3925, %v3923
        %v4102 = vpack.c.b16 %v3926, %v3924
        %v4103 = vpack.c.b16 %v3929, %v3927
        %v4104 = vpack.c.b16 %v3930, %v3928
        %v4105 = vpack.c.b16 %v3933, %v3931
        %v4106 = vpack.c.b16 %v3934, %v3932
        %v4107 = vpack.c.b16 %v3937, %v3935
        %v4108 = vpack.c.b16 %v3938, %v3936
        %v4109 = vpack.c.b16 %v3941, %v3939
        %v4110 = vpack.c.b16 %v3942, %v3940
        %v4111 = vpack.c.b16 %v3945, %v3943
        %v4112 = vpack.c.b16 %v3946, %v3944
        %v4113 = vpack.c.b16 %v3949, %v3947
        %v4114 = vpack.c.b16 %v3950, %v3948
        %v4115 = vpack.c.b16 %v3953, %v3951
        %v4116 = vpack.c.b16 %v3954, %v3952
        %v4117 = vpack.c.b16 %v3957, %v3955
        %v4118 = vpack.c.b16 %v3958, %v3956
        %v4119 = vpack.c.b16 %v3961, %v3959
        %v4120 = vpack.c.b16 %v3962, %v3960
        %v4121 = vpack.c.b16 %v3965, %v3963
        %v4122 = vpack.c.b16 %v3966, %v3964
        %v4123 = vpack.c.b16 %v3969, %v3967
        %v4124 = vpack.c.b16 %v3970, %v3968
        %v4125 = vpack.c.b16 %v3973, %v3971
        %v4126 = vpack.c.b16 %v3974, %v3972
        %v4127 = vpack.c.b16 %v3977, %v3975
        %v4128 = vpack.c.b16 %v3978, %v3976
        %v4129 = vpack.c.b16 %v3981, %v3979
        %v4130 = vpack.c.b16 %v3982, %v3980
        %v4131 = vpack.c.b16 %v3985, %v3983
        %v4132 = vpack.c.b16 %v3986, %v3984
        %v4133 = vpack.c.b16 %v3989, %v3987
        %v4134 = vpack.c.b16 %v3990, %v3988
        %v4135 = vpack.c.b16 %v3993, %v3991
        %v4136 = vpack.c.b16 %v3994, %v3992
        %v4137 = vpack.c.b16 %v3997, %v3995
        %v4138 = vpack.c.b16 %v3998, %v3996
        %v4139 = vpack.c.b16 %v4001, %v3999
        %v4140 = vpack.c.b16 %v4002, %v4000
        %v4141 = vpack.c.b16 %v4005, %v4003
        %v4142 = vpack.c.b16 %v4006, %v4004
        %v4143 = vpack.c.b16 %v4009, %v4007
        %v4144 = vpack.c.b16 %v4010, %v4008
        %v4145 = vpack.c.b16 %v4013, %v4011
        %v4146 = vpack.c.b16 %v4014, %v4012
        %v4147 = vpack.c.b16 %v4017, %v4015
        %v4148 = vpack.c.b16 %v4018, %v4016
        %v4149 = vpack.c.b16 %v4021, %v4019
        %v4150 = vpack.c.b16 %v4022, %v4020
        %v4151 = vpack.c.b16 %v4025, %v4023
        %v4152 = vpack.c.b16 %v4026, %v4024
        %v4153 = vpack.c.b16 %v4029, %v4027
        %v4154 = vpack.c.b16 %v4030, %v4028
        %v4155 = vpack.c.b16 %v4033, %v4031
        %v4156 = vpack.c.b16 %v4034, %v4032
        %v4157 = vpack.c.b16 %v4037, %v4035
        %v4158 = vpack.c.b16 %v4038, %v4036
        %v4159 = vpack.c.b16 %v4041, %v4039
        %v4160 = vpack.c.b16 %v4042, %v4040
        %v4161 = vpack.c.b16 %v4045, %v4043
        %v4162 = vpack.c.b16 %v4046, %v4044
        %v4163 = vpack.c.b16 %v4049, %v4047
        %v4164 = vpack.c.b16 %v4050, %v4048
        %v4165 = vpack.c.b16 %v4053, %v4051
        %v4166 = vpack.c.b16 %v4054, %v4052
        %v4167 = vpack.c.b16 %v4057, %v4055
        %v4168 = vpack.c.b16 %v4058, %v4056
        %v4169 = vpack.c.b16 %v4061, %v4059
        %v4170 = vpack.c.b16 %v4062, %v4060
        %v4171 = vpack.c.b16 %v4065, %v4063
        %v4172 = vpack.c.b16 %v4066, %v4064
        %v4173 = vpack.c.b16 %v4069, %v4067
        %v4174 = vpack.c.b16 %v4070, %v4068
        %v4175 = vpack.c.b16 %v4073, %v4071
        %v4176 = vpack.c.b16 %v4074, %v4072
        %v4177 = vpack.c.b16 %v4077, %v4075
        %v4178 = vpack.c.b16 %v4078, %v4076
        %v4179 = vpack.c.b16 %v4081, %v4079
        %v4180 = vpack.c.b16 %v4082, %v4080
        %v4181 = vpack.c.b16 %v4085, %v4083
        %v4182 = vpack.c.b16 %v4086, %v4084
        %v4183 = vpack.c.b16 %v4089, %v4087
        %v4184 = vpack.c.b16 %v4090, %v4088
        %v4185 = vpack.c.b16 %v4093, %v4091
        %v4186 = vpack.c.b16 %v4094, %v4092
        %vm4277 = vcmask 777216
        %v4279 = vsel %vm4277, %v3806, 0
        %vm4281 = vcmask 1047552
        %v4282 = vsel %vm1068, 4294967295, 65535
        %v4283 = vsel %vm4281, %v4282, 0
        %v4285 = vand.u32 %v4185, %v4283
        %v4288 = vand.u32 %v4186, %v4283
        %4290 = vmatprep.subr.bf16.mxu0 %v4096
        %4291 = vmatpush1.bf16.msra.mxu0 %v4095
        %4292 = vmatprep.subr.bf16.mxu0 %v4098
        %4293 = vmatpush1.bf16.msra.mxu0 %v4097
        %4294 = vmatprep.subr.bf16.mxu0 %v4100
        %4295 = vmatpush1.bf16.msra.mxu0 %v4099
        %4296 = vmatprep.subr.bf16.mxu0 %v4102
        %4297 = vmatpush1.bf16.msra.mxu0 %v4101
        %4298 = vmatprep.subr.bf16.mxu0 %v4104
        %4299 = vmatpush1.bf16.msra.mxu0 %v4103
        %4300 = vmatprep.subr.bf16.mxu0 %v4106
        %4301 = vmatpush1.bf16.msra.mxu0 %v4105
        %4302 = vmatprep.subr.bf16.mxu0 %v4108
        %4303 = vmatpush1.bf16.msra.mxu0 %v4107
        %4304 = vmatprep.subr.bf16.mxu0 %v4110
        %4305 = vmatpush1.bf16.msra.mxu0 %v4109
        %4306 = vmatprep.subr.bf16.mxu0 %v4112
        %4307 = vmatpush1.bf16.msra.mxu0 %v4111
        %4308 = vmatprep.subr.bf16.mxu0 %v4114
        %4309 = vmatpush1.bf16.msra.mxu0 %v4113
        %4310 = vmatprep.subr.bf16.mxu0 %v4116
        %4311 = vmatpush1.bf16.msra.mxu0 %v4115
        %4312 = vmatprep.subr.bf16.mxu0 %v4118
        %4313 = vmatpush1.bf16.msra.mxu0 %v4117
        %4314 = vmatprep.subr.bf16.mxu0 %v4120
        %4315 = vmatpush1.bf16.msra.mxu0 %v4119
        %4316 = vmatprep.subr.bf16.mxu0 %v4122
        %4317 = vmatpush1.bf16.msra.mxu0 %v4121
        %4318 = vmatprep.subr.bf16.mxu0 %v4124
        %4319 = vmatpush1.bf16.msra.mxu0 %v4123
        %4320 = vmatprep.subr.bf16.mxu0 %v4126
        %4321 = vmatpush1.bf16.msra.mxu0 %v4125
        %4322 = vmatprep.mubr.bf16.mxu0 %v3802
        %4323 = vmatmul.mubr.bf16.gmra.mrb[0].mxu0 %v3801
        %v4324 = vpop.f32.mrb[0].mxu0
        %v4325 = vadd.f32 %v3812, %v4324
        %v4326 = vpop.f32.mrb[0].mxu0
        %v4327 = vadd.f32 %v3816, %v4326
        %v4328 = vpop.f32.mrb[0].mxu0
        %v4329 = vpop.f32.mrb[0].mxu0
        %4330 = vdwg.mxu0
        %4331 = vmatprep.subr.bf16.mxu0 %v4128
        %4332 = vmatpush1.bf16.msra.mxu0 %v4127
        %4333 = vmatprep.subr.bf16.mxu0 %v4130
        %4334 = vmatpush1.bf16.msra.mxu0 %v4129
        %4335 = vmatprep.subr.bf16.mxu0 %v4132
        %4336 = vmatpush1.bf16.msra.mxu0 %v4131
        %4337 = vmatprep.subr.bf16.mxu0 %v4134
        %4338 = vmatpush1.bf16.msra.mxu0 %v4133
        %4339 = vmatprep.subr.bf16.mxu0 %v4136
        %4340 = vmatpush1.bf16.msra.mxu0 %v4135
        %4341 = vmatprep.subr.bf16.mxu0 %v4138
        %4342 = vmatpush1.bf16.msra.mxu0 %v4137
        %4343 = vmatprep.subr.bf16.mxu0 %v4140
        %4344 = vmatpush1.bf16.msra.mxu0 %v4139
        %4345 = vmatprep.subr.bf16.mxu0 %v4142
        %4346 = vmatpush1.bf16.msra.mxu0 %v4141
        %4347 = vmatprep.subr.bf16.mxu0 %v4144
        %4348 = vmatpush1.bf16.msra.mxu0 %v4143
        %4349 = vmatprep.subr.bf16.mxu0 %v4146
        %4350 = vmatpush1.bf16.msra.mxu0 %v4145
        %4351 = vmatprep.subr.bf16.mxu0 %v4148
        %4352 = vmatpush1.bf16.msra.mxu0 %v4147
        %4353 = vmatprep.subr.bf16.mxu0 %v4150
        %4354 = vmatpush1.bf16.msra.mxu0 %v4149
        %4355 = vmatprep.subr.bf16.mxu0 %v4152
        %4356 = vmatpush1.bf16.msra.mxu0 %v4151
        %4357 = vmatprep.subr.bf16.mxu0 %v4154
        %4358 = vmatpush1.bf16.msra.mxu0 %v4153
        %4359 = vmatprep.subr.bf16.mxu0 %v4156
        %4360 = vmatpush1.bf16.msra.mxu0 %v4155
        %4361 = vmatprep.subr.bf16.mxu0 %v4158
        %4362 = vmatpush1.bf16.msra.mxu0 %v4157
        %4363 = vmatprep.mubr.bf16.mxu0 %v3804
        %4364 = vmatmul.mubr.bf16.gmra.mrb[0].mxu0 %v3803
        %v4365 = vpop.f32.mrb[0].mxu0
        %v4366 = vadd.f32 %v4325, %v4365
        %v4367 = vpop.f32.mrb[0].mxu0
        %v4368 = vadd.f32 %v4327, %v4367
        %v4369 = vpop.f32.mrb[0].mxu0
        %v4370 = vpop.f32.mrb[0].mxu0
        %4371 = vdwg.mxu0
        %4372 = vmatprep.subr.bf16.mxu0 %v4160
        %4373 = vmatpush1.bf16.msra.mxu0 %v4159
        %4374 = vmatprep.subr.bf16.mxu0 %v4162
        %4375 = vmatpush1.bf16.msra.mxu0 %v4161
        %4376 = vmatprep.subr.bf16.mxu0 %v4164
        %4377 = vmatpush1.bf16.msra.mxu0 %v4163
        %4378 = vmatprep.subr.bf16.mxu0 %v4166
        %4379 = vmatpush1.bf16.msra.mxu0 %v4165
        %4380 = vmatprep.subr.bf16.mxu0 %v4168
        %4381 = vmatpush1.bf16.msra.mxu0 %v4167
        %4382 = vmatprep.subr.bf16.mxu0 %v4170
        %4383 = vmatpush1.bf16.msra.mxu0 %v4169
        %4384 = vmatprep.subr.bf16.mxu0 %v4172
        %4385 = vmatpush1.bf16.msra.mxu0 %v4171
        %4386 = vmatprep.subr.bf16.mxu0 %v4174
        %4387 = vmatpush1.bf16.msra.mxu0 %v4173
        %4388 = vmatprep.subr.bf16.mxu0 %v4176
        %4389 = vmatpush1.bf16.msra.mxu0 %v4175
        %4390 = vmatprep.subr.bf16.mxu0 %v4178
        %4391 = vmatpush1.bf16.msra.mxu0 %v4177
        %4392 = vmatprep.subr.bf16.mxu0 %v4180
        %4393 = vmatpush1.bf16.msra.mxu0 %v4179
        %4394 = vmatprep.subr.bf16.mxu0 %v4182
        %4395 = vmatpush1.bf16.msra.mxu0 %v4181
        %4396 = vmatprep.subr.bf16.mxu0 %v4184
        %4397 = vmatpush1.bf16.msra.mxu0 %v4183
        %4398 = vmatprep.subr.bf16.mxu0 %v4288
        %4399 = vmatpush1.bf16.msra.mxu0 %v4285
        %4400 = vmatprep.subr.bf16.mxu0 0
        %4401 = vmatpush1.bf16.msra.mxu0 0
        %4402 = vmatprep.subr.bf16.mxu0 0
        %4403 = vmatpush1.bf16.msra.mxu0 0
        %4404 = vmatprep.mubr.bf16.mxu0 %v4279
        %4405 = vmatmul.mubr.bf16.gmra.mrb[0].mxu0 %v3805
        %v4406 = vpop.f32.mrb[0].mxu0
        %v4407 = vadd.f32 %v4366, %v4406
        %v4408 = vpop.f32.mrb[0].mxu0
        %v4409 = vadd.f32 %v4368, %v4408
        %v4410 = vpop.f32.mrb[0].mxu0
        %v4411 = vpop.f32.mrb[0].mxu0
        %4412 = vdwg.mxu0
        %vm4413 = vcmp.ge.f32.partialorder %v4407, 0.0
        %vm4414 = vcmp.ge.f32.partialorder %v4409, 0.0
        %v4415 = vmul.f32 %v4407, 0.01
        %v4416 = vmul.f32 %v4409, 0.01
        %v4417 = vsel %vm4413, %v4407, %v4415
        %v4418 = vsel %vm4414, %v4409, %v4416
        %v4419 = vld [vmem:[#allocation21] sm:$0xf]
        %v4420 = vld [vmem:[#allocation21 + $0x4] sm:$0xf]
        %v4421 = vld [vmem:[#allocation21 + $0x8] sm:$0xf]
        %v4422 = vld [vmem:[#allocation21 + $0xc] sm:$0xf]
        %v4423 = vld [vmem:[#allocation21 + $0x10] sm:$0xf]
        %v4424 = vld [vmem:[#allocation21 + $0x14] sm:$0xf]
        %v4425 = vld [vmem:[#allocation21 + $0x18] sm:$0xf]
        %v4426 = vld [vmem:[#allocation21 + $0x1c] sm:$0xf]
        %v4427 = vld [vmem:[#allocation21 + $0x20] sm:$0xf]
        %v4428 = vld [vmem:[#allocation21 + $0x24] sm:$0xf]
        %v4429 = vld [vmem:[#allocation21 + $0x28] sm:$0xf]
        %v4430 = vld [vmem:[#allocation21 + $0x2c] sm:$0xf]
        %v4431 = vld [vmem:[#allocation21 + $0x30] sm:$0xf]
        %v4432 = vld [vmem:[#allocation21 + $0x34] sm:$0xf]
        %v4433 = vld [vmem:[#allocation21 + $0x38] sm:$0xf]
        %v4434 = vld [vmem:[#allocation21 + $0x3c] sm:$0xf]
        %v4435 = vld [vmem:[#allocation21 + $0x40] sm:$0xf]
        %v4436 = vld [vmem:[#allocation21 + $0x44] sm:$0xf]
        %v4437 = vld [vmem:[#allocation21 + $0x48] sm:$0xf]
        %v4438 = vld [vmem:[#allocation21 + $0x4c] sm:$0xf]
        %v4439 = vld [vmem:[#allocation21 + $0x50] sm:$0xf]
        %v4440 = vld [vmem:[#allocation21 + $0x54] sm:$0xf]
        %v4441 = vld [vmem:[#allocation21 + $0x58] sm:$0xf]
        %v4442 = vld [vmem:[#allocation21 + $0x5c] sm:$0xf]
        %v4443 = vld [vmem:[#allocation21 + $0x60] sm:$0xf]
        %v4444 = vld [vmem:[#allocation21 + $0x64] sm:$0xf]
        %v4445 = vld [vmem:[#allocation21 + $0x68] sm:$0xf]
        %v4446 = vld [vmem:[#allocation21 + $0x6c] sm:$0xf]
        %v4447 = vld [vmem:[#allocation21 + $0x70] sm:$0xf]
        %v4448 = vld [vmem:[#allocation21 + $0x74] sm:$0xf]
        %v4449 = vld [vmem:[#allocation21 + $0x78] sm:$0xf]
        %v4450 = vld [vmem:[#allocation21 + $0x7c] sm:$0xf]
        %v4451 = vpack.c.bf16 %v4417, %v4417
        %v4452 = vpack.c.bf16 %v4418, %v4418
        %v4453 = vld [vmem:[%s19] sm:$0x1]
        %v4455 = vlaneseq
        %v4456 = vshrl.u32 %v4455, 7
        %v4457 = vsub.s32 0, %v4456
        %v4458 = vrot.slane %v4453, %v4457
        %v4492 = vunpack.c.l.b16 %v4419
        %v4493 = vunpack.c.l.b16 %v4420
        %v4494 = vunpack.c.l.b16 %v4421
        %v4495 = vunpack.c.l.b16 %v4422
        %v4496 = vunpack.c.l.b16 %v4423
        %v4497 = vunpack.c.l.b16 %v4424
        %v4498 = vunpack.c.l.b16 %v4425
        %v4499 = vunpack.c.l.b16 %v4426
        %v4500 = vunpack.c.l.b16 %v4427
        %v4501 = vunpack.c.l.b16 %v4428
        %v4502 = vunpack.c.l.b16 %v4429
        %v4503 = vunpack.c.l.b16 %v4430
        %v4504 = vunpack.c.l.b16 %v4431
        %v4505 = vunpack.c.l.b16 %v4432
        %v4506 = vunpack.c.l.b16 %v4433
        %v4507 = vunpack.c.l.b16 %v4434
        %v4508 = vunpack.c.l.b16 %v4435
        %v4509 = vunpack.c.l.b16 %v4436
        %v4510 = vunpack.c.l.b16 %v4437
        %v4511 = vunpack.c.l.b16 %v4438
        %v4512 = vunpack.c.l.b16 %v4439
        %v4513 = vunpack.c.l.b16 %v4440
        %v4514 = vunpack.c.l.b16 %v4441
        %v4515 = vunpack.c.l.b16 %v4442
        %v4516 = vunpack.c.l.b16 %v4443
        %v4517 = vunpack.c.l.b16 %v4444
        %v4518 = vunpack.c.l.b16 %v4445
        %v4519 = vunpack.c.l.b16 %v4446
        %v4520 = vunpack.c.l.b16 %v4447
        %v4521 = vunpack.c.l.b16 %v4448
        %v4522 = vunpack.c.l.b16 %v4449
        %v4523 = vunpack.c.l.b16 %v4450
        %v4524 = vpack.c.b16 %v4493, %v4492
        %v4525 = vpack.c.b16 %v4495, %v4494
        %v4526 = vpack.c.b16 %v4497, %v4496
        %v4527 = vpack.c.b16 %v4499, %v4498
        %v4528 = vpack.c.b16 %v4501, %v4500
        %v4529 = vpack.c.b16 %v4503, %v4502
        %v4530 = vpack.c.b16 %v4505, %v4504
        %v4531 = vpack.c.b16 %v4507, %v4506
        %v4532 = vpack.c.b16 %v4509, %v4508
        %v4533 = vpack.c.b16 %v4511, %v4510
        %v4534 = vpack.c.b16 %v4513, %v4512
        %v4535 = vpack.c.b16 %v4515, %v4514
        %v4536 = vpack.c.b16 %v4517, %v4516
        %v4537 = vpack.c.b16 %v4519, %v4518
        %v4538 = vpack.c.b16 %v4521, %v4520
        %v4539 = vpack.c.b16 %v4523, %v4522
        %4556 = vmatprep.subr.bf16.mxu0 0
        %4557 = vmatpush1.bf16.msra.mxu0 %v4524
        %4558 = vmatprep.subr.bf16.mxu0 0
        %4559 = vmatpush1.bf16.msra.mxu0 %v4525
        %4560 = vmatprep.subr.bf16.mxu0 0
        %4561 = vmatpush1.bf16.msra.mxu0 %v4526
        %4562 = vmatprep.subr.bf16.mxu0 0
        %4563 = vmatpush1.bf16.msra.mxu0 %v4527
        %4564 = vmatprep.subr.bf16.mxu0 0
        %4565 = vmatpush1.bf16.msra.mxu0 %v4528
        %4566 = vmatprep.subr.bf16.mxu0 0
        %4567 = vmatpush1.bf16.msra.mxu0 %v4529
        %4568 = vmatprep.subr.bf16.mxu0 0
        %4569 = vmatpush1.bf16.msra.mxu0 %v4530
        %4570 = vmatprep.subr.bf16.mxu0 0
        %4571 = vmatpush1.bf16.msra.mxu0 %v4531
        %4572 = vmatprep.subr.bf16.mxu0 0
        %4573 = vmatpush1.bf16.msra.mxu0 %v4532
        %4574 = vmatprep.subr.bf16.mxu0 0
        %4575 = vmatpush1.bf16.msra.mxu0 %v4533
        %4576 = vmatprep.subr.bf16.mxu0 0
        %4577 = vmatpush1.bf16.msra.mxu0 %v4534
        %4578 = vmatprep.subr.bf16.mxu0 0
        %4579 = vmatpush1.bf16.msra.mxu0 %v4535
        %4580 = vmatprep.subr.bf16.mxu0 0
        %4581 = vmatpush1.bf16.msra.mxu0 %v4536
        %4582 = vmatprep.subr.bf16.mxu0 0
        %4583 = vmatpush1.bf16.msra.mxu0 %v4537
        %4584 = vmatprep.subr.bf16.mxu0 0
        %4585 = vmatpush1.bf16.msra.mxu0 %v4538
        %4586 = vmatprep.subr.bf16.mxu0 0
        %4587 = vmatpush1.bf16.msra.mxu0 %v4539
        %4588 = vmatprep.mubr.bf16.mxu0 %v4452
        %4589 = vmatmul.mubr.bf16.gmra.mrb[0].mxu0 %v4451
        %v4590 = vpop.f32.mrb[0].mxu0
        %v4591 = vadd.f32 %v4458, %v4590
        %v4592 = vpop.f32.mrb[0].mxu0
        %v4593 = vpop.f32.mrb[0].mxu0
        %v4594 = vpop.f32.mrb[0].mxu0
        %4595 = vdwg.mxu0
        %vm4596 = vcmp.ge.f32.partialorder %v4591, 0.0
        %v4597 = vmul.f32 %v4591, 0.01
        %v4598 = vsel %vm4596, %v4591, %v4597
        %v4599 = vld [vmem:[%s20] sm:$0xf]
        %v4600 = vld [vmem:[%s20 + $0x4] sm:$0xf]
        %v4601 = vld [vmem:[%s20 + $0x8] sm:$0xf]
        %v4602 = vld [vmem:[%s20 + $0xc] sm:$0xf]
        %v4603 = vld [vmem:[%s20 + $0x10] sm:$0xf]
        %v4604 = vld [vmem:[%s20 + $0x14] sm:$0xf]
        %v4605 = vld [vmem:[%s20 + $0x18] sm:$0xf]
        %v4606 = vld [vmem:[%s20 + $0x1c] sm:$0xf]
        %v4607 = vld [vmem:[%s20 + $0x20] sm:$0xf]
        %v4608 = vld [vmem:[%s20 + $0x24] sm:$0xf]
        %v4609 = vld [vmem:[%s20 + $0x28] sm:$0xf]
        %v4610 = vld [vmem:[%s20 + $0x2c] sm:$0xf]
        %v4611 = vld [vmem:[%s20 + $0x30] sm:$0xf]
        %v4612 = vld [vmem:[%s20 + $0x34] sm:$0xf]
        %v4613 = vld [vmem:[%s20 + $0x38] sm:$0xf]
        %v4614 = vld [vmem:[%s20 + $0x3c] sm:$0xf]
        %v4615 = vpack.c.bf16 %v4598, %v4598
        %v4616 = vld [vmem:[%s21] sm:$0x1]
        %v4618 = vlaneseq
        %v4619 = vshrl.u32 %v4618, 7
        %v4620 = vsub.s32 0, %v4619
        %v4621 = vrot.slane %v4616, %v4620
        %v4639 = vunpack.c.l.b16 %v4599
        %v4640 = vunpack.c.l.b16 %v4600
        %v4641 = vunpack.c.l.b16 %v4601
        %v4642 = vunpack.c.l.b16 %v4602
        %v4643 = vunpack.c.l.b16 %v4603
        %v4644 = vunpack.c.l.b16 %v4604
        %v4645 = vunpack.c.l.b16 %v4605
        %v4646 = vunpack.c.l.b16 %v4606
        %v4647 = vunpack.c.l.b16 %v4607
        %v4648 = vunpack.c.l.b16 %v4608
        %v4649 = vunpack.c.l.b16 %v4609
        %v4650 = vunpack.c.l.b16 %v4610
        %v4651 = vunpack.c.l.b16 %v4611
        %v4652 = vunpack.c.l.b16 %v4612
        %v4653 = vunpack.c.l.b16 %v4613
        %v4654 = vunpack.c.l.b16 %v4614
        %v4655 = vpack.c.b16 %v4640, %v4639
        %v4656 = vpack.c.b16 %v4642, %v4641
        %v4657 = vpack.c.b16 %v4644, %v4643
        %v4658 = vpack.c.b16 %v4646, %v4645
        %v4659 = vpack.c.b16 %v4648, %v4647
        %v4660 = vpack.c.b16 %v4650, %v4649
        %v4661 = vpack.c.b16 %v4652, %v4651
        %v4662 = vpack.c.b16 %v4654, %v4653
        %4671 = vmatprep.subr.bf16.mxu0 0
        %4672 = vmatpush1.bf16.msra.mxu0 %v4655
        %4673 = vmatprep.subr.bf16.mxu0 0
        %4674 = vmatpush1.bf16.msra.mxu0 %v4656
        %4675 = vmatprep.subr.bf16.mxu0 0
        %4676 = vmatpush1.bf16.msra.mxu0 %v4657
        %4677 = vmatprep.subr.bf16.mxu0 0
        %4678 = vmatpush1.bf16.msra.mxu0 %v4658
        %4679 = vmatprep.subr.bf16.mxu0 0
        %4680 = vmatpush1.bf16.msra.mxu0 %v4659
        %4681 = vmatprep.subr.bf16.mxu0 0
        %4682 = vmatpush1.bf16.msra.mxu0 %v4660
        %4683 = vmatprep.subr.bf16.mxu0 0
        %4684 = vmatpush1.bf16.msra.mxu0 %v4661
        %4685 = vmatprep.subr.bf16.mxu0 0
        %4686 = vmatpush1.bf16.msra.mxu0 %v4662
        %4687 = vmatprep.subr.bf16.mxu0 0
        %4688 = vmatpush1.bf16.msra.mxu0 0
        %4689 = vmatprep.subr.bf16.mxu0 0
        %4690 = vmatpush1.bf16.msra.mxu0 0
        %4691 = vmatprep.subr.bf16.mxu0 0
        %4692 = vmatpush1.bf16.msra.mxu0 0
        %4693 = vmatprep.subr.bf16.mxu0 0
        %4694 = vmatpush1.bf16.msra.mxu0 0
        %4695 = vmatprep.subr.bf16.mxu0 0
        %4696 = vmatpush1.bf16.msra.mxu0 0
        %4697 = vmatprep.subr.bf16.mxu0 0
        %4698 = vmatpush1.bf16.msra.mxu0 0
        %4699 = vmatprep.subr.bf16.mxu0 0
        %4700 = vmatpush1.bf16.msra.mxu0 0
        %4701 = vmatprep.subr.bf16.mxu0 0
        %4702 = vmatpush1.bf16.msra.mxu0 0
        %4703 = vmatprep.mubr.bf16.mxu0 0
        %4704 = vmatmul.mubr.bf16.gmra.mrb[0].mxu0 %v4615
        %v4705 = vpop.f32.mrb[0].mxu0
        %v4706 = vadd.f32 %v4621, %v4705
        %v4707 = vpop.f32.mrb[0].mxu0
        %v4708 = vpop.f32.mrb[0].mxu0
        %v4709 = vpop.f32.mrb[0].mxu0
        %4710 = vdwg.mxu0
        %vm4711 = vcmp.ge.f32.partialorder %v4706, 0.0
        %v4712 = vmul.f32 %v4706, 0.01
        %v4713 = vsel %vm4711, %v4706, %v4712
        %v4714 = vld [vmem:[#allocation22] sm:$0xf]
        %v4715 = vld [vmem:[#allocation22 + $0x4] sm:$0xf]
        %v4716 = vld [vmem:[#allocation22 + $0x8] sm:$0xf]
        %v4717 = vld [vmem:[#allocation22 + $0xc] sm:$0xf]
        %v4718 = vld [vmem:[#allocation22 + $0x10] sm:$0xf]
        %v4719 = vld [vmem:[#allocation22 + $0x14] sm:$0xf]
        %v4720 = vld [vmem:[#allocation22 + $0x18] sm:$0xf]
        %v4721 = vld [vmem:[#allocation22 + $0x1c] sm:$0xf]
        %v4722 = vpack.c.bf16 %v4713, %v4713
        %v4723 = vld [vmem:[#allocation24] sm:$0x1]
        %v4725 = vlaneseq
        %v4726 = vshrl.u32 %v4725, 7
        %v4727 = vsub.s32 0, %v4726
        %v4728 = vrot.slane %v4723, %v4727
        %v4738 = vunpack.c.l.b16 %v4714
        %v4739 = vunpack.c.l.b16 %v4715
        %v4740 = vunpack.c.l.b16 %v4716
        %v4741 = vunpack.c.l.b16 %v4717
        %v4742 = vunpack.c.l.b16 %v4718
        %v4743 = vunpack.c.l.b16 %v4719
        %v4744 = vunpack.c.l.b16 %v4720
        %v4745 = vunpack.c.l.b16 %v4721
        %v4746 = vpack.c.b16 %v4739, %v4738
        %v4747 = vpack.c.b16 %v4741, %v4740
        %v4748 = vpack.c.b16 %v4743, %v4742
        %v4749 = vpack.c.b16 %v4745, %v4744
        %vm4754 = vcmask 523264
        %v4756 = vsel %vm4754, %v4722, 0
        %4758 = vmatprep.subr.bf16.mxu0 0
        %4759 = vmatpush1.bf16.msra.mxu0 %v4746
        %4760 = vmatprep.subr.bf16.mxu0 0
        %4761 = vmatpush1.bf16.msra.mxu0 %v4747
        %4762 = vmatprep.subr.bf16.mxu0 0
        %4763 = vmatpush1.bf16.msra.mxu0 %v4748
        %4764 = vmatprep.subr.bf16.mxu0 0
        %4765 = vmatpush1.bf16.msra.mxu0 %v4749
        %4766 = vmatprep.subr.bf16.mxu0 0
        %4767 = vmatpush1.bf16.msra.mxu0 0
        %4768 = vmatprep.subr.bf16.mxu0 0
        %4769 = vmatpush1.bf16.msra.mxu0 0
        %4770 = vmatprep.subr.bf16.mxu0 0
        %4771 = vmatpush1.bf16.msra.mxu0 0
        %4772 = vmatprep.subr.bf16.mxu0 0
        %4773 = vmatpush1.bf16.msra.mxu0 0
        %4774 = vmatprep.subr.bf16.mxu0 0
        %4775 = vmatpush1.bf16.msra.mxu0 0
        %4776 = vmatprep.subr.bf16.mxu0 0
        %4777 = vmatpush1.bf16.msra.mxu0 0
        %4778 = vmatprep.subr.bf16.mxu0 0
        %4779 = vmatpush1.bf16.msra.mxu0 0
        %4780 = vmatprep.subr.bf16.mxu0 0
        %4781 = vmatpush1.bf16.msra.mxu0 0
        %4782 = vmatprep.subr.bf16.mxu0 0
        %4783 = vmatpush1.bf16.msra.mxu0 0
        %4784 = vmatprep.subr.bf16.mxu0 0
        %4785 = vmatpush1.bf16.msra.mxu0 0
        %4786 = vmatprep.subr.bf16.mxu0 0
        %4787 = vmatpush1.bf16.msra.mxu0 0
        %4788 = vmatprep.subr.bf16.mxu0 0
        %4789 = vmatpush1.bf16.msra.mxu0 0
        %4790 = vmatprep.mubr.bf16.mxu0 0
        %4791 = vmatmul.mubr.bf16.gmra.mrb[0].mxu0 %v4756
        %v4792 = vpop.f32.mrb[0].mxu0
        %v4793 = vadd.f32 %v4728, %v4792
        %v4794 = vpop.f32.mrb[0].mxu0
        %v4795 = vpop.f32.mrb[0].mxu0
        %v4796 = vpop.f32.mrb[0].mxu0
        %4797 = vdwg.mxu0
        %v4798 = vmax.f32 %v4793, 0.0
        %v4799 = vld [vmem:[%s24] sm:$0xf]
        %v4800 = vld [vmem:[%s24 + $0x4] sm:$0xf]
        %v4801 = vld [vmem:[%s24 + $0x8] sm:$0xf]
        %v4802 = vld [vmem:[%s24 + $0xc] sm:$0xf]
        %v4803 = vld [vmem:[%s24 + $0x10] sm:$0xf]
        %v4804 = vld [vmem:[%s24 + $0x14] sm:$0xf]
        %v4805 = vld [vmem:[%s24 + $0x18] sm:$0xf]
        %v4806 = vld [vmem:[%s24 + $0x1c] sm:$0xf]
        %v4807 = vld [vmem:[%s24 + $0x20] sm:$0xf]
        %v4808 = vld [vmem:[%s24 + $0x24] sm:$0xf]
        %v4809 = vld [vmem:[%s24 + $0x28] sm:$0xf]
        %v4810 = vld [vmem:[%s24 + $0x2c] sm:$0xf]
        %v4811 = vpack.c.bf16 %v4798, %v4798
        %v4812 = vld [vmem:[%s25] sm:$0x1]
        %v4814 = vlaneseq
        %v4815 = vshrl.u32 %v4814, 7
        %v4816 = vsub.s32 0, %v4815
        %v4817 = vrot.slane %v4812, %v4816
        %v4831 = vunpack.c.l.b16 %v4799
        %v4832 = vunpack.c.l.b16 %v4800
        %v4833 = vunpack.c.l.b16 %v4801
        %v4834 = vunpack.c.l.b16 %v4802
        %v4835 = vunpack.c.l.b16 %v4803
        %v4836 = vunpack.c.l.b16 %v4804
        %v4837 = vunpack.c.l.b16 %v4805
        %v4838 = vunpack.c.l.b16 %v4806
        %v4839 = vunpack.c.l.b16 %v4807
        %v4840 = vunpack.c.l.b16 %v4808
        %v4841 = vunpack.c.l.b16 %v4809
        %v4842 = vunpack.c.l.b16 %v4810
        %v4843 = vpack.c.b16 %v4832, %v4831
        %v4844 = vpack.c.b16 %v4834, %v4833
        %v4845 = vpack.c.b16 %v4836, %v4835
        %v4846 = vpack.c.b16 %v4838, %v4837
        %v4847 = vpack.c.b16 %v4840, %v4839
        %v4848 = vpack.c.b16 %v4842, %v4841
        %vm4855 = vcmask 785408
        %v4857 = vsel %vm4855, %v4811, 0
        %4859 = vmatprep.subr.bf16.mxu0 0
        %4860 = vmatpush1.bf16.msra.mxu0 %v4843
        %4861 = vmatprep.subr.bf16.mxu0 0
        %4862 = vmatpush1.bf16.msra.mxu0 %v4844
        %4863 = vmatprep.subr.bf16.mxu0 0
        %4864 = vmatpush1.bf16.msra.mxu0 %v4845
        %4865 = vmatprep.subr.bf16.mxu0 0
        %4866 = vmatpush1.bf16.msra.mxu0 %v4846
        %4867 = vmatprep.subr.bf16.mxu0 0
        %4868 = vmatpush1.bf16.msra.mxu0 %v4847
        %4869 = vmatprep.subr.bf16.mxu0 0
        %4870 = vmatpush1.bf16.msra.mxu0 %v4848
        %4871 = vmatprep.subr.bf16.mxu0 0
        %4872 = vmatpush1.bf16.msra.mxu0 0
        %4873 = vmatprep.subr.bf16.mxu0 0
        %4874 = vmatpush1.bf16.msra.mxu0 0
        %4875 = vmatprep.subr.bf16.mxu0 0
        %4876 = vmatpush1.bf16.msra.mxu0 0
        %4877 = vmatprep.subr.bf16.mxu0 0
        %4878 = vmatpush1.bf16.msra.mxu0 0
        %4879 = vmatprep.subr.bf16.mxu0 0
        %4880 = vmatpush1.bf16.msra.mxu0 0
        %4881 = vmatprep.subr.bf16.mxu0 0
        %4882 = vmatpush1.bf16.msra.mxu0 0
        %4883 = vmatprep.subr.bf16.mxu0 0
        %4884 = vmatpush1.bf16.msra.mxu0 0
        %4885 = vmatprep.subr.bf16.mxu0 0
        %4886 = vmatpush1.bf16.msra.mxu0 0
        %4887 = vmatprep.subr.bf16.mxu0 0
        %4888 = vmatpush1.bf16.msra.mxu0 0
        %4889 = vmatprep.subr.bf16.mxu0 0
        %4890 = vmatpush1.bf16.msra.mxu0 0
        %4891 = vmatprep.mubr.bf16.mxu0 0
        %4892 = vmatmul.mubr.bf16.gmra.mrb[0].mxu0 %v4857
        %v4893 = vpop.f32.mrb[0].mxu0
        %v4894 = vadd.f32 %v4817, %v4893
        %v4895 = vpop.f32.mrb[0].mxu0
        %v4896 = vpop.f32.mrb[0].mxu0
        %v4897 = vpop.f32.mrb[0].mxu0
        %4898 = vdwg.mxu0
        %4899 = vst [vmem:[%s1013] sm:$0xff] %v4894
        %p4900 = scmp.lt.s32.totalorder %s46, 1
        %s4901 = scalar_select %p4900, %s46, 1
        %s4902 = smul.addr %s4901, 8
        %s4903 = scalar_lea.vmem %s26, %s4902
        // Predicated region
        $region215: #{vagmsda_forward.1} parent=157 // pred_check
          %p4904 = pneg %p615
        $region216: #{vagmsda_forward.1} parent=157 // pred_check_branch
          %4906 = sbr.rel (%p4904) target = $region218
        $region217: #{vagmsda_forward.1} parent=157 // pred_region
          _
        $region218: #{vagmsda_forward.1} parent=157 // pred_fallthru
          _
      $region158: #{vagmsda_forward.1} parent=5 // pred_fallthru
        _
      %p4907 = scmp.le.s32.totalorder 2, %s41
      // Predicated region
      $region219: #{vagmsda_forward.1} parent=5 // pred_check
        %p4908 = pneg %p4907
      $region220: #{vagmsda_forward.1} parent=5 // pred_check_branch
        %4910 = sbr.rel (%p4908) target = $region222
      $region221: #{vagmsda_forward.1} parent=5 // pred_region
        %s4911 = ssub.s32 %s41, 2
        // Predicated region
        $region223: #{vagmsda_forward.1} parent=221 // pred_check
          %p4912 = pneg %p621
        $region224: #{vagmsda_forward.1} parent=221 // pred_check_branch
          %4914 = sbr.rel (%p4912) target = $region226
        $region225: #{vagmsda_forward.1} parent=221 // pred_region
          %p4915 = scmp.lt.s32.totalorder %s47, 1
          %s4916 = scalar_select %p4915, %s47, 1
          %s4917 = smul.addr %s4916, 8
          %s4918 = scalar_lea.vmem %s26, %s4917
        $region226: #{vagmsda_forward.1} parent=221 // pred_fallthru
          _
      $region222: #{vagmsda_forward.1} parent=5 // pred_fallthru
        _
    $region6: #{vagmsda_forward.1} parent=1 // loop_footer
      %s45 = sadd.s32 1, %s41
    $region7: #{vagmsda_forward.1} parent=1 // loop_footer_branch
      %40 = sbr.rel target = $region3
    $region8: #{vagmsda_forward.1} parent=1 // loop_exit
      _
    %4919 = vsyncpa [#allocation4], 1
    %s4920 = scalar_lea.sflag [#allocation4], 1
    %4921 = vsyncpa %s4920, 1
    %4922 = vsyncpa [#allocation14], 1
    %4923 = vsyncpa [#allocation17], 1
    %4924 = vsyncpa [#allocation20], 1
    %4925 = vsyncpa [#allocation23], 1
    %4926 = vsyncpa [#allocation5], 1
    %s4927 = scalar_lea.sflag [#allocation5], 1
    %4928 = vsyncpa %s4927, 1
    %4929 = vsyncpa [#allocation11], 1
    %4930 = vsyncpa [#allocation6], 1
    %s4931 = scalar_lea.sflag [#allocation6], 1
    %4932 = vsyncpa %s4931, 1
    %4933 = vsyncpa [#allocation8], 1

</llo_original>
